<compile_context>
chip_gen: v5e
topology: v5e:2x2
jax: 0.10.0
libtpu: 0.0.40
codegen_flags: <defaults>
</compile_context>

<pallas_src>
import functools

import numpy as np
import jax
import jax.numpy as jnp
from jax.experimental import pallas as pl
from jax.experimental.pallas import tpu as pltpu

BN_EPS = 1e-5
BT = 8            # batch tile (multiple of 8 -> sublane aligned slabs)
LANE = 128        # padded lane block


# ------------------------------ fused Pallas kernel -------------------------------

def decoder_kernel(x_ref, w1_ref, b1_ref, w2_ref, b2_ref, e_ref,
                   a1_ref, g1_ref, c1_ref, gamma1_ref, beta1_ref, r1_ref, rt1_ref,
                   a2_ref, g2_ref, c2_ref, gamma2_ref, beta2_ref, r2_ref, rt2_ref,
                   a3_ref, g3_ref, c3_ref,
                   out_ref,
                   bn1_ref, bn2_ref, *, Bt, T):
    f32 = jnp.float32
    bf16 = jnp.bfloat16

    def mm(a, b):
        # bf16 MXU operands, f32 accumulate (0/1 operators & weights are stored bf16).
        return jnp.dot(a.astype(bf16), b.astype(bf16), preferred_element_type=f32)

    def mmf(a, b):
        # tiny f32 matmuls reserved for the BatchNorm statistics reduce/broadcast.
        return jnp.dot(a, b, preferred_element_type=f32)

    def conv_t(x2, a, g, bias):
        # ConvTranspose2d on a slab:   y = G_all @ rowstack_kh( x2 @ A )  + bias
        t = mm(x2, a)                                                     # (rows, 3*128)
        ts = jnp.concatenate([t[:, 0:LANE], t[:, LANE:2 * LANE],
                              t[:, 2 * LANE:3 * LANE]], axis=0)           # (3*rows, 128)
        return mm(g, ts) + bias                                           # (rows_out, 128)

    def stage1(xt):
        # decoder_lin (+ReLU) -> unflatten -> ConvTranspose2d(32,16,3,s=2)   (pre-BN)
        h1 = jnp.maximum(mm(xt, w1_ref[...]) + b1_ref[...], 0.0)          # (Bt, 128)
        h2 = jnp.maximum(mm(h1, w2_ref[...]) + b2_ref[...], 0.0)          # (Bt, 384)
        hs = jnp.concatenate([h2[:, 0:LANE], h2[:, LANE:2 * LANE],
                              h2[:, 2 * LANE:3 * LANE]], axis=0)          # (3*Bt, 128)
        xs = mm(e_ref[...], hs)                                           # (Bt*3, 128)
        return conv_t(xs, a1_ref[...], g1_ref[...], c1_ref[...])          # (Bt*7, 128)

    def stage2(y1bn):
        # ConvTranspose2d(16,8,3,s=2,p=1,op=1)   (pre-BN)
        return conv_t(y1bn, a2_ref[...], g2_ref[...], c2_ref[...])        # (Bt*14, 128)

    def stage3(y2bn):
        # ConvTranspose2d(8,1,3,s=2,p=1,op=1)
        return conv_t(y2bn, a3_ref[...], g3_ref[...], c3_ref[...])        # (Bt*28, 128)

    def lane_sums(y):
        # per-lane sum and sum-of-squares (f32) for one-pass batch statistics
        return (jnp.sum(y, axis=0, keepdims=True),
                jnp.sum(y * y, axis=0, keepdims=True))

    def bn_finalize(s1, s2, r, rt, gamma, beta, inv_count):
        # fused: one (2,128)@(128,C) reduce, one (2,C)@(C,128) broadcast
        stats = jnp.concatenate([s1, s2], axis=0)                         # (2, 128)
        cs = mmf(stats, r)                                                # (2, C)
        mean = cs[0:1, :] * inv_count
        var = cs[1:2, :] * inv_count - mean * mean                        # biased variance
        scale = gamma * jax.lax.rsqrt(var + BN_EPS)
        shift = beta - mean * scale
        return mmf(jnp.concatenate([scale, shift], axis=0), rt)           # (2, 128)

    def bn_apply(y, bn):
        return jnp.maximum(y * bn[0:1, :] + bn[1:2, :], 0.0)

    def xtile(i):
        return x_ref[i]                                                   # (Bt, d)

    t = pl.program_id(0)

    # ---------------- batch-global BatchNorm statistics prepass (grid step 0) --------
    @pl.when(t == 0)
    def _prepass():
        def body1(i, carry):
            s1, s2 = carry
            a1, a2 = lane_sums(stage1(xtile(i)))
            return (s1 + a1, s2 + a2)
        s1, s2 = jax.lax.fori_loop(0, T, body1,
                                   (jnp.zeros((1, LANE), f32), jnp.zeros((1, LANE), f32)))
        bn1 = bn_finalize(s1, s2, r1_ref[...], rt1_ref[...],
                          gamma1_ref[...], beta1_ref[...],
                          1.0 / (T * Bt * 7.0 * 7.0))
        bn1_ref[...] = bn1

        def body2(i, carry):
            s1, s2 = carry
            y1 = bn_apply(stage1(xtile(i)), bn1)
            a1, a2 = lane_sums(stage2(y1))
            return (s1 + a1, s2 + a2)
        s1, s2 = jax.lax.fori_loop(0, T, body2,
                                   (jnp.zeros((1, LANE), f32), jnp.zeros((1, LANE), f32)))
        bn2_ref[...] = bn_finalize(s1, s2, r2_ref[...], rt2_ref[...],
                                   gamma2_ref[...], beta2_ref[...],
                                   1.0 / (T * Bt * 14.0 * 14.0))

    # ---------------- apply pass for this batch tile ---------------------------------
    y1 = bn_apply(stage1(xtile(t)), bn1_ref[...])                         # (Bt*7, 128)
    y2 = bn_apply(stage2(y1), bn2_ref[...])                               # (Bt*14, 128)
    y3 = stage3(y2)[:, 0:28]                                              # (Bt*28, 28)
    sig = pl.reciprocal(1.0 + jnp.exp(-y3), approx=True)                  # EUP sigmoid
    out_ref[...] = jnp.minimum(sig, 1.0)


# --------------------------- operator preparation (runs once) ----------------------

def _conv_stage_operators(w, bias, *, Bt, H, Cin, Cout, stride, pad, out_pad, with_bn):
    """Slab operators for ConvTranspose2d(Cin, Cout, 3, stride, pad, out_pad).

    w is PyTorch layout (Cin, Cout, kH, kW); slabs: rows=(b, row), lanes=(col*Cout + c),
    lane blocks padded to 128.  All operators depend on Bt only (not the runtime batch).
    """
    k = 3
    OH = (H - 1) * stride - 2 * pad + k + out_pad
    W_, OW = H, OH
    w_np = np.asarray(w, np.float32)
    b_np = np.asarray(bias, np.float32)

    # A[(iw*Cin+ci), kh*128 + ow*Cout + co] = w[ci,co,kh,kw]  iff  ow == stride*iw - pad + kw
    A = np.zeros((LANE, k * LANE), np.float32)
    for iw in range(W_):
        for kw in range(k):
            ow = stride * iw - pad + kw
            if 0 <= ow < OW:
                for kh in range(k):
                    A[iw * Cin:(iw + 1) * Cin,
                      kh * LANE + ow * Cout: kh * LANE + (ow + 1) * Cout] += w_np[:, :, kh, kw]

    # G[(b*OH+oh), kh*(Bt*H) + b*H + ih] = 1  iff  oh == stride*ih - pad + kh
    G = np.zeros((Bt * OH, k * Bt * H), np.float32)
    for kh in range(k):
        for b in range(Bt):
            for ih in range(H):
                oh = stride * ih - pad + kh
                if 0 <= oh < OH:
                    G[b * OH + oh, kh * Bt * H + b * H + ih] = 1.0

    c = np.zeros((1, LANE), np.float32)
    for ow in range(OW):
        c[0, ow * Cout:(ow + 1) * Cout] = b_np

    ops = dict(A=jnp.asarray(A, jnp.bfloat16), G=jnp.asarray(G, jnp.bfloat16),
               c=jnp.asarray(c, jnp.float32))
    if with_bn:
        R = np.zeros((LANE, Cout), np.float32)     # lane (ow,co) -> channel co (f32, exact)
        Rt = np.zeros((Cout, LANE), np.float32)
        for ow in range(OW):
            for co in range(Cout):
                R[ow * Cout + co, co] = 1.0
                Rt[co, ow * Cout + co] = 1.0
        ops.update(R=jnp.asarray(R, jnp.float32), Rt=jnp.asarray(Rt, jnp.float32))
    return ops


def prepare_operators(p, bt=BT):
    f32, bf16 = jnp.float32, jnp.bfloat16
    ops = {"w1": jnp.asarray(p["w1"], bf16),
           "b1": jnp.asarray(p["b1"], f32).reshape(1, 128)}

    # FC2: permute NCHW-flat columns (ci*9 + h*3 + w) into padded slab order (h*128 + w*32 + ci)
    w2 = np.asarray(p["w2"], np.float32)
    b2 = np.asarray(p["b2"], np.float32)
    w2p = np.zeros((128, 3 * LANE), np.float32)
    b2p = np.zeros((1, 3 * LANE), np.float32)
    for h in range(3):
        for w in range(3):
            for ci in range(32):
                src = ci * 9 + h * 3 + w
                dst = h * LANE + w * 32 + ci
                w2p[:, dst] = w2[:, src]
                b2p[0, dst] = b2[src]
    ops["w2p"] = jnp.asarray(w2p, bf16)
    ops["b2p"] = jnp.asarray(b2p, f32)

    # unflatten row placement: xs[b*3 + h, :] = h2[b, h*128:(h+1)*128]   (Bt-sized, batch free)
    E = np.zeros((bt * 3, 3 * bt), np.float32)
    for b in range(bt):
        for h in range(3):
            E[b * 3 + h, h * bt + b] = 1.0
    ops["E"] = jnp.asarray(E, bf16)

    s1 = _conv_stage_operators(p["ct1_w"], p["ct1_b"], Bt=bt, H=3, Cin=32, Cout=16,
                               stride=2, pad=0, out_pad=0, with_bn=True)
    s2 = _conv_stage_operators(p["ct2_w"], p["ct2_b"], Bt=bt, H=7, Cin=16, Cout=8,
                               stride=2, pad=1, out_pad=1, with_bn=True)
    s3 = _conv_stage_operators(p["ct3_w"], p["ct3_b"], Bt=bt, H=14, Cin=8, Cout=1,
                               stride=2, pad=1, out_pad=1, with_bn=False)
    ops.update(A1=s1["A"], G1=s1["G"], c1=s1["c"], R1=s1["R"], Rt1=s1["Rt"],
               gamma1=jnp.asarray(p["bn1_g"], f32).reshape(1, -1),
               beta1=jnp.asarray(p["bn1_b"], f32).reshape(1, -1),
               A2=s2["A"], G2=s2["G"], c2=s2["c"], R2=s2["R"], Rt2=s2["Rt"],
               gamma2=jnp.asarray(p["bn2_g"], f32).reshape(1, -1),
               beta2=jnp.asarray(p["bn2_b"], f32).reshape(1, -1),
               A3=s3["A"], G3=s3["G"], c3=s3["c"])
    return ops


# --------------------------------- forward wrapper ---------------------------------

def mnist_decoder_forward(x, ops):
    B, d = x.shape
    assert B % BT == 0, f"batch {B} must be a multiple of the batch tile {BT}"
    T = B // BT
    x3 = x.reshape(T, BT, d)   # leading axis indexed by tile inside the BN prepass

    inputs = (
        x3, ops["w1"], ops["b1"], ops["w2p"], ops["b2p"], ops["E"],
        ops["A1"], ops["G1"], ops["c1"], ops["gamma1"], ops["beta1"], ops["R1"], ops["Rt1"],
        ops["A2"], ops["G2"], ops["c2"], ops["gamma2"], ops["beta2"], ops["R2"], ops["Rt2"],
        ops["A3"], ops["G3"], ops["c3"],
    )

    def full_spec(a):
        zeros = (0,) * a.ndim
        return pl.BlockSpec(a.shape, lambda t: zeros)   # resident once, never re-fetched

    out2d = pl.pallas_call(
        functools.partial(decoder_kernel, Bt=BT, T=T),
        out_shape=jax.ShapeDtypeStruct((B * 28, 28), jnp.float32),
        grid_spec=pltpu.PrefetchScalarGridSpec(
            num_scalar_prefetch=0,
            grid=(T,),
            in_specs=[full_spec(a) for a in inputs],
            out_specs=pl.BlockSpec((BT * 28, 28), lambda t: (t, 0)),
            scratch_shapes=[pltpu.VMEM((2, LANE), jnp.float32),   # BN1 [scale; shift] lanes
                            pltpu.VMEM((2, LANE), jnp.float32)],  # BN2 [scale; shift] lanes
        ),
        compiler_params=pltpu.CompilerParams(
            # "arbitrary": tiles > 0 consume the batch-global BN stats computed at tile 0.
            dimension_semantics=("arbitrary",),
            vmem_limit_bytes=32 * 1024 * 1024,   # sized for v7x's 64 MiB/TC as well
        ),
    )(*inputs)
    # rows = (b, oh), lanes = ow  ->  NCHW (B, 1, 28, 28): a free, layout-trivial reshape.
    return out2d.reshape(B, 1, 28, 28)


# ------------------------------ deterministic params -------------------------------

def init_params(encoded_space_dim, key):
    ks = jax.random.split(key, 8)

    def uni(k, shape, fan_in):
        bound = 1.0 / jnp.sqrt(jnp.float32(fan_in))
        return jax.random.uniform(k, shape, jnp.float32, -bound, bound)

    d = encoded_space_dim
    return {
        # Linear weights stored (in, out) for row-major matmul in-kernel.
        "w1": uni(ks[0], (d, 128), d),
        "b1": uni(ks[1], (128,), d),
        "w2": uni(ks[2], (128, 3 * 3 * 32), 128),
        "b2": uni(ks[3], (3 * 3 * 32,), 128),
        # ConvTranspose2d weights use PyTorch layout (Cin, Cout, kH, kW).
        "ct1_w": uni(ks[4], (32, 16, 3, 3), 32 * 9),
        "ct1_b": jnp.zeros((16,), jnp.float32),
        "bn1_g": jnp.ones((16,), jnp.float32),
        "bn1_b": jnp.zeros((16,), jnp.float32),
        "ct2_w": uni(ks[5], (16, 8, 3, 3), 16 * 9),
        "ct2_b": jnp.zeros((8,), jnp.float32),
        "bn2_g": jnp.ones((8,), jnp.float32),
        "bn2_b": jnp.zeros((8,), jnp.float32),
        "ct3_w": uni(ks[6], (8, 1, 3, 3), 8 * 9),
        "ct3_b": jnp.zeros((1,), jnp.float32),
    }


if __name__ == "__main__":
    encoded_space_dim = 16
    batch = 16   # multiple of BT=8 -> 2 batch-tile grid steps

    key = jax.random.PRNGKey(0)
    pkey, xkey = jax.random.split(key)
    params = init_params(encoded_space_dim, pkey)
    x = jax.random.normal(xkey, (batch, encoded_space_dim), jnp.float32)

    # One-time, batch-size-independent weight preprocessing (outside the hot path).
    ops = jax.block_until_ready(prepare_operators(params))

    fwd = jax.jit(mnist_decoder_forward)
    out = jax.block_until_ready(fwd(x, ops))

    assert out.shape == (batch, 1, 28, 28), out.shape
    assert out.dtype == jnp.float32
    assert bool(jnp.all(jnp.isfinite(out)))
    assert bool(jnp.all((out >= 0.0) & (out <= 1.0)))  # sigmoid range
    print("KERNEL_OK")
</pallas_src>

<mosaic_0001>
module attributes {stable_mosaic.version = 11 : i64} {
  func.func @decoder_kernel(%arg0: i32, %arg1: memref<2x8x16xf32, #tpu.memory_space<vmem>>, %arg2: memref<16x128xbf16, #tpu.memory_space<vmem>>, %arg3: memref<1x128xf32, #tpu.memory_space<vmem>>, %arg4: memref<128x384xbf16, #tpu.memory_space<vmem>>, %arg5: memref<1x384xf32, #tpu.memory_space<vmem>>, %arg6: memref<24x24xbf16, #tpu.memory_space<vmem>>, %arg7: memref<128x384xbf16, #tpu.memory_space<vmem>>, %arg8: memref<56x72xbf16, #tpu.memory_space<vmem>>, %arg9: memref<1x128xf32, #tpu.memory_space<vmem>>, %arg10: memref<1x16xf32, #tpu.memory_space<vmem>>, %arg11: memref<1x16xf32, #tpu.memory_space<vmem>>, %arg12: memref<128x16xf32, #tpu.memory_space<vmem>>, %arg13: memref<16x128xf32, #tpu.memory_space<vmem>>, %arg14: memref<128x384xbf16, #tpu.memory_space<vmem>>, %arg15: memref<112x168xbf16, #tpu.memory_space<vmem>>, %arg16: memref<1x128xf32, #tpu.memory_space<vmem>>, %arg17: memref<1x8xf32, #tpu.memory_space<vmem>>, %arg18: memref<1x8xf32, #tpu.memory_space<vmem>>, %arg19: memref<128x8xf32, #tpu.memory_space<vmem>>, %arg20: memref<8x128xf32, #tpu.memory_space<vmem>>, %arg21: memref<128x384xbf16, #tpu.memory_space<vmem>>, %arg22: memref<224x336xbf16, #tpu.memory_space<vmem>>, %arg23: memref<1x128xf32, #tpu.memory_space<vmem>>, %arg24: memref<224x28xf32, #tpu.memory_space<vmem>>, %arg25: memref<2x128xf32, #tpu.memory_space<vmem>>, %arg26: memref<2x128xf32, #tpu.memory_space<vmem>>) attributes {dimension_semantics = [#tpu.dimension_semantics<arbitrary>], iteration_bounds = array<i64: 2>, scalar_prefetch = 0 : i64, scratch_operands = 2 : i64, tpu.core_type = #tpu.core_type<tc>, window_params = [{pipeline_mode = #tpu.pipeline_mode<synchronous>, transform_indices = @transform_0, window_bounds = array<i64: 2, 8, 16>}, {pipeline_mode = #tpu.pipeline_mode<synchronous>, transform_indices = @transform_1, window_bounds = array<i64: 16, 128>}, {pipeline_mode = #tpu.pipeline_mode<synchronous>, transform_indices = @transform_2, window_bounds = array<i64: 1, 128>}, {pipeline_mode = #tpu.pipeline_mode<synchronous>, transform_indices = @transform_3, window_bounds = array<i64: 128, 384>}, {pipeline_mode = #tpu.pipeline_mode<synchronous>, transform_indices = @transform_4, window_bounds = array<i64: 1, 384>}, {pipeline_mode = #tpu.pipeline_mode<synchronous>, transform_indices = @transform_5, window_bounds = array<i64: 24, 24>}, {pipeline_mode = #tpu.pipeline_mode<synchronous>, transform_indices = @transform_6, window_bounds = array<i64: 128, 384>}, {pipeline_mode = #tpu.pipeline_mode<synchronous>, transform_indices = @transform_7, window_bounds = array<i64: 56, 72>}, {pipeline_mode = #tpu.pipeline_mode<synchronous>, transform_indices = @transform_8, window_bounds = array<i64: 1, 128>}, {pipeline_mode = #tpu.pipeline_mode<synchronous>, transform_indices = @transform_9, window_bounds = array<i64: 1, 16>}, {pipeline_mode = #tpu.pipeline_mode<synchronous>, transform_indices = @transform_10, window_bounds = array<i64: 1, 16>}, {pipeline_mode = #tpu.pipeline_mode<synchronous>, transform_indices = @transform_11, window_bounds = array<i64: 128, 16>}, {pipeline_mode = #tpu.pipeline_mode<synchronous>, transform_indices = @transform_12, window_bounds = array<i64: 16, 128>}, {pipeline_mode = #tpu.pipeline_mode<synchronous>, transform_indices = @transform_13, window_bounds = array<i64: 128, 384>}, {pipeline_mode = #tpu.pipeline_mode<synchronous>, transform_indices = @transform_14, window_bounds = array<i64: 112, 168>}, {pipeline_mode = #tpu.pipeline_mode<synchronous>, transform_indices = @transform_15, window_bounds = array<i64: 1, 128>}, {pipeline_mode = #tpu.pipeline_mode<synchronous>, transform_indices = @transform_16, window_bounds = array<i64: 1, 8>}, {pipeline_mode = #tpu.pipeline_mode<synchronous>, transform_indices = @transform_17, window_bounds = array<i64: 1, 8>}, {pipeline_mode = #tpu.pipeline_mode<synchronous>, transform_indices = @transform_18, window_bounds = array<i64: 128, 8>}, {pipeline_mode = #tpu.pipeline_mode<synchronous>, transform_indices = @transform_19, window_bounds = array<i64: 8, 128>}, {pipeline_mode = #tpu.pipeline_mode<synchronous>, transform_indices = @transform_20, window_bounds = array<i64: 128, 384>}, {pipeline_mode = #tpu.pipeline_mode<synchronous>, transform_indices = @transform_21, window_bounds = array<i64: 224, 336>}, {pipeline_mode = #tpu.pipeline_mode<synchronous>, transform_indices = @transform_22, window_bounds = array<i64: 1, 128>}, {transform_indices = @transform_23, window_bounds = array<i64: 224, 28>}]} {
    %c0_i32 = arith.constant 0 : i32
    %0 = arith.cmpi eq, %arg0, %c0_i32 : i32
    %1 = arith.extui %0 : i1 to i32
    %c0_i32_0 = arith.constant 0 : i32
    %2 = arith.cmpi ne, %1, %c0_i32_0 : i32
    scf.if %2 {
      %cst_51 = arith.constant 0.000000e+00 : f32
      %96 = vector.broadcast %cst_51 : f32 to vector<1x128xf32>
      %cst_52 = arith.constant 0.000000e+00 : f32
      %97 = vector.broadcast %cst_52 : f32 to vector<1x128xf32>
      %c0_i32_53 = arith.constant 0 : i32
      %c2_i32 = arith.constant 2 : i32
      %98 = arith.addi %c0_i32_53, %c2_i32 : i32
      %c1_i32 = arith.constant 1 : i32
      %99:2 = scf.for %arg27 = %c0_i32_53 to %98 step %c1_i32 iter_args(%arg28 = %96, %arg29 = %97) -> (vector<1x128xf32>, vector<1x128xf32>)  : i32 {
        %150 = arith.index_cast %arg27 : i32 to index
        %c0_91 = arith.constant 0 : index
        %c0_92 = arith.constant 0 : index
        %151 = vector.load %arg1[%150, %c0_91, %c0_92] : memref<2x8x16xf32, #tpu.memory_space<vmem>>, vector<1x8x16xf32>
        %152 = vector.shape_cast %151 : vector<1x8x16xf32> to vector<8x16xf32>
        %c0_93 = arith.constant 0 : index
        %c0_94 = arith.constant 0 : index
        %153 = vector.load %arg2[%c0_93, %c0_94] : memref<16x128xbf16, #tpu.memory_space<vmem>>, vector<16x128xbf16>
        %154 = arith.truncf %152 : vector<8x16xf32> to vector<8x16xbf16>
        %cst_95 = arith.constant dense<0.000000e+00> : vector<8x128xf32>
        %155 = tpu.matmul %154, %153, %cst_95 {dimension_numbers = #tpu.dot_dimension_numbers<[1], [0], [0], [1], [0, 0, 1, 1], [], []>} : vector<8x16xbf16>, vector<16x128xbf16>, vector<8x128xf32> -> vector<8x128xf32>
        %c0_96 = arith.constant 0 : index
        %c0_97 = arith.constant 0 : index
        %156 = vector.load %arg3[%c0_96, %c0_97] : memref<1x128xf32, #tpu.memory_space<vmem>>, vector<1x128xf32>
        %157 = vector.broadcast %156 : vector<1x128xf32> to vector<8x128xf32>
        %158 = arith.addf %155, %157 : vector<8x128xf32>
        %cst_98 = arith.constant 0.000000e+00 : f32
        %159 = vector.broadcast %cst_98 : f32 to vector<8x128xf32>
        %160 = arith.maximumf %158, %159 : vector<8x128xf32>
        %c0_99 = arith.constant 0 : index
        %c0_100 = arith.constant 0 : index
        %161 = vector.load %arg4[%c0_99, %c0_100] : memref<128x384xbf16, #tpu.memory_space<vmem>>, vector<128x384xbf16>
        %162 = arith.truncf %160 : vector<8x128xf32> to vector<8x128xbf16>
        %cst_101 = arith.constant dense<0.000000e+00> : vector<8x384xf32>
        %163 = tpu.matmul %162, %161, %cst_101 {dimension_numbers = #tpu.dot_dimension_numbers<[1], [0], [0], [1], [0, 0, 1, 1], [], []>} : vector<8x128xbf16>, vector<128x384xbf16>, vector<8x384xf32> -> vector<8x384xf32>
        %c0_102 = arith.constant 0 : index
        %c0_103 = arith.constant 0 : index
        %164 = vector.load %arg5[%c0_102, %c0_103] : memref<1x384xf32, #tpu.memory_space<vmem>>, vector<1x384xf32>
        %165 = vector.broadcast %164 : vector<1x384xf32> to vector<8x384xf32>
        %166 = arith.addf %163, %165 : vector<8x384xf32>
        %cst_104 = arith.constant 0.000000e+00 : f32
        %167 = vector.broadcast %cst_104 : f32 to vector<8x384xf32>
        %168 = arith.maximumf %166, %167 : vector<8x384xf32>
        %169 = vector.extract_strided_slice %168 {offsets = [0, 0], sizes = [8, 128], strides = [1, 1]} : vector<8x384xf32> to vector<8x128xf32>
        %170 = vector.extract_strided_slice %168 {offsets = [0, 128], sizes = [8, 128], strides = [1, 1]} : vector<8x384xf32> to vector<8x128xf32>
        %171 = vector.extract_strided_slice %168 {offsets = [0, 256], sizes = [8, 128], strides = [1, 1]} : vector<8x384xf32> to vector<8x128xf32>
        %172 = tpu.concatenate %169, %170, %171 in 0 : vector<8x128xf32>, vector<8x128xf32>, vector<8x128xf32> -> vector<24x128xf32>
        %c0_105 = arith.constant 0 : index
        %c0_106 = arith.constant 0 : index
        %173 = vector.load %arg6[%c0_105, %c0_106] : memref<24x24xbf16, #tpu.memory_space<vmem>>, vector<24x24xbf16>
        %174 = arith.truncf %172 : vector<24x128xf32> to vector<24x128xbf16>
        %cst_107 = arith.constant dense<0.000000e+00> : vector<24x128xf32>
        %175 = tpu.matmul %173, %174, %cst_107 {dimension_numbers = #tpu.dot_dimension_numbers<[1], [0], [0], [1], [0, 0, 1, 1], [], []>} : vector<24x24xbf16>, vector<24x128xbf16>, vector<24x128xf32> -> vector<24x128xf32>
        %c0_108 = arith.constant 0 : index
        %c0_109 = arith.constant 0 : index
        %176 = vector.load %arg7[%c0_108, %c0_109] : memref<128x384xbf16, #tpu.memory_space<vmem>>, vector<128x384xbf16>
        %c0_110 = arith.constant 0 : index
        %c0_111 = arith.constant 0 : index
        %177 = vector.load %arg8[%c0_110, %c0_111] : memref<56x72xbf16, #tpu.memory_space<vmem>>, vector<56x72xbf16>
        %c0_112 = arith.constant 0 : index
        %c0_113 = arith.constant 0 : index
        %178 = vector.load %arg9[%c0_112, %c0_113] : memref<1x128xf32, #tpu.memory_space<vmem>>, vector<1x128xf32>
        %179 = arith.truncf %175 : vector<24x128xf32> to vector<24x128xbf16>
        %cst_114 = arith.constant dense<0.000000e+00> : vector<24x384xf32>
        %180 = tpu.matmul %179, %176, %cst_114 {dimension_numbers = #tpu.dot_dimension_numbers<[1], [0], [0], [1], [0, 0, 1, 1], [], []>} : vector<24x128xbf16>, vector<128x384xbf16>, vector<24x384xf32> -> vector<24x384xf32>
        %181 = vector.extract_strided_slice %180 {offsets = [0, 0], sizes = [24, 128], strides = [1, 1]} : vector<24x384xf32> to vector<24x128xf32>
        %182 = vector.extract_strided_slice %180 {offsets = [0, 128], sizes = [24, 128], strides = [1, 1]} : vector<24x384xf32> to vector<24x128xf32>
        %183 = vector.extract_strided_slice %180 {offsets = [0, 256], sizes = [24, 128], strides = [1, 1]} : vector<24x384xf32> to vector<24x128xf32>
        %184 = tpu.concatenate %181, %182, %183 in 0 : vector<24x128xf32>, vector<24x128xf32>, vector<24x128xf32> -> vector<72x128xf32>
        %185 = arith.truncf %184 : vector<72x128xf32> to vector<72x128xbf16>
        %cst_115 = arith.constant dense<0.000000e+00> : vector<56x128xf32>
        %186 = tpu.matmul %177, %185, %cst_115 {dimension_numbers = #tpu.dot_dimension_numbers<[1], [0], [0], [1], [0, 0, 1, 1], [], []>} : vector<56x72xbf16>, vector<72x128xbf16>, vector<56x128xf32> -> vector<56x128xf32>
        %187 = vector.broadcast %178 : vector<1x128xf32> to vector<56x128xf32>
        %188 = arith.addf %186, %187 : vector<56x128xf32>
        %cst_116 = arith.constant dense<0.000000e+00> : vector<128xf32>
        %189 = vector.multi_reduction <add>, %188, %cst_116 [0] : vector<56x128xf32> to vector<128xf32>
        %190 = vector.shape_cast %189 : vector<128xf32> to vector<1x128xf32>
        %191 = arith.mulf %188, %188 : vector<56x128xf32>
        %cst_117 = arith.constant dense<0.000000e+00> : vector<128xf32>
        %192 = vector.multi_reduction <add>, %191, %cst_117 [0] : vector<56x128xf32> to vector<128xf32>
        %193 = vector.shape_cast %192 : vector<128xf32> to vector<1x128xf32>
        %194 = arith.addf %arg28, %190 : vector<1x128xf32>
        %195 = arith.addf %arg29, %193 : vector<1x128xf32>
        scf.yield %194, %195 : vector<1x128xf32>, vector<1x128xf32>
      }
      %c2_i32_54 = arith.constant 2 : i32
      %c0_55 = arith.constant 0 : index
      %c0_56 = arith.constant 0 : index
      %100 = vector.load %arg12[%c0_55, %c0_56] : memref<128x16xf32, #tpu.memory_space<vmem>>, vector<128x16xf32>
      %c0_57 = arith.constant 0 : index
      %c0_58 = arith.constant 0 : index
      %101 = vector.load %arg13[%c0_57, %c0_58] : memref<16x128xf32, #tpu.memory_space<vmem>>, vector<16x128xf32>
      %c0_59 = arith.constant 0 : index
      %c0_60 = arith.constant 0 : index
      %102 = vector.load %arg10[%c0_59, %c0_60] : memref<1x16xf32, #tpu.memory_space<vmem>>, vector<1x16xf32>
      %c0_61 = arith.constant 0 : index
      %c0_62 = arith.constant 0 : index
      %103 = vector.load %arg11[%c0_61, %c0_62] : memref<1x16xf32, #tpu.memory_space<vmem>>, vector<1x16xf32>
      %104 = tpu.concatenate %99#0, %99#1 in 0 : vector<1x128xf32>, vector<1x128xf32> -> vector<2x128xf32>
      %cst_63 = arith.constant dense<0.000000e+00> : vector<2x16xf32>
      %105 = tpu.matmul %104, %100, %cst_63 {dimension_numbers = #tpu.dot_dimension_numbers<[1], [0], [0], [1], [0, 0, 1, 1], [], []>} : vector<2x128xf32>, vector<128x16xf32>, vector<2x16xf32> -> vector<2x16xf32>
      %106 = vector.extract_strided_slice %105 {offsets = [0, 0], sizes = [1, 16], strides = [1, 1]} : vector<2x16xf32> to vector<1x16xf32>
      %cst_64 = arith.constant 0.00127551018 : f32
      %107 = vector.broadcast %cst_64 : f32 to vector<1x16xf32>
      %108 = arith.mulf %106, %107 : vector<1x16xf32>
      %109 = vector.extract_strided_slice %105 {offsets = [1, 0], sizes = [1, 16], strides = [1, 1]} : vector<2x16xf32> to vector<1x16xf32>
      %cst_65 = arith.constant 0.00127551018 : f32
      %110 = vector.broadcast %cst_65 : f32 to vector<1x16xf32>
      %111 = arith.mulf %109, %110 : vector<1x16xf32>
      %112 = arith.mulf %108, %108 : vector<1x16xf32>
      %113 = arith.subf %111, %112 : vector<1x16xf32>
      %cst_66 = arith.constant 9.99999974E-6 : f32
      %114 = vector.broadcast %cst_66 : f32 to vector<1x16xf32>
      %115 = arith.addf %113, %114 : vector<1x16xf32>
      %116 = math.rsqrt %115 : vector<1x16xf32>
      %117 = arith.mulf %102, %116 : vector<1x16xf32>
      %118 = arith.mulf %108, %117 : vector<1x16xf32>
      %119 = arith.subf %103, %118 : vector<1x16xf32>
      %120 = tpu.concatenate %117, %119 in 0 : vector<1x16xf32>, vector<1x16xf32> -> vector<2x16xf32>
      %cst_67 = arith.constant dense<0.000000e+00> : vector<2x128xf32>
      %121 = tpu.matmul %120, %101, %cst_67 {dimension_numbers = #tpu.dot_dimension_numbers<[1], [0], [0], [1], [0, 0, 1, 1], [], []>} : vector<2x16xf32>, vector<16x128xf32>, vector<2x128xf32> -> vector<2x128xf32>
      %c0_68 = arith.constant 0 : index
      %c0_69 = arith.constant 0 : index
      %122 = vector.load %arg25[%c0_68, %c0_69] : memref<2x128xf32, #tpu.memory_space<vmem>>, vector<2x128xf32>
      tpu.vector_store %arg25[%c0_68, %c0_69], %121 {strides = array<i32>} : memref<2x128xf32, #tpu.memory_space<vmem>>, vector<2x128xf32>,
      %cst_70 = arith.constant 0.000000e+00 : f32
      %123 = vector.broadcast %cst_70 : f32 to vector<1x128xf32>
      %cst_71 = arith.constant 0.000000e+00 : f32
      %124 = vector.broadcast %cst_71 : f32 to vector<1x128xf32>
      %c0_i32_72 = arith.constant 0 : i32
      %c2_i32_73 = arith.constant 2 : i32
      %125 = arith.addi %c0_i32_72, %c2_i32_73 : i32
      %c1_i32_74 = arith.constant 1 : i32
      %126:2 = scf.for %arg27 = %c0_i32_72 to %125 step %c1_i32_74 iter_args(%arg28 = %123, %arg29 = %124) -> (vector<1x128xf32>, vector<1x128xf32>)  : i32 {
        %150 = arith.index_cast %arg27 : i32 to index
        %c0_91 = arith.constant 0 : index
        %c0_92 = arith.constant 0 : index
        %151 = vector.load %arg1[%150, %c0_91, %c0_92] : memref<2x8x16xf32, #tpu.memory_space<vmem>>, vector<1x8x16xf32>
        %152 = vector.shape_cast %151 : vector<1x8x16xf32> to vector<8x16xf32>
        %c0_93 = arith.constant 0 : index
        %c0_94 = arith.constant 0 : index
        %153 = vector.load %arg2[%c0_93, %c0_94] : memref<16x128xbf16, #tpu.memory_space<vmem>>, vector<16x128xbf16>
        %154 = arith.truncf %152 : vector<8x16xf32> to vector<8x16xbf16>
        %cst_95 = arith.constant dense<0.000000e+00> : vector<8x128xf32>
        %155 = tpu.matmul %154, %153, %cst_95 {dimension_numbers = #tpu.dot_dimension_numbers<[1], [0], [0], [1], [0, 0, 1, 1], [], []>} : vector<8x16xbf16>, vector<16x128xbf16>, vector<8x128xf32> -> vector<8x128xf32>
        %c0_96 = arith.constant 0 : index
        %c0_97 = arith.constant 0 : index
        %156 = vector.load %arg3[%c0_96, %c0_97] : memref<1x128xf32, #tpu.memory_space<vmem>>, vector<1x128xf32>
        %157 = vector.broadcast %156 : vector<1x128xf32> to vector<8x128xf32>
        %158 = arith.addf %155, %157 : vector<8x128xf32>
        %cst_98 = arith.constant 0.000000e+00 : f32
        %159 = vector.broadcast %cst_98 : f32 to vector<8x128xf32>
        %160 = arith.maximumf %158, %159 : vector<8x128xf32>
        %c0_99 = arith.constant 0 : index
        %c0_100 = arith.constant 0 : index
        %161 = vector.load %arg4[%c0_99, %c0_100] : memref<128x384xbf16, #tpu.memory_space<vmem>>, vector<128x384xbf16>
        %162 = arith.truncf %160 : vector<8x128xf32> to vector<8x128xbf16>
        %cst_101 = arith.constant dense<0.000000e+00> : vector<8x384xf32>
        %163 = tpu.matmul %162, %161, %cst_101 {dimension_numbers = #tpu.dot_dimension_numbers<[1], [0], [0], [1], [0, 0, 1, 1], [], []>} : vector<8x128xbf16>, vector<128x384xbf16>, vector<8x384xf32> -> vector<8x384xf32>
        %c0_102 = arith.constant 0 : index
        %c0_103 = arith.constant 0 : index
        %164 = vector.load %arg5[%c0_102, %c0_103] : memref<1x384xf32, #tpu.memory_space<vmem>>, vector<1x384xf32>
        %165 = vector.broadcast %164 : vector<1x384xf32> to vector<8x384xf32>
        %166 = arith.addf %163, %165 : vector<8x384xf32>
        %cst_104 = arith.constant 0.000000e+00 : f32
        %167 = vector.broadcast %cst_104 : f32 to vector<8x384xf32>
        %168 = arith.maximumf %166, %167 : vector<8x384xf32>
        %169 = vector.extract_strided_slice %168 {offsets = [0, 0], sizes = [8, 128], strides = [1, 1]} : vector<8x384xf32> to vector<8x128xf32>
        %170 = vector.extract_strided_slice %168 {offsets = [0, 128], sizes = [8, 128], strides = [1, 1]} : vector<8x384xf32> to vector<8x128xf32>
        %171 = vector.extract_strided_slice %168 {offsets = [0, 256], sizes = [8, 128], strides = [1, 1]} : vector<8x384xf32> to vector<8x128xf32>
        %172 = tpu.concatenate %169, %170, %171 in 0 : vector<8x128xf32>, vector<8x128xf32>, vector<8x128xf32> -> vector<24x128xf32>
        %c0_105 = arith.constant 0 : index
        %c0_106 = arith.constant 0 : index
        %173 = vector.load %arg6[%c0_105, %c0_106] : memref<24x24xbf16, #tpu.memory_space<vmem>>, vector<24x24xbf16>
        %174 = arith.truncf %172 : vector<24x128xf32> to vector<24x128xbf16>
        %cst_107 = arith.constant dense<0.000000e+00> : vector<24x128xf32>
        %175 = tpu.matmul %173, %174, %cst_107 {dimension_numbers = #tpu.dot_dimension_numbers<[1], [0], [0], [1], [0, 0, 1, 1], [], []>} : vector<24x24xbf16>, vector<24x128xbf16>, vector<24x128xf32> -> vector<24x128xf32>
        %c0_108 = arith.constant 0 : index
        %c0_109 = arith.constant 0 : index
        %176 = vector.load %arg7[%c0_108, %c0_109] : memref<128x384xbf16, #tpu.memory_space<vmem>>, vector<128x384xbf16>
        %c0_110 = arith.constant 0 : index
        %c0_111 = arith.constant 0 : index
        %177 = vector.load %arg8[%c0_110, %c0_111] : memref<56x72xbf16, #tpu.memory_space<vmem>>, vector<56x72xbf16>
        %c0_112 = arith.constant 0 : index
        %c0_113 = arith.constant 0 : index
        %178 = vector.load %arg9[%c0_112, %c0_113] : memref<1x128xf32, #tpu.memory_space<vmem>>, vector<1x128xf32>
        %179 = arith.truncf %175 : vector<24x128xf32> to vector<24x128xbf16>
        %cst_114 = arith.constant dense<0.000000e+00> : vector<24x384xf32>
        %180 = tpu.matmul %179, %176, %cst_114 {dimension_numbers = #tpu.dot_dimension_numbers<[1], [0], [0], [1], [0, 0, 1, 1], [], []>} : vector<24x128xbf16>, vector<128x384xbf16>, vector<24x384xf32> -> vector<24x384xf32>
        %181 = vector.extract_strided_slice %180 {offsets = [0, 0], sizes = [24, 128], strides = [1, 1]} : vector<24x384xf32> to vector<24x128xf32>
        %182 = vector.extract_strided_slice %180 {offsets = [0, 128], sizes = [24, 128], strides = [1, 1]} : vector<24x384xf32> to vector<24x128xf32>
        %183 = vector.extract_strided_slice %180 {offsets = [0, 256], sizes = [24, 128], strides = [1, 1]} : vector<24x384xf32> to vector<24x128xf32>
        %184 = tpu.concatenate %181, %182, %183 in 0 : vector<24x128xf32>, vector<24x128xf32>, vector<24x128xf32> -> vector<72x128xf32>
        %185 = arith.truncf %184 : vector<72x128xf32> to vector<72x128xbf16>
        %cst_115 = arith.constant dense<0.000000e+00> : vector<56x128xf32>
        %186 = tpu.matmul %177, %185, %cst_115 {dimension_numbers = #tpu.dot_dimension_numbers<[1], [0], [0], [1], [0, 0, 1, 1], [], []>} : vector<56x72xbf16>, vector<72x128xbf16>, vector<56x128xf32> -> vector<56x128xf32>
        %187 = vector.broadcast %178 : vector<1x128xf32> to vector<56x128xf32>
        %188 = arith.addf %186, %187 : vector<56x128xf32>
        %189 = vector.extract_strided_slice %121 {offsets = [0, 0], sizes = [1, 128], strides = [1, 1]} : vector<2x128xf32> to vector<1x128xf32>
        %190 = vector.broadcast %189 : vector<1x128xf32> to vector<56x128xf32>
        %191 = arith.mulf %188, %190 : vector<56x128xf32>
        %192 = vector.extract_strided_slice %121 {offsets = [1, 0], sizes = [1, 128], strides = [1, 1]} : vector<2x128xf32> to vector<1x128xf32>
        %193 = vector.broadcast %192 : vector<1x128xf32> to vector<56x128xf32>
        %194 = arith.addf %191, %193 : vector<56x128xf32>
        %cst_116 = arith.constant 0.000000e+00 : f32
        %195 = vector.broadcast %cst_116 : f32 to vector<56x128xf32>
        %196 = arith.maximumf %194, %195 : vector<56x128xf32>
        %c0_117 = arith.constant 0 : index
        %c0_118 = arith.constant 0 : index
        %197 = vector.load %arg14[%c0_117, %c0_118] : memref<128x384xbf16, #tpu.memory_space<vmem>>, vector<128x384xbf16>
        %c0_119 = arith.constant 0 : index
        %c0_120 = arith.constant 0 : index
        %198 = vector.load %arg15[%c0_119, %c0_120] : memref<112x168xbf16, #tpu.memory_space<vmem>>, vector<112x168xbf16>
        %c0_121 = arith.constant 0 : index
        %c0_122 = arith.constant 0 : index
        %199 = vector.load %arg16[%c0_121, %c0_122] : memref<1x128xf32, #tpu.memory_space<vmem>>, vector<1x128xf32>
        %200 = arith.truncf %196 : vector<56x128xf32> to vector<56x128xbf16>
        %cst_123 = arith.constant dense<0.000000e+00> : vector<56x384xf32>
        %201 = tpu.matmul %200, %197, %cst_123 {dimension_numbers = #tpu.dot_dimension_numbers<[1], [0], [0], [1], [0, 0, 1, 1], [], []>} : vector<56x128xbf16>, vector<128x384xbf16>, vector<56x384xf32> -> vector<56x384xf32>
        %202 = vector.extract_strided_slice %201 {offsets = [0, 0], sizes = [56, 128], strides = [1, 1]} : vector<56x384xf32> to vector<56x128xf32>
        %203 = vector.extract_strided_slice %201 {offsets = [0, 128], sizes = [56, 128], strides = [1, 1]} : vector<56x384xf32> to vector<56x128xf32>
        %204 = vector.extract_strided_slice %201 {offsets = [0, 256], sizes = [56, 128], strides = [1, 1]} : vector<56x384xf32> to vector<56x128xf32>
        %205 = tpu.concatenate %202, %203, %204 in 0 : vector<56x128xf32>, vector<56x128xf32>, vector<56x128xf32> -> vector<168x128xf32>
        %206 = arith.truncf %205 : vector<168x128xf32> to vector<168x128xbf16>
        %cst_124 = arith.constant dense<0.000000e+00> : vector<112x128xf32>
        %207 = tpu.matmul %198, %206, %cst_124 {dimension_numbers = #tpu.dot_dimension_numbers<[1], [0], [0], [1], [0, 0, 1, 1], [], []>} : vector<112x168xbf16>, vector<168x128xbf16>, vector<112x128xf32> -> vector<112x128xf32>
        %208 = vector.broadcast %199 : vector<1x128xf32> to vector<112x128xf32>
        %209 = arith.addf %207, %208 : vector<112x128xf32>
        %cst_125 = arith.constant dense<0.000000e+00> : vector<128xf32>
        %210 = vector.multi_reduction <add>, %209, %cst_125 [0] : vector<112x128xf32> to vector<128xf32>
        %211 = vector.shape_cast %210 : vector<128xf32> to vector<1x128xf32>
        %212 = arith.mulf %209, %209 : vector<112x128xf32>
        %cst_126 = arith.constant dense<0.000000e+00> : vector<128xf32>
        %213 = vector.multi_reduction <add>, %212, %cst_126 [0] : vector<112x128xf32> to vector<128xf32>
        %214 = vector.shape_cast %213 : vector<128xf32> to vector<1x128xf32>
        %215 = arith.addf %arg28, %211 : vector<1x128xf32>
        %216 = arith.addf %arg29, %214 : vector<1x128xf32>
        scf.yield %215, %216 : vector<1x128xf32>, vector<1x128xf32>
      }
      %c2_i32_75 = arith.constant 2 : i32
      %c0_76 = arith.constant 0 : index
      %c0_77 = arith.constant 0 : index
      %127 = vector.load %arg19[%c0_76, %c0_77] : memref<128x8xf32, #tpu.memory_space<vmem>>, vector<128x8xf32>
      %c0_78 = arith.constant 0 : index
      %c0_79 = arith.constant 0 : index
      %128 = vector.load %arg20[%c0_78, %c0_79] : memref<8x128xf32, #tpu.memory_space<vmem>>, vector<8x128xf32>
      %c0_80 = arith.constant 0 : index
      %c0_81 = arith.constant 0 : index
      %129 = vector.load %arg17[%c0_80, %c0_81] : memref<1x8xf32, #tpu.memory_space<vmem>>, vector<1x8xf32>
      %c0_82 = arith.constant 0 : index
      %c0_83 = arith.constant 0 : index
      %130 = vector.load %arg18[%c0_82, %c0_83] : memref<1x8xf32, #tpu.memory_space<vmem>>, vector<1x8xf32>
      %131 = tpu.concatenate %126#0, %126#1 in 0 : vector<1x128xf32>, vector<1x128xf32> -> vector<2x128xf32>
      %cst_84 = arith.constant dense<0.000000e+00> : vector<2x8xf32>
      %132 = tpu.matmul %131, %127, %cst_84 {dimension_numbers = #tpu.dot_dimension_numbers<[1], [0], [0], [1], [0, 0, 1, 1], [], []>} : vector<2x128xf32>, vector<128x8xf32>, vector<2x8xf32> -> vector<2x8xf32>
      %133 = vector.extract_strided_slice %132 {offsets = [0, 0], sizes = [1, 8], strides = [1, 1]} : vector<2x8xf32> to vector<1x8xf32>
      %cst_85 = arith.constant 3.18877544E-4 : f32
      %134 = vector.broadcast %cst_85 : f32 to vector<1x8xf32>
      %135 = arith.mulf %133, %134 : vector<1x8xf32>
      %136 = vector.extract_strided_slice %132 {offsets = [1, 0], sizes = [1, 8], strides = [1, 1]} : vector<2x8xf32> to vector<1x8xf32>
      %cst_86 = arith.constant 3.18877544E-4 : f32
      %137 = vector.broadcast %cst_86 : f32 to vector<1x8xf32>
      %138 = arith.mulf %136, %137 : vector<1x8xf32>
      %139 = arith.mulf %135, %135 : vector<1x8xf32>
      %140 = arith.subf %138, %139 : vector<1x8xf32>
      %cst_87 = arith.constant 9.99999974E-6 : f32
      %141 = vector.broadcast %cst_87 : f32 to vector<1x8xf32>
      %142 = arith.addf %140, %141 : vector<1x8xf32>
      %143 = math.rsqrt %142 : vector<1x8xf32>
      %144 = arith.mulf %129, %143 : vector<1x8xf32>
      %145 = arith.mulf %135, %144 : vector<1x8xf32>
      %146 = arith.subf %130, %145 : vector<1x8xf32>
      %147 = tpu.concatenate %144, %146 in 0 : vector<1x8xf32>, vector<1x8xf32> -> vector<2x8xf32>
      %cst_88 = arith.constant dense<0.000000e+00> : vector<2x128xf32>
      %148 = tpu.matmul %147, %128, %cst_88 {dimension_numbers = #tpu.dot_dimension_numbers<[1], [0], [0], [1], [0, 0, 1, 1], [], []>} : vector<2x8xf32>, vector<8x128xf32>, vector<2x128xf32> -> vector<2x128xf32>
      %c0_89 = arith.constant 0 : index
      %c0_90 = arith.constant 0 : index
      %149 = vector.load %arg26[%c0_89, %c0_90] : memref<2x128xf32, #tpu.memory_space<vmem>>, vector<2x128xf32>
      tpu.vector_store %arg26[%c0_89, %c0_90], %148 {strides = array<i32>} : memref<2x128xf32, #tpu.memory_space<vmem>>, vector<2x128xf32>,
    } else {
    }
    %3 = arith.index_cast %arg0 : i32 to index
    %c0 = arith.constant 0 : index
    %c0_1 = arith.constant 0 : index
    %4 = vector.load %arg1[%3, %c0, %c0_1] : memref<2x8x16xf32, #tpu.memory_space<vmem>>, vector<1x8x16xf32>
    %5 = vector.shape_cast %4 : vector<1x8x16xf32> to vector<8x16xf32>
    %c0_2 = arith.constant 0 : index
    %c0_3 = arith.constant 0 : index
    %6 = vector.load %arg2[%c0_2, %c0_3] : memref<16x128xbf16, #tpu.memory_space<vmem>>, vector<16x128xbf16>
    %7 = arith.truncf %5 : vector<8x16xf32> to vector<8x16xbf16>
    %cst = arith.constant dense<0.000000e+00> : vector<8x128xf32>
    %8 = tpu.matmul %7, %6, %cst {dimension_numbers = #tpu.dot_dimension_numbers<[1], [0], [0], [1], [0, 0, 1, 1], [], []>} : vector<8x16xbf16>, vector<16x128xbf16>, vector<8x128xf32> -> vector<8x128xf32>
    %c0_4 = arith.constant 0 : index
    %c0_5 = arith.constant 0 : index
    %9 = vector.load %arg3[%c0_4, %c0_5] : memref<1x128xf32, #tpu.memory_space<vmem>>, vector<1x128xf32>
    %10 = vector.broadcast %9 : vector<1x128xf32> to vector<8x128xf32>
    %11 = arith.addf %8, %10 : vector<8x128xf32>
    %cst_6 = arith.constant 0.000000e+00 : f32
    %12 = vector.broadcast %cst_6 : f32 to vector<8x128xf32>
    %13 = arith.maximumf %11, %12 : vector<8x128xf32>
    %c0_7 = arith.constant 0 : index
    %c0_8 = arith.constant 0 : index
    %14 = vector.load %arg4[%c0_7, %c0_8] : memref<128x384xbf16, #tpu.memory_space<vmem>>, vector<128x384xbf16>
    %15 = arith.truncf %13 : vector<8x128xf32> to vector<8x128xbf16>
    %cst_9 = arith.constant dense<0.000000e+00> : vector<8x384xf32>
    %16 = tpu.matmul %15, %14, %cst_9 {dimension_numbers = #tpu.dot_dimension_numbers<[1], [0], [0], [1], [0, 0, 1, 1], [], []>} : vector<8x128xbf16>, vector<128x384xbf16>, vector<8x384xf32> -> vector<8x384xf32>
    %c0_10 = arith.constant 0 : index
    %c0_11 = arith.constant 0 : index
    %17 = vector.load %arg5[%c0_10, %c0_11] : memref<1x384xf32, #tpu.memory_space<vmem>>, vector<1x384xf32>
    %18 = vector.broadcast %17 : vector<1x384xf32> to vector<8x384xf32>
    %19 = arith.addf %16, %18 : vector<8x384xf32>
    %cst_12 = arith.constant 0.000000e+00 : f32
    %20 = vector.broadcast %cst_12 : f32 to vector<8x384xf32>
    %21 = arith.maximumf %19, %20 : vector<8x384xf32>
    %22 = vector.extract_strided_slice %21 {offsets = [0, 0], sizes = [8, 128], strides = [1, 1]} : vector<8x384xf32> to vector<8x128xf32>
    %23 = vector.extract_strided_slice %21 {offsets = [0, 128], sizes = [8, 128], strides = [1, 1]} : vector<8x384xf32> to vector<8x128xf32>
    %24 = vector.extract_strided_slice %21 {offsets = [0, 256], sizes = [8, 128], strides = [1, 1]} : vector<8x384xf32> to vector<8x128xf32>
    %25 = tpu.concatenate %22, %23, %24 in 0 : vector<8x128xf32>, vector<8x128xf32>, vector<8x128xf32> -> vector<24x128xf32>
    %c0_13 = arith.constant 0 : index
    %c0_14 = arith.constant 0 : index
    %26 = vector.load %arg6[%c0_13, %c0_14] : memref<24x24xbf16, #tpu.memory_space<vmem>>, vector<24x24xbf16>
    %27 = arith.truncf %25 : vector<24x128xf32> to vector<24x128xbf16>
    %cst_15 = arith.constant dense<0.000000e+00> : vector<24x128xf32>
    %28 = tpu.matmul %26, %27, %cst_15 {dimension_numbers = #tpu.dot_dimension_numbers<[1], [0], [0], [1], [0, 0, 1, 1], [], []>} : vector<24x24xbf16>, vector<24x128xbf16>, vector<24x128xf32> -> vector<24x128xf32>
    %c0_16 = arith.constant 0 : index
    %c0_17 = arith.constant 0 : index
    %29 = vector.load %arg7[%c0_16, %c0_17] : memref<128x384xbf16, #tpu.memory_space<vmem>>, vector<128x384xbf16>
    %c0_18 = arith.constant 0 : index
    %c0_19 = arith.constant 0 : index
    %30 = vector.load %arg8[%c0_18, %c0_19] : memref<56x72xbf16, #tpu.memory_space<vmem>>, vector<56x72xbf16>
    %c0_20 = arith.constant 0 : index
    %c0_21 = arith.constant 0 : index
    %31 = vector.load %arg9[%c0_20, %c0_21] : memref<1x128xf32, #tpu.memory_space<vmem>>, vector<1x128xf32>
    %32 = arith.truncf %28 : vector<24x128xf32> to vector<24x128xbf16>
    %cst_22 = arith.constant dense<0.000000e+00> : vector<24x384xf32>
    %33 = tpu.matmul %32, %29, %cst_22 {dimension_numbers = #tpu.dot_dimension_numbers<[1], [0], [0], [1], [0, 0, 1, 1], [], []>} : vector<24x128xbf16>, vector<128x384xbf16>, vector<24x384xf32> -> vector<24x384xf32>
    %34 = vector.extract_strided_slice %33 {offsets = [0, 0], sizes = [24, 128], strides = [1, 1]} : vector<24x384xf32> to vector<24x128xf32>
    %35 = vector.extract_strided_slice %33 {offsets = [0, 128], sizes = [24, 128], strides = [1, 1]} : vector<24x384xf32> to vector<24x128xf32>
    %36 = vector.extract_strided_slice %33 {offsets = [0, 256], sizes = [24, 128], strides = [1, 1]} : vector<24x384xf32> to vector<24x128xf32>
    %37 = tpu.concatenate %34, %35, %36 in 0 : vector<24x128xf32>, vector<24x128xf32>, vector<24x128xf32> -> vector<72x128xf32>
    %38 = arith.truncf %37 : vector<72x128xf32> to vector<72x128xbf16>
    %cst_23 = arith.constant dense<0.000000e+00> : vector<56x128xf32>
    %39 = tpu.matmul %30, %38, %cst_23 {dimension_numbers = #tpu.dot_dimension_numbers<[1], [0], [0], [1], [0, 0, 1, 1], [], []>} : vector<56x72xbf16>, vector<72x128xbf16>, vector<56x128xf32> -> vector<56x128xf32>
    %40 = vector.broadcast %31 : vector<1x128xf32> to vector<56x128xf32>
    %41 = arith.addf %39, %40 : vector<56x128xf32>
    %c0_24 = arith.constant 0 : index
    %c0_25 = arith.constant 0 : index
    %42 = vector.load %arg25[%c0_24, %c0_25] : memref<2x128xf32, #tpu.memory_space<vmem>>, vector<2x128xf32>
    %43 = vector.extract_strided_slice %42 {offsets = [0, 0], sizes = [1, 128], strides = [1, 1]} : vector<2x128xf32> to vector<1x128xf32>
    %44 = vector.broadcast %43 : vector<1x128xf32> to vector<56x128xf32>
    %45 = arith.mulf %41, %44 : vector<56x128xf32>
    %46 = vector.extract_strided_slice %42 {offsets = [1, 0], sizes = [1, 128], strides = [1, 1]} : vector<2x128xf32> to vector<1x128xf32>
    %47 = vector.broadcast %46 : vector<1x128xf32> to vector<56x128xf32>
    %48 = arith.addf %45, %47 : vector<56x128xf32>
    %cst_26 = arith.constant 0.000000e+00 : f32
    %49 = vector.broadcast %cst_26 : f32 to vector<56x128xf32>
    %50 = arith.maximumf %48, %49 : vector<56x128xf32>
    %c0_27 = arith.constant 0 : index
    %c0_28 = arith.constant 0 : index
    %51 = vector.load %arg14[%c0_27, %c0_28] : memref<128x384xbf16, #tpu.memory_space<vmem>>, vector<128x384xbf16>
    %c0_29 = arith.constant 0 : index
    %c0_30 = arith.constant 0 : index
    %52 = vector.load %arg15[%c0_29, %c0_30] : memref<112x168xbf16, #tpu.memory_space<vmem>>, vector<112x168xbf16>
    %c0_31 = arith.constant 0 : index
    %c0_32 = arith.constant 0 : index
    %53 = vector.load %arg16[%c0_31, %c0_32] : memref<1x128xf32, #tpu.memory_space<vmem>>, vector<1x128xf32>
    %54 = arith.truncf %50 : vector<56x128xf32> to vector<56x128xbf16>
    %cst_33 = arith.constant dense<0.000000e+00> : vector<56x384xf32>
    %55 = tpu.matmul %54, %51, %cst_33 {dimension_numbers = #tpu.dot_dimension_numbers<[1], [0], [0], [1], [0, 0, 1, 1], [], []>} : vector<56x128xbf16>, vector<128x384xbf16>, vector<56x384xf32> -> vector<56x384xf32>
    %56 = vector.extract_strided_slice %55 {offsets = [0, 0], sizes = [56, 128], strides = [1, 1]} : vector<56x384xf32> to vector<56x128xf32>
    %57 = vector.extract_strided_slice %55 {offsets = [0, 128], sizes = [56, 128], strides = [1, 1]} : vector<56x384xf32> to vector<56x128xf32>
    %58 = vector.extract_strided_slice %55 {offsets = [0, 256], sizes = [56, 128], strides = [1, 1]} : vector<56x384xf32> to vector<56x128xf32>
    %59 = tpu.concatenate %56, %57, %58 in 0 : vector<56x128xf32>, vector<56x128xf32>, vector<56x128xf32> -> vector<168x128xf32>
    %60 = arith.truncf %59 : vector<168x128xf32> to vector<168x128xbf16>
    %cst_34 = arith.constant dense<0.000000e+00> : vector<112x128xf32>
    %61 = tpu.matmul %52, %60, %cst_34 {dimension_numbers = #tpu.dot_dimension_numbers<[1], [0], [0], [1], [0, 0, 1, 1], [], []>} : vector<112x168xbf16>, vector<168x128xbf16>, vector<112x128xf32> -> vector<112x128xf32>
    %62 = vector.broadcast %53 : vector<1x128xf32> to vector<112x128xf32>
    %63 = arith.addf %61, %62 : vector<112x128xf32>
    %c0_35 = arith.constant 0 : index
    %c0_36 = arith.constant 0 : index
    %64 = vector.load %arg26[%c0_35, %c0_36] : memref<2x128xf32, #tpu.memory_space<vmem>>, vector<2x128xf32>
    %65 = vector.extract_strided_slice %64 {offsets = [0, 0], sizes = [1, 128], strides = [1, 1]} : vector<2x128xf32> to vector<1x128xf32>
    %66 = vector.broadcast %65 : vector<1x128xf32> to vector<112x128xf32>
    %67 = arith.mulf %63, %66 : vector<112x128xf32>
    %68 = vector.extract_strided_slice %64 {offsets = [1, 0], sizes = [1, 128], strides = [1, 1]} : vector<2x128xf32> to vector<1x128xf32>
    %69 = vector.broadcast %68 : vector<1x128xf32> to vector<112x128xf32>
    %70 = arith.addf %67, %69 : vector<112x128xf32>
    %cst_37 = arith.constant 0.000000e+00 : f32
    %71 = vector.broadcast %cst_37 : f32 to vector<112x128xf32>
    %72 = arith.maximumf %70, %71 : vector<112x128xf32>
    %c0_38 = arith.constant 0 : index
    %c0_39 = arith.constant 0 : index
    %73 = vector.load %arg21[%c0_38, %c0_39] : memref<128x384xbf16, #tpu.memory_space<vmem>>, vector<128x384xbf16>
    %c0_40 = arith.constant 0 : index
    %c0_41 = arith.constant 0 : index
    %74 = vector.load %arg22[%c0_40, %c0_41] : memref<224x336xbf16, #tpu.memory_space<vmem>>, vector<224x336xbf16>
    %c0_42 = arith.constant 0 : index
    %c0_43 = arith.constant 0 : index
    %75 = vector.load %arg23[%c0_42, %c0_43] : memref<1x128xf32, #tpu.memory_space<vmem>>, vector<1x128xf32>
    %76 = arith.truncf %72 : vector<112x128xf32> to vector<112x128xbf16>
    %cst_44 = arith.constant dense<0.000000e+00> : vector<112x384xf32>
    %77 = tpu.matmul %76, %73, %cst_44 {dimension_numbers = #tpu.dot_dimension_numbers<[1], [0], [0], [1], [0, 0, 1, 1], [], []>} : vector<112x128xbf16>, vector<128x384xbf16>, vector<112x384xf32> -> vector<112x384xf32>
    %78 = vector.extract_strided_slice %77 {offsets = [0, 0], sizes = [112, 128], strides = [1, 1]} : vector<112x384xf32> to vector<112x128xf32>
    %79 = vector.extract_strided_slice %77 {offsets = [0, 128], sizes = [112, 128], strides = [1, 1]} : vector<112x384xf32> to vector<112x128xf32>
    %80 = vector.extract_strided_slice %77 {offsets = [0, 256], sizes = [112, 128], strides = [1, 1]} : vector<112x384xf32> to vector<112x128xf32>
    %81 = tpu.concatenate %78, %79, %80 in 0 : vector<112x128xf32>, vector<112x128xf32>, vector<112x128xf32> -> vector<336x128xf32>
    %82 = arith.truncf %81 : vector<336x128xf32> to vector<336x128xbf16>
    %cst_45 = arith.constant dense<0.000000e+00> : vector<224x128xf32>
    %83 = tpu.matmul %74, %82, %cst_45 {dimension_numbers = #tpu.dot_dimension_numbers<[1], [0], [0], [1], [0, 0, 1, 1], [], []>} : vector<224x336xbf16>, vector<336x128xbf16>, vector<224x128xf32> -> vector<224x128xf32>
    %84 = vector.broadcast %75 : vector<1x128xf32> to vector<224x128xf32>
    %85 = arith.addf %83, %84 : vector<224x128xf32>
    %86 = vector.extract_strided_slice %85 {offsets = [0, 0], sizes = [224, 28], strides = [1, 1]} : vector<224x128xf32> to vector<224x28xf32>
    %cst_46 = arith.constant 0.000000e+00 : f32
    %87 = vector.broadcast %cst_46 : f32 to vector<224x28xf32>
    %88 = arith.subf %87, %86 : vector<224x28xf32>
    %89 = math.exp %88 : vector<224x28xf32>
    %cst_47 = arith.constant 1.000000e+00 : f32
    %90 = vector.broadcast %cst_47 : f32 to vector<224x28xf32>
    %91 = arith.addf %90, %89 : vector<224x28xf32>
    %92 = tpu.reciprocal %91 {approx = true} : vector<224x28xf32> -> vector<224x28xf32>
    %cst_48 = arith.constant 1.000000e+00 : f32
    %93 = vector.broadcast %cst_48 : f32 to vector<224x28xf32>
    %94 = arith.minimumf %92, %93 : vector<224x28xf32>
    %c0_49 = arith.constant 0 : index
    %c0_50 = arith.constant 0 : index
    %95 = vector.load %arg24[%c0_49, %c0_50] : memref<224x28xf32, #tpu.memory_space<vmem>>, vector<224x28xf32>
    tpu.vector_store %arg24[%c0_49, %c0_50], %94 {strides = array<i32>} : memref<224x28xf32, #tpu.memory_space<vmem>>, vector<224x28xf32>,
    return
  }
  func.func @transform_0(%arg0: i32) -> (i32, i32, i32) {
    %c0_i32 = arith.constant 0 : i32
    %c0_i32_0 = arith.constant 0 : i32
    %c0_i32_1 = arith.constant 0 : i32
    %c0_i32_2 = arith.constant 0 : i32
    return %c0_i32, %c0_i32_0, %c0_i32_1 : i32, i32, i32
  }
  func.func @transform_1(%arg0: i32) -> (i32, i32) {
    %c0_i32 = arith.constant 0 : i32
    %c0_i32_0 = arith.constant 0 : i32
    %c0_i32_1 = arith.constant 0 : i32
    return %c0_i32, %c0_i32_0 : i32, i32
  }
  func.func @transform_2(%arg0: i32) -> (i32, i32) {
    %c0_i32 = arith.constant 0 : i32
    %c0_i32_0 = arith.constant 0 : i32
    %c0_i32_1 = arith.constant 0 : i32
    return %c0_i32, %c0_i32_0 : i32, i32
  }
  func.func @transform_3(%arg0: i32) -> (i32, i32) {
    %c0_i32 = arith.constant 0 : i32
    %c0_i32_0 = arith.constant 0 : i32
    %c0_i32_1 = arith.constant 0 : i32
    return %c0_i32, %c0_i32_0 : i32, i32
  }
  func.func @transform_4(%arg0: i32) -> (i32, i32) {
    %c0_i32 = arith.constant 0 : i32
    %c0_i32_0 = arith.constant 0 : i32
    %c0_i32_1 = arith.constant 0 : i32
    return %c0_i32, %c0_i32_0 : i32, i32
  }
  func.func @transform_5(%arg0: i32) -> (i32, i32) {
    %c0_i32 = arith.constant 0 : i32
    %c0_i32_0 = arith.constant 0 : i32
    %c0_i32_1 = arith.constant 0 : i32
    return %c0_i32, %c0_i32_0 : i32, i32
  }
  func.func @transform_6(%arg0: i32) -> (i32, i32) {
    %c0_i32 = arith.constant 0 : i32
    %c0_i32_0 = arith.constant 0 : i32
    %c0_i32_1 = arith.constant 0 : i32
    return %c0_i32, %c0_i32_0 : i32, i32
  }
  func.func @transform_7(%arg0: i32) -> (i32, i32) {
    %c0_i32 = arith.constant 0 : i32
    %c0_i32_0 = arith.constant 0 : i32
    %c0_i32_1 = arith.constant 0 : i32
    return %c0_i32, %c0_i32_0 : i32, i32
  }
  func.func @transform_8(%arg0: i32) -> (i32, i32) {
    %c0_i32 = arith.constant 0 : i32
    %c0_i32_0 = arith.constant 0 : i32
    %c0_i32_1 = arith.constant 0 : i32
    return %c0_i32, %c0_i32_0 : i32, i32
  }
  func.func @transform_9(%arg0: i32) -> (i32, i32) {
    %c0_i32 = arith.constant 0 : i32
    %c0_i32_0 = arith.constant 0 : i32
    %c0_i32_1 = arith.constant 0 : i32
    return %c0_i32, %c0_i32_0 : i32, i32
  }
  func.func @transform_10(%arg0: i32) -> (i32, i32) {
    %c0_i32 = arith.constant 0 : i32
    %c0_i32_0 = arith.constant 0 : i32
    %c0_i32_1 = arith.constant 0 : i32
    return %c0_i32, %c0_i32_0 : i32, i32
  }
  func.func @transform_11(%arg0: i32) -> (i32, i32) {
    %c0_i32 = arith.constant 0 : i32
    %c0_i32_0 = arith.constant 0 : i32
    %c0_i32_1 = arith.constant 0 : i32
    return %c0_i32, %c0_i32_0 : i32, i32
  }
  func.func @transform_12(%arg0: i32) -> (i32, i32) {
    %c0_i32 = arith.constant 0 : i32
    %c0_i32_0 = arith.constant 0 : i32
    %c0_i32_1 = arith.constant 0 : i32
    return %c0_i32, %c0_i32_0 : i32, i32
  }
  func.func @transform_13(%arg0: i32) -> (i32, i32) {
    %c0_i32 = arith.constant 0 : i32
    %c0_i32_0 = arith.constant 0 : i32
    %c0_i32_1 = arith.constant 0 : i32
    return %c0_i32, %c0_i32_0 : i32, i32
  }
  func.func @transform_14(%arg0: i32) -> (i32, i32) {
    %c0_i32 = arith.constant 0 : i32
    %c0_i32_0 = arith.constant 0 : i32
    %c0_i32_1 = arith.constant 0 : i32
    return %c0_i32, %c0_i32_0 : i32, i32
  }
  func.func @transform_15(%arg0: i32) -> (i32, i32) {
    %c0_i32 = arith.constant 0 : i32
    %c0_i32_0 = arith.constant 0 : i32
    %c0_i32_1 = arith.constant 0 : i32
    return %c0_i32, %c0_i32_0 : i32, i32
  }
  func.func @transform_16(%arg0: i32) -> (i32, i32) {
    %c0_i32 = arith.constant 0 : i32
    %c0_i32_0 = arith.constant 0 : i32
    %c0_i32_1 = arith.constant 0 : i32
    return %c0_i32, %c0_i32_0 : i32, i32
  }
  func.func @transform_17(%arg0: i32) -> (i32, i32) {
    %c0_i32 = arith.constant 0 : i32
    %c0_i32_0 = arith.constant 0 : i32
    %c0_i32_1 = arith.constant 0 : i32
    return %c0_i32, %c0_i32_0 : i32, i32
  }
  func.func @transform_18(%arg0: i32) -> (i32, i32) {
    %c0_i32 = arith.constant 0 : i32
    %c0_i32_0 = arith.constant 0 : i32
    %c0_i32_1 = arith.constant 0 : i32
    return %c0_i32, %c0_i32_0 : i32, i32
  }
  func.func @transform_19(%arg0: i32) -> (i32, i32) {
    %c0_i32 = arith.constant 0 : i32
    %c0_i32_0 = arith.constant 0 : i32
    %c0_i32_1 = arith.constant 0 : i32
    return %c0_i32, %c0_i32_0 : i32, i32
  }
  func.func @transform_20(%arg0: i32) -> (i32, i32) {
    %c0_i32 = arith.constant 0 : i32
    %c0_i32_0 = arith.constant 0 : i32
    %c0_i32_1 = arith.constant 0 : i32
    return %c0_i32, %c0_i32_0 : i32, i32
  }
  func.func @transform_21(%arg0: i32) -> (i32, i32) {
    %c0_i32 = arith.constant 0 : i32
    %c0_i32_0 = arith.constant 0 : i32
    %c0_i32_1 = arith.constant 0 : i32
    return %c0_i32, %c0_i32_0 : i32, i32
  }
  func.func @transform_22(%arg0: i32) -> (i32, i32) {
    %c0_i32 = arith.constant 0 : i32
    %c0_i32_0 = arith.constant 0 : i32
    %c0_i32_1 = arith.constant 0 : i32
    return %c0_i32, %c0_i32_0 : i32, i32
  }
  func.func @transform_23(%arg0: i32) -> (i32, i32) {
    %c0_i32 = arith.constant 0 : i32
    %c0_i32_0 = arith.constant 0 : i32
    return %arg0, %c0_i32 : i32, i32
  }
}

</mosaic_0001>

<llo_original>
// kernel: mnist_decoder_forward.1
$region0: #{mnist_decoder_forward.1}
  #allocation0 [shape = 'u32[]', space=smem, size = 0x4, offset = 0x4, fixed_abs, tag = 'smem constant byte address 0x4 - core index']
  #allocation1 [shape = 'u32[72,128]{1,0:T(1,128)}', space=vmem, size = 0x9000, scoped, tag = 'internal scratch']
  #allocation2 [shape = 'f32[2,128]{1,0:T(2,128)}', space=vmem, size = 0x400, scoped, tag = 'scratch operand']
  #allocation3 [shape = 'f32[2,128]{1,0:T(2,128)}', space=vmem, size = 0x400, scoped, tag = 'scratch operand']
  %s0 = inlined_call_operand.vmem [shape: f32[2,8,16], index: 0, kind: input, shape index: {}]
  %s1 = inlined_call_operand.vmem [shape: bf16[16,128], index: 1, kind: input, shape index: {}]
  %s2 = inlined_call_operand.hbm [shape: f32[1,128], index: 2, kind: input, shape index: {}]
  %s3 = inlined_call_operand.vmem [shape: bf16[128,384], index: 3, kind: input, shape index: {}]
  %s4 = inlined_call_operand.vmem [shape: f32[1,384], index: 4, kind: input, shape index: {}]
  %s5 = inlined_call_operand.hbm [shape: bf16[24,24], index: 5, kind: input, shape index: {}]
  %s6 = inlined_call_operand.vmem [shape: bf16[128,384], index: 6, kind: input, shape index: {}]
  %s7 = inlined_call_operand.vmem [shape: bf16[56,72], index: 7, kind: input, shape index: {}]
  %s8 = inlined_call_operand.hbm [shape: f32[1,128], index: 8, kind: input, shape index: {}]
  %s9 = inlined_call_operand.vmem [shape: f32[1,16], index: 9, kind: input, shape index: {}]
  %s10 = inlined_call_operand.hbm [shape: f32[1,16], index: 10, kind: input, shape index: {}]
  %s11 = inlined_call_operand.vmem [shape: f32[128,16], index: 11, kind: input, shape index: {}]
  %s12 = inlined_call_operand.vmem [shape: f32[16,128], index: 12, kind: input, shape index: {}]
  %s13 = inlined_call_operand.hbm [shape: bf16[128,384], index: 13, kind: input, shape index: {}]
  %s14 = inlined_call_operand.vmem [shape: bf16[112,168], index: 14, kind: input, shape index: {}]
  %s15 = inlined_call_operand.vmem [shape: f32[1,128], index: 15, kind: input, shape index: {}]
  %s16 = inlined_call_operand.vmem [shape: f32[1,8], index: 16, kind: input, shape index: {}]
  %s17 = inlined_call_operand.hbm [shape: f32[1,8], index: 17, kind: input, shape index: {}]
  %s18 = inlined_call_operand.vmem [shape: f32[128,8], index: 18, kind: input, shape index: {}]
  %s19 = inlined_call_operand.vmem [shape: f32[8,128], index: 19, kind: input, shape index: {}]
  %s20 = inlined_call_operand.hbm [shape: bf16[128,384], index: 20, kind: input, shape index: {}]
  %s21 = inlined_call_operand.hbm [shape: bf16[224,336], index: 21, kind: input, shape index: {}]
  %s22 = inlined_call_operand.vmem [shape: f32[1,128], index: 22, kind: input, shape index: {}]
  %s23 = inlined_call_operand.hbm [shape: f32[448,28], index: 23, kind: output, shape index: {}]
  %s24 = sld [smem:[#allocation0]]
  $region175: #{mnist_decoder_forward.1} parent=0
    _
  %s26 = ssub.s32 1, %s24
  %s27 = scalar_select 0, %s26, %s24
  $region1: #{mnist_decoder_forward.1} parent=0
    #allocation4 [shape = 'u8[512]{0}', space=vmem, size = 0x400, scoped, tag = 'input window, operand 2, single buffered']
    #allocation5 [shape = 's32[2]{0}', space=sflag, size = 0x8, scoped, tag = 'scoped memory for mnist_decoder_forward.1']
    #allocation6 [shape = 's32[2]{0}', space=sflag, size = 0x8, scoped, tag = 'scoped memory for mnist_decoder_forward.1']
    #allocation7 [shape = 'u8[6144]{0}', space=vmem, size = 0x1800, scoped, tag = 'input window, operand 5, single buffered']
    #allocation8 [shape = 's32[1]{0}', space=sflag, size = 0x4, scoped, tag = 'scoped memory for mnist_decoder_forward.1']
    #allocation9 [shape = 'u8[512]{0}', space=vmem, size = 0x400, scoped, tag = 'input window, operand 8, single buffered']
    #allocation10 [shape = 'u8[512]{0}', space=vmem, size = 0x400, scoped, tag = 'input window, operand 10, single buffered']
    #allocation11 [shape = 's32[1]{0}', space=sflag, size = 0x4, scoped, tag = 'scoped memory for mnist_decoder_forward.1']
    #allocation12 [shape = 'u8[98304]{0}', space=vmem, size = 0x18000, scoped, tag = 'input window, operand 13, single buffered']
    #allocation13 [shape = 'u8[512]{0}', space=vmem, size = 0x400, scoped, tag = 'input window, operand 17, single buffered']
    #allocation14 [shape = 's32[1]{0}', space=sflag, size = 0x4, scoped, tag = 'scoped memory for mnist_decoder_forward.1']
    #allocation15 [shape = 'u8[98304]{0}', space=vmem, size = 0x18000, scoped, tag = 'input window, operand 20, single buffered']
    #allocation16 [shape = 'u8[172032]{0}', space=vmem, size = 0x2a000, scoped, tag = 'input window, operand 21, single buffered']
    #allocation17 [shape = 's32[1]{0}', space=sflag, size = 0x4, scoped, tag = 'scoped memory for mnist_decoder_forward.1']
    #allocation18 [shape = 'u8[229376]{0}', space=vmem, size = 0x38000, scoped, tag = 'output window, operand 0']
    %28 = vsyncpa [#allocation5], 0
    %29 = vsyncpa [#allocation8], 0
    %30 = vsyncpa [#allocation11], 0
    %31 = vsyncpa [#allocation14], 0
    %32 = vsyncpa [#allocation17], 0
    %33 = vsyncpa [#allocation6], 0
    %s34 = scalar_lea.sflag [#allocation6], 1
    %35 = vsyncpa %s34, 0
    loop: start=0, step=1, limit=4
    $region2: #{mnist_decoder_forward.1} parent=1 // loop_pre_header
      _
    $region3: #{mnist_decoder_forward.1} parent=1 // loop_header
      %s37 = sphi 0, %s41
      %p38 = scmp.ge.s32.totalorder %s37, 4
      %s45 = sphi 0, %s45
      %s47 = sphi 0, %s45
      %s48 = sphi 0, %s47
      %s62 = sphi 0, %s48
      %s66 = sphi 0, %s66
      %s68 = sphi 0, %s66
      %s69 = sphi 0, %s68
      %s83 = sphi 0, %s69
      %s87 = sphi 0, %s87
      %s89 = sphi 0, %s87
      %s90 = sphi 0, %s89
      %s104 = sphi 0, %s90
      %s108 = sphi 0, %s108
      %s110 = sphi 0, %s108
      %s111 = sphi 0, %s110
      %s125 = sphi 0, %s111
      %s129 = sphi 0, %s129
      %s131 = sphi 0, %s129
      %s132 = sphi 0, %s131
      %s146 = sphi 0, %s132
      %s150 = sphi 0, %s150
      %s152 = sphi 0, %s150
      %s153 = sphi 0, %s152
      %s167 = sphi 0, %s153
      %s171 = sphi 0, %s171
      %s173 = sphi 0, %s171
      %s174 = sphi 0, %s173
      %s188 = sphi 0, %s174
      %s192 = sphi 0, %s192
      %s194 = sphi 0, %s192
      %s195 = sphi 0, %s194
      %s209 = sphi 0, %s195
      %s213 = sphi 0, %s213
      %s215 = sphi 0, %s213
      %s216 = sphi 0, %s215
      %s230 = sphi 0, %s216
      %s234 = sphi 0, %s234
      %s236 = sphi 0, %s234
      %s237 = sphi 0, %s236
      %s251 = sphi 0, %s237
      %s255 = sphi 0, %s255
      %s257 = sphi 0, %s255
      %s258 = sphi 0, %s257
      %s272 = sphi 0, %s258
      %s276 = sphi 0, %s276
      %s278 = sphi 0, %s276
      %s279 = sphi 0, %s278
      %s293 = sphi 0, %s279
      %s297 = sphi 0, %s297
      %s299 = sphi 0, %s297
      %s300 = sphi 0, %s299
      %s314 = sphi 0, %s300
      %s318 = sphi 0, %s318
      %s320 = sphi 0, %s318
      %s321 = sphi 0, %s320
      %s335 = sphi 0, %s321
      %s339 = sphi 0, %s339
      %s341 = sphi 0, %s339
      %s342 = sphi 0, %s341
      %s356 = sphi 0, %s342
      %s360 = sphi 0, %s360
      %s362 = sphi 0, %s360
      %s363 = sphi 0, %s362
      %s377 = sphi 0, %s363
      %s381 = sphi 0, %s381
      %s383 = sphi 0, %s381
      %s384 = sphi 0, %s383
      %s398 = sphi 0, %s384
      %s402 = sphi 0, %s402
      %s404 = sphi 0, %s402
      %s405 = sphi 0, %s404
      %s419 = sphi 0, %s405
      %s423 = sphi 0, %s423
      %s425 = sphi 0, %s423
      %s426 = sphi 0, %s425
      %s440 = sphi 0, %s426
      %s444 = sphi 0, %s444
      %s446 = sphi 0, %s444
      %s447 = sphi 0, %s446
      %s461 = sphi 0, %s447
      %s465 = sphi 0, %s465
      %s467 = sphi 0, %s465
      %s468 = sphi 0, %s467
      %s482 = sphi 0, %s468
      %s486 = sphi 0, %s486
      %s488 = sphi 0, %s486
      %s489 = sphi 0, %s488
      %s503 = sphi 0, %s489
      %s507 = sphi 0, %s507
      %s509 = sphi 0, %s507
      %s510 = sphi 0, %s509
      %s524 = sphi 0, %s510
      %s530 = sphi 0, %s532
      %s533 = sphi 0, %s530
      %s534 = sphi 0, %s533
      %s550 = sphi 0, %s534
    $region4: #{mnist_decoder_forward.1} parent=1 // loop_header_branch
      %40 = sbr.rel (%p38) target = $region8
    $region5: #{mnist_decoder_forward.1} parent=1 // loop_body
      %s42 = ssub.s32 %s37, 1
      %s43 = ssub.s32 %s37, 2
      %s44 = sadd.s32 %s37, 1
      %s46 = sadd.s32 %s45, 1
      %p49 = scmp.eq.s32.totalorder %s37, 1
      %p50 = scmp.ne.s32.totalorder %s45, %s47
      %p51 = scmp.eq.s32.totalorder %s37, 0
      %p52 = por %p50, %p51
      %p53 = scmp.ne.s32.totalorder %s45, %s47
      %p54 = scmp.eq.s32.totalorder %s42, 1
      %p55 = por %p53, %p54
      %p56 = scmp.ne.s32.totalorder %s47, %s48
      %p57 = scmp.eq.s32.totalorder %s42, 0
      %p58 = por %p56, %p57
      %p59 = scmp.ne.s32.totalorder %s47, %s48
      %p60 = scmp.eq.s32.totalorder %s43, 1
      %p61 = por %p59, %p60
      %p63 = scmp.ne.s32.totalorder %s48, %s62
      %p64 = scmp.eq.s32.totalorder %s43, 0
      %p65 = por %p63, %p64
      %s67 = sadd.s32 %s66, 1
      %p70 = scmp.eq.s32.totalorder %s37, 1
      %p71 = scmp.ne.s32.totalorder %s66, %s68
      %p72 = scmp.eq.s32.totalorder %s37, 0
      %p73 = por %p71, %p72
      %p74 = scmp.ne.s32.totalorder %s66, %s68
      %p75 = scmp.eq.s32.totalorder %s42, 1
      %p76 = por %p74, %p75
      %p77 = scmp.ne.s32.totalorder %s68, %s69
      %p78 = scmp.eq.s32.totalorder %s42, 0
      %p79 = por %p77, %p78
      %p80 = scmp.ne.s32.totalorder %s68, %s69
      %p81 = scmp.eq.s32.totalorder %s43, 1
      %p82 = por %p80, %p81
      %p84 = scmp.ne.s32.totalorder %s69, %s83
      %p85 = scmp.eq.s32.totalorder %s43, 0
      %p86 = por %p84, %p85
      %s88 = sadd.s32 %s87, 1
      %p91 = scmp.eq.s32.totalorder %s37, 1
      %p92 = scmp.ne.s32.totalorder %s87, %s89
      %p93 = scmp.eq.s32.totalorder %s37, 0
      %p94 = por %p92, %p93
      %p95 = scmp.ne.s32.totalorder %s87, %s89
      %p96 = scmp.eq.s32.totalorder %s42, 1
      %p97 = por %p95, %p96
      %p98 = scmp.ne.s32.totalorder %s89, %s90
      %p99 = scmp.eq.s32.totalorder %s42, 0
      %p100 = por %p98, %p99
      %p101 = scmp.ne.s32.totalorder %s89, %s90
      %p102 = scmp.eq.s32.totalorder %s43, 1
      %p103 = por %p101, %p102
      %p105 = scmp.ne.s32.totalorder %s90, %s104
      %p106 = scmp.eq.s32.totalorder %s43, 0
      %p107 = por %p105, %p106
      %s109 = sadd.s32 %s108, 1
      %p112 = scmp.eq.s32.totalorder %s37, 1
      %p113 = scmp.ne.s32.totalorder %s108, %s110
      %p114 = scmp.eq.s32.totalorder %s37, 0
      %p115 = por %p113, %p114
      %p116 = scmp.ne.s32.totalorder %s108, %s110
      %p117 = scmp.eq.s32.totalorder %s42, 1
      %p118 = por %p116, %p117
      %p119 = scmp.ne.s32.totalorder %s110, %s111
      %p120 = scmp.eq.s32.totalorder %s42, 0
      %p121 = por %p119, %p120
      %p122 = scmp.ne.s32.totalorder %s110, %s111
      %p123 = scmp.eq.s32.totalorder %s43, 1
      %p124 = por %p122, %p123
      %p126 = scmp.ne.s32.totalorder %s111, %s125
      %p127 = scmp.eq.s32.totalorder %s43, 0
      %p128 = por %p126, %p127
      %s130 = sadd.s32 %s129, 1
      %p133 = scmp.eq.s32.totalorder %s37, 1
      %p134 = scmp.ne.s32.totalorder %s129, %s131
      %p135 = scmp.eq.s32.totalorder %s37, 0
      %p136 = por %p134, %p135
      %p137 = scmp.ne.s32.totalorder %s129, %s131
      %p138 = scmp.eq.s32.totalorder %s42, 1
      %p139 = por %p137, %p138
      %p140 = scmp.ne.s32.totalorder %s131, %s132
      %p141 = scmp.eq.s32.totalorder %s42, 0
      %p142 = por %p140, %p141
      %p143 = scmp.ne.s32.totalorder %s131, %s132
      %p144 = scmp.eq.s32.totalorder %s43, 1
      %p145 = por %p143, %p144
      %p147 = scmp.ne.s32.totalorder %s132, %s146
      %p148 = scmp.eq.s32.totalorder %s43, 0
      %p149 = por %p147, %p148
      %s151 = sadd.s32 %s150, 1
      %p154 = scmp.eq.s32.totalorder %s37, 1
      %p155 = scmp.ne.s32.totalorder %s150, %s152
      %p156 = scmp.eq.s32.totalorder %s37, 0
      %p157 = por %p155, %p156
      %p158 = scmp.ne.s32.totalorder %s150, %s152
      %p159 = scmp.eq.s32.totalorder %s42, 1
      %p160 = por %p158, %p159
      %p161 = scmp.ne.s32.totalorder %s152, %s153
      %p162 = scmp.eq.s32.totalorder %s42, 0
      %p163 = por %p161, %p162
      %p164 = scmp.ne.s32.totalorder %s152, %s153
      %p165 = scmp.eq.s32.totalorder %s43, 1
      %p166 = por %p164, %p165
      %p168 = scmp.ne.s32.totalorder %s153, %s167
      %p169 = scmp.eq.s32.totalorder %s43, 0
      %p170 = por %p168, %p169
      %s172 = sadd.s32 %s171, 1
      %p175 = scmp.eq.s32.totalorder %s37, 1
      %p176 = scmp.ne.s32.totalorder %s171, %s173
      %p177 = scmp.eq.s32.totalorder %s37, 0
      %p178 = por %p176, %p177
      %p179 = scmp.ne.s32.totalorder %s171, %s173
      %p180 = scmp.eq.s32.totalorder %s42, 1
      %p181 = por %p179, %p180
      %p182 = scmp.ne.s32.totalorder %s173, %s174
      %p183 = scmp.eq.s32.totalorder %s42, 0
      %p184 = por %p182, %p183
      %p185 = scmp.ne.s32.totalorder %s173, %s174
      %p186 = scmp.eq.s32.totalorder %s43, 1
      %p187 = por %p185, %p186
      %p189 = scmp.ne.s32.totalorder %s174, %s188
      %p190 = scmp.eq.s32.totalorder %s43, 0
      %p191 = por %p189, %p190
      %s193 = sadd.s32 %s192, 1
      %p196 = scmp.eq.s32.totalorder %s37, 1
      %p197 = scmp.ne.s32.totalorder %s192, %s194
      %p198 = scmp.eq.s32.totalorder %s37, 0
      %p199 = por %p197, %p198
      %p200 = scmp.ne.s32.totalorder %s192, %s194
      %p201 = scmp.eq.s32.totalorder %s42, 1
      %p202 = por %p200, %p201
      %p203 = scmp.ne.s32.totalorder %s194, %s195
      %p204 = scmp.eq.s32.totalorder %s42, 0
      %p205 = por %p203, %p204
      %p206 = scmp.ne.s32.totalorder %s194, %s195
      %p207 = scmp.eq.s32.totalorder %s43, 1
      %p208 = por %p206, %p207
      %p210 = scmp.ne.s32.totalorder %s195, %s209
      %p211 = scmp.eq.s32.totalorder %s43, 0
      %p212 = por %p210, %p211
      %s214 = sadd.s32 %s213, 1
      %p217 = scmp.eq.s32.totalorder %s37, 1
      %p218 = scmp.ne.s32.totalorder %s213, %s215
      %p219 = scmp.eq.s32.totalorder %s37, 0
      %p220 = por %p218, %p219
      %p221 = scmp.ne.s32.totalorder %s213, %s215
      %p222 = scmp.eq.s32.totalorder %s42, 1
      %p223 = por %p221, %p222
      %p224 = scmp.ne.s32.totalorder %s215, %s216
      %p225 = scmp.eq.s32.totalorder %s42, 0
      %p226 = por %p224, %p225
      %p227 = scmp.ne.s32.totalorder %s215, %s216
      %p228 = scmp.eq.s32.totalorder %s43, 1
      %p229 = por %p227, %p228
      %p231 = scmp.ne.s32.totalorder %s216, %s230
      %p232 = scmp.eq.s32.totalorder %s43, 0
      %p233 = por %p231, %p232
      %s235 = sadd.s32 %s234, 1
      %p238 = scmp.eq.s32.totalorder %s37, 1
      %p239 = scmp.ne.s32.totalorder %s234, %s236
      %p240 = scmp.eq.s32.totalorder %s37, 0
      %p241 = por %p239, %p240
      %p242 = scmp.ne.s32.totalorder %s234, %s236
      %p243 = scmp.eq.s32.totalorder %s42, 1
      %p244 = por %p242, %p243
      %p245 = scmp.ne.s32.totalorder %s236, %s237
      %p246 = scmp.eq.s32.totalorder %s42, 0
      %p247 = por %p245, %p246
      %p248 = scmp.ne.s32.totalorder %s236, %s237
      %p249 = scmp.eq.s32.totalorder %s43, 1
      %p250 = por %p248, %p249
      %p252 = scmp.ne.s32.totalorder %s237, %s251
      %p253 = scmp.eq.s32.totalorder %s43, 0
      %p254 = por %p252, %p253
      %s256 = sadd.s32 %s255, 1
      %p259 = scmp.eq.s32.totalorder %s37, 1
      %p260 = scmp.ne.s32.totalorder %s255, %s257
      %p261 = scmp.eq.s32.totalorder %s37, 0
      %p262 = por %p260, %p261
      %p263 = scmp.ne.s32.totalorder %s255, %s257
      %p264 = scmp.eq.s32.totalorder %s42, 1
      %p265 = por %p263, %p264
      %p266 = scmp.ne.s32.totalorder %s257, %s258
      %p267 = scmp.eq.s32.totalorder %s42, 0
      %p268 = por %p266, %p267
      %p269 = scmp.ne.s32.totalorder %s257, %s258
      %p270 = scmp.eq.s32.totalorder %s43, 1
      %p271 = por %p269, %p270
      %p273 = scmp.ne.s32.totalorder %s258, %s272
      %p274 = scmp.eq.s32.totalorder %s43, 0
      %p275 = por %p273, %p274
      %s277 = sadd.s32 %s276, 1
      %p280 = scmp.eq.s32.totalorder %s37, 1
      %p281 = scmp.ne.s32.totalorder %s276, %s278
      %p282 = scmp.eq.s32.totalorder %s37, 0
      %p283 = por %p281, %p282
      %p284 = scmp.ne.s32.totalorder %s276, %s278
      %p285 = scmp.eq.s32.totalorder %s42, 1
      %p286 = por %p284, %p285
      %p287 = scmp.ne.s32.totalorder %s278, %s279
      %p288 = scmp.eq.s32.totalorder %s42, 0
      %p289 = por %p287, %p288
      %p290 = scmp.ne.s32.totalorder %s278, %s279
      %p291 = scmp.eq.s32.totalorder %s43, 1
      %p292 = por %p290, %p291
      %p294 = scmp.ne.s32.totalorder %s279, %s293
      %p295 = scmp.eq.s32.totalorder %s43, 0
      %p296 = por %p294, %p295
      %s298 = sadd.s32 %s297, 1
      %p301 = scmp.eq.s32.totalorder %s37, 1
      %p302 = scmp.ne.s32.totalorder %s297, %s299
      %p303 = scmp.eq.s32.totalorder %s37, 0
      %p304 = por %p302, %p303
      %p305 = scmp.ne.s32.totalorder %s297, %s299
      %p306 = scmp.eq.s32.totalorder %s42, 1
      %p307 = por %p305, %p306
      %p308 = scmp.ne.s32.totalorder %s299, %s300
      %p309 = scmp.eq.s32.totalorder %s42, 0
      %p310 = por %p308, %p309
      %p311 = scmp.ne.s32.totalorder %s299, %s300
      %p312 = scmp.eq.s32.totalorder %s43, 1
      %p313 = por %p311, %p312
      %p315 = scmp.ne.s32.totalorder %s300, %s314
      %p316 = scmp.eq.s32.totalorder %s43, 0
      %p317 = por %p315, %p316
      %s319 = sadd.s32 %s318, 1
      %p322 = scmp.eq.s32.totalorder %s37, 1
      %p323 = scmp.ne.s32.totalorder %s318, %s320
      %p324 = scmp.eq.s32.totalorder %s37, 0
      %p325 = por %p323, %p324
      %p326 = scmp.ne.s32.totalorder %s318, %s320
      %p327 = scmp.eq.s32.totalorder %s42, 1
      %p328 = por %p326, %p327
      %p329 = scmp.ne.s32.totalorder %s320, %s321
      %p330 = scmp.eq.s32.totalorder %s42, 0
      %p331 = por %p329, %p330
      %p332 = scmp.ne.s32.totalorder %s320, %s321
      %p333 = scmp.eq.s32.totalorder %s43, 1
      %p334 = por %p332, %p333
      %p336 = scmp.ne.s32.totalorder %s321, %s335
      %p337 = scmp.eq.s32.totalorder %s43, 0
      %p338 = por %p336, %p337
      %s340 = sadd.s32 %s339, 1
      %p343 = scmp.eq.s32.totalorder %s37, 1
      %p344 = scmp.ne.s32.totalorder %s339, %s341
      %p345 = scmp.eq.s32.totalorder %s37, 0
      %p346 = por %p344, %p345
      %p347 = scmp.ne.s32.totalorder %s339, %s341
      %p348 = scmp.eq.s32.totalorder %s42, 1
      %p349 = por %p347, %p348
      %p350 = scmp.ne.s32.totalorder %s341, %s342
      %p351 = scmp.eq.s32.totalorder %s42, 0
      %p352 = por %p350, %p351
      %p353 = scmp.ne.s32.totalorder %s341, %s342
      %p354 = scmp.eq.s32.totalorder %s43, 1
      %p355 = por %p353, %p354
      %p357 = scmp.ne.s32.totalorder %s342, %s356
      %p358 = scmp.eq.s32.totalorder %s43, 0
      %p359 = por %p357, %p358
      %s361 = sadd.s32 %s360, 1
      %p364 = scmp.eq.s32.totalorder %s37, 1
      %p365 = scmp.ne.s32.totalorder %s360, %s362
      %p366 = scmp.eq.s32.totalorder %s37, 0
      %p367 = por %p365, %p366
      %p368 = scmp.ne.s32.totalorder %s360, %s362
      %p369 = scmp.eq.s32.totalorder %s42, 1
      %p370 = por %p368, %p369
      %p371 = scmp.ne.s32.totalorder %s362, %s363
      %p372 = scmp.eq.s32.totalorder %s42, 0
      %p373 = por %p371, %p372
      %p374 = scmp.ne.s32.totalorder %s362, %s363
      %p375 = scmp.eq.s32.totalorder %s43, 1
      %p376 = por %p374, %p375
      %p378 = scmp.ne.s32.totalorder %s363, %s377
      %p379 = scmp.eq.s32.totalorder %s43, 0
      %p380 = por %p378, %p379
      %s382 = sadd.s32 %s381, 1
      %p385 = scmp.eq.s32.totalorder %s37, 1
      %p386 = scmp.ne.s32.totalorder %s381, %s383
      %p387 = scmp.eq.s32.totalorder %s37, 0
      %p388 = por %p386, %p387
      %p389 = scmp.ne.s32.totalorder %s381, %s383
      %p390 = scmp.eq.s32.totalorder %s42, 1
      %p391 = por %p389, %p390
      %p392 = scmp.ne.s32.totalorder %s383, %s384
      %p393 = scmp.eq.s32.totalorder %s42, 0
      %p394 = por %p392, %p393
      %p395 = scmp.ne.s32.totalorder %s383, %s384
      %p396 = scmp.eq.s32.totalorder %s43, 1
      %p397 = por %p395, %p396
      %p399 = scmp.ne.s32.totalorder %s384, %s398
      %p400 = scmp.eq.s32.totalorder %s43, 0
      %p401 = por %p399, %p400
      %s403 = sadd.s32 %s402, 1
      %p406 = scmp.eq.s32.totalorder %s37, 1
      %p407 = scmp.ne.s32.totalorder %s402, %s404
      %p408 = scmp.eq.s32.totalorder %s37, 0
      %p409 = por %p407, %p408
      %p410 = scmp.ne.s32.totalorder %s402, %s404
      %p411 = scmp.eq.s32.totalorder %s42, 1
      %p412 = por %p410, %p411
      %p413 = scmp.ne.s32.totalorder %s404, %s405
      %p414 = scmp.eq.s32.totalorder %s42, 0
      %p415 = por %p413, %p414
      %p416 = scmp.ne.s32.totalorder %s404, %s405
      %p417 = scmp.eq.s32.totalorder %s43, 1
      %p418 = por %p416, %p417
      %p420 = scmp.ne.s32.totalorder %s405, %s419
      %p421 = scmp.eq.s32.totalorder %s43, 0
      %p422 = por %p420, %p421
      %s424 = sadd.s32 %s423, 1
      %p427 = scmp.eq.s32.totalorder %s37, 1
      %p428 = scmp.ne.s32.totalorder %s423, %s425
      %p429 = scmp.eq.s32.totalorder %s37, 0
      %p430 = por %p428, %p429
      %p431 = scmp.ne.s32.totalorder %s423, %s425
      %p432 = scmp.eq.s32.totalorder %s42, 1
      %p433 = por %p431, %p432
      %p434 = scmp.ne.s32.totalorder %s425, %s426
      %p435 = scmp.eq.s32.totalorder %s42, 0
      %p436 = por %p434, %p435
      %p437 = scmp.ne.s32.totalorder %s425, %s426
      %p438 = scmp.eq.s32.totalorder %s43, 1
      %p439 = por %p437, %p438
      %p441 = scmp.ne.s32.totalorder %s426, %s440
      %p442 = scmp.eq.s32.totalorder %s43, 0
      %p443 = por %p441, %p442
      %s445 = sadd.s32 %s444, 1
      %p448 = scmp.eq.s32.totalorder %s37, 1
      %p449 = scmp.ne.s32.totalorder %s444, %s446
      %p450 = scmp.eq.s32.totalorder %s37, 0
      %p451 = por %p449, %p450
      %p452 = scmp.ne.s32.totalorder %s444, %s446
      %p453 = scmp.eq.s32.totalorder %s42, 1
      %p454 = por %p452, %p453
      %p455 = scmp.ne.s32.totalorder %s446, %s447
      %p456 = scmp.eq.s32.totalorder %s42, 0
      %p457 = por %p455, %p456
      %p458 = scmp.ne.s32.totalorder %s446, %s447
      %p459 = scmp.eq.s32.totalorder %s43, 1
      %p460 = por %p458, %p459
      %p462 = scmp.ne.s32.totalorder %s447, %s461
      %p463 = scmp.eq.s32.totalorder %s43, 0
      %p464 = por %p462, %p463
      %s466 = sadd.s32 %s465, 1
      %p469 = scmp.eq.s32.totalorder %s37, 1
      %p470 = scmp.ne.s32.totalorder %s465, %s467
      %p471 = scmp.eq.s32.totalorder %s37, 0
      %p472 = por %p470, %p471
      %p473 = scmp.ne.s32.totalorder %s465, %s467
      %p474 = scmp.eq.s32.totalorder %s42, 1
      %p475 = por %p473, %p474
      %p476 = scmp.ne.s32.totalorder %s467, %s468
      %p477 = scmp.eq.s32.totalorder %s42, 0
      %p478 = por %p476, %p477
      %p479 = scmp.ne.s32.totalorder %s467, %s468
      %p480 = scmp.eq.s32.totalorder %s43, 1
      %p481 = por %p479, %p480
      %p483 = scmp.ne.s32.totalorder %s468, %s482
      %p484 = scmp.eq.s32.totalorder %s43, 0
      %p485 = por %p483, %p484
      %s487 = sadd.s32 %s486, 1
      %p490 = scmp.eq.s32.totalorder %s37, 1
      %p491 = scmp.ne.s32.totalorder %s486, %s488
      %p492 = scmp.eq.s32.totalorder %s37, 0
      %p493 = por %p491, %p492
      %p494 = scmp.ne.s32.totalorder %s486, %s488
      %p495 = scmp.eq.s32.totalorder %s42, 1
      %p496 = por %p494, %p495
      %p497 = scmp.ne.s32.totalorder %s488, %s489
      %p498 = scmp.eq.s32.totalorder %s42, 0
      %p499 = por %p497, %p498
      %p500 = scmp.ne.s32.totalorder %s488, %s489
      %p501 = scmp.eq.s32.totalorder %s43, 1
      %p502 = por %p500, %p501
      %p504 = scmp.ne.s32.totalorder %s489, %s503
      %p505 = scmp.eq.s32.totalorder %s43, 0
      %p506 = por %p504, %p505
      %s508 = sadd.s32 %s507, 1
      %p511 = scmp.eq.s32.totalorder %s37, 1
      %p512 = scmp.ne.s32.totalorder %s507, %s509
      %p513 = scmp.eq.s32.totalorder %s37, 0
      %p514 = por %p512, %p513
      %p515 = scmp.ne.s32.totalorder %s507, %s509
      %p516 = scmp.eq.s32.totalorder %s42, 1
      %p517 = por %p515, %p516
      %p518 = scmp.ne.s32.totalorder %s509, %s510
      %p519 = scmp.eq.s32.totalorder %s42, 0
      %p520 = por %p518, %p519
      %p521 = scmp.ne.s32.totalorder %s509, %s510
      %p522 = scmp.eq.s32.totalorder %s43, 1
      %p523 = por %p521, %p522
      %p525 = scmp.ne.s32.totalorder %s510, %s524
      %p526 = scmp.eq.s32.totalorder %s43, 0
      %p527 = por %p525, %p526
      %s528 = ssub.s32 %s37, %s44
      %p529 = scmp.eq.s32.totalorder %s528, 0
      %s531 = sadd.s32 %s530, 1
      %s532 = scalar_select %p529, %s530, %s531
      %p535 = pneg %p529
      %p536 = scmp.eq.s32.totalorder %s37, 1
      %p537 = por %p535, %p536
      %p538 = scmp.ne.s32.totalorder %s530, %s533
      %p539 = scmp.eq.s32.totalorder %s37, 0
      %p540 = por %p538, %p539
      %p541 = scmp.ne.s32.totalorder %s530, %s533
      %p542 = scmp.eq.s32.totalorder %s42, 1
      %p543 = por %p541, %p542
      %p544 = scmp.ne.s32.totalorder %s533, %s534
      %p545 = scmp.eq.s32.totalorder %s42, 0
      %p546 = por %p544, %p545
      %p547 = scmp.ne.s32.totalorder %s533, %s534
      %p548 = scmp.eq.s32.totalorder %s43, 1
      %p549 = por %p547, %p548
      %p551 = scmp.ne.s32.totalorder %s534, %s550
      %p552 = scmp.eq.s32.totalorder %s43, 0
      %p553 = por %p551, %p552
      %p554 = scmp.le.s32.totalorder 1, %s37
      %p555 = scmp.lt.s32.totalorder %s37, 3
      %p556 = pnand %p554, %p555
      %p557 = pneg %p556
      // Predicated region
      $region9: #{mnist_decoder_forward.1} parent=5 // pred_check
        _
      $region10: #{mnist_decoder_forward.1} parent=5 // pred_check_branch
        %559 = sbr.rel (%p556) target = $region12
      $region11: #{mnist_decoder_forward.1} parent=5 // pred_region
        %s560 = ssub.s32 %s37, 1
        // Predicated region
        $region13: #{mnist_decoder_forward.1} parent=11 // pred_check
          %p561 = pneg %p58
        $region14: #{mnist_decoder_forward.1} parent=11 // pred_check_branch
          %563 = sbr.rel (%p561) target = $region16
        $region15: #{mnist_decoder_forward.1} parent=11 // pred_region
          _
        $region16: #{mnist_decoder_forward.1} parent=11 // pred_fallthru
          _
        // Predicated region
        $region17: #{mnist_decoder_forward.1} parent=11 // pred_check
          %p564 = pneg %p79
        $region18: #{mnist_decoder_forward.1} parent=11 // pred_check_branch
          %566 = sbr.rel (%p564) target = $region20
        $region19: #{mnist_decoder_forward.1} parent=11 // pred_region
          _
        $region20: #{mnist_decoder_forward.1} parent=11 // pred_fallthru
          _
        // Predicated region
        $region21: #{mnist_decoder_forward.1} parent=11 // pred_check
          %p567 = pneg %p100
        $region22: #{mnist_decoder_forward.1} parent=11 // pred_check_branch
          %569 = sbr.rel (%p567) target = $region24
        $region23: #{mnist_decoder_forward.1} parent=11 // pred_region
          %571 = vsyncadd [#allocation5], 0
          %s573 = sshll.u32 %s2, 4
          %s574 = int_to_ptr.hbm [resolvable:$true] %s573
          %s575 = sshll.u32 [#allocation4], 4
          %s576 = int_to_ptr.vmem [resolvable:$true] %s575
          %578 = dma.hbm_to_vmem [thread:$0]  %s574, 16, %s576, [#allocation5]
        $region24: #{mnist_decoder_forward.1} parent=11 // pred_fallthru
          _
        // Predicated region
        $region25: #{mnist_decoder_forward.1} parent=11 // pred_check
          %p579 = pneg %p121
        $region26: #{mnist_decoder_forward.1} parent=11 // pred_check_branch
          %581 = sbr.rel (%p579) target = $region28
        $region27: #{mnist_decoder_forward.1} parent=11 // pred_region
          _
        $region28: #{mnist_decoder_forward.1} parent=11 // pred_fallthru
          _
        // Predicated region
        $region29: #{mnist_decoder_forward.1} parent=11 // pred_check
          %p582 = pneg %p142
        $region30: #{mnist_decoder_forward.1} parent=11 // pred_check_branch
          %584 = sbr.rel (%p582) target = $region32
        $region31: #{mnist_decoder_forward.1} parent=11 // pred_region
          _
        $region32: #{mnist_decoder_forward.1} parent=11 // pred_fallthru
          _
        // Predicated region
        $region33: #{mnist_decoder_forward.1} parent=11 // pred_check
          %p585 = pneg %p163
        $region34: #{mnist_decoder_forward.1} parent=11 // pred_check_branch
          %587 = sbr.rel (%p585) target = $region36
        $region35: #{mnist_decoder_forward.1} parent=11 // pred_region
          %589 = vsyncadd [#allocation8], 0
          %s590 = sshll.u32 %s5, 4
          %s591 = int_to_ptr.hbm [resolvable:$true] %s590
          %s592 = sshll.u32 [#allocation7], 4
          %s593 = int_to_ptr.vmem [resolvable:$true] %s592
          %598 = dma.hbm_to_vmem [thread:$0]  %s591, 192, %s593, [#allocation8], 64, 64, 4
        $region36: #{mnist_decoder_forward.1} parent=11 // pred_fallthru
          _
        // Predicated region
        $region37: #{mnist_decoder_forward.1} parent=11 // pred_check
          %p599 = pneg %p184
        $region38: #{mnist_decoder_forward.1} parent=11 // pred_check_branch
          %601 = sbr.rel (%p599) target = $region40
        $region39: #{mnist_decoder_forward.1} parent=11 // pred_region
          _
        $region40: #{mnist_decoder_forward.1} parent=11 // pred_fallthru
          _
        // Predicated region
        $region41: #{mnist_decoder_forward.1} parent=11 // pred_check
          %p602 = pneg %p205
        $region42: #{mnist_decoder_forward.1} parent=11 // pred_check_branch
          %604 = sbr.rel (%p602) target = $region44
        $region43: #{mnist_decoder_forward.1} parent=11 // pred_region
          _
        $region44: #{mnist_decoder_forward.1} parent=11 // pred_fallthru
          _
        // Predicated region
        $region45: #{mnist_decoder_forward.1} parent=11 // pred_check
          %p605 = pneg %p226
        $region46: #{mnist_decoder_forward.1} parent=11 // pred_check_branch
          %607 = sbr.rel (%p605) target = $region48
        $region47: #{mnist_decoder_forward.1} parent=11 // pred_region
          %609 = vsyncadd [#allocation8], 0
          %s611 = sshll.u32 %s8, 4
          %s612 = int_to_ptr.hbm [resolvable:$true] %s611
          %s613 = sshll.u32 [#allocation9], 4
          %s614 = int_to_ptr.vmem [resolvable:$true] %s613
          %616 = dma.hbm_to_vmem [thread:$0]  %s612, 16, %s614, [#allocation8]
        $region48: #{mnist_decoder_forward.1} parent=11 // pred_fallthru
          _
        // Predicated region
        $region49: #{mnist_decoder_forward.1} parent=11 // pred_check
          %p617 = pneg %p247
        $region50: #{mnist_decoder_forward.1} parent=11 // pred_check_branch
          %619 = sbr.rel (%p617) target = $region52
        $region51: #{mnist_decoder_forward.1} parent=11 // pred_region
          _
        $region52: #{mnist_decoder_forward.1} parent=11 // pred_fallthru
          _
        // Predicated region
        $region53: #{mnist_decoder_forward.1} parent=11 // pred_check
          %p620 = pneg %p268
        $region54: #{mnist_decoder_forward.1} parent=11 // pred_check_branch
          %622 = sbr.rel (%p620) target = $region56
        $region55: #{mnist_decoder_forward.1} parent=11 // pred_region
          %624 = vsyncadd [#allocation11], 0
          %s626 = sshll.u32 %s10, 4
          %s627 = int_to_ptr.hbm [resolvable:$true] %s626
          %s628 = sshll.u32 [#allocation10], 4
          %s629 = int_to_ptr.vmem [resolvable:$true] %s628
          %631 = dma.hbm_to_vmem [thread:$0]  %s627, 16, %s629, [#allocation11]
        $region56: #{mnist_decoder_forward.1} parent=11 // pred_fallthru
          _
        // Predicated region
        $region57: #{mnist_decoder_forward.1} parent=11 // pred_check
          %p632 = pneg %p289
        $region58: #{mnist_decoder_forward.1} parent=11 // pred_check_branch
          %634 = sbr.rel (%p632) target = $region60
        $region59: #{mnist_decoder_forward.1} parent=11 // pred_region
          _
        $region60: #{mnist_decoder_forward.1} parent=11 // pred_fallthru
          _
        // Predicated region
        $region61: #{mnist_decoder_forward.1} parent=11 // pred_check
          %p635 = pneg %p310
        $region62: #{mnist_decoder_forward.1} parent=11 // pred_check_branch
          %637 = sbr.rel (%p635) target = $region64
        $region63: #{mnist_decoder_forward.1} parent=11 // pred_region
          _
        $region64: #{mnist_decoder_forward.1} parent=11 // pred_fallthru
          _
        // Predicated region
        $region65: #{mnist_decoder_forward.1} parent=11 // pred_check
          %p638 = pneg %p331
        $region66: #{mnist_decoder_forward.1} parent=11 // pred_check_branch
          %640 = sbr.rel (%p638) target = $region68
        $region67: #{mnist_decoder_forward.1} parent=11 // pred_region
          %642 = vsyncadd [#allocation11], 0
          %s643 = sshll.u32 %s13, 4
          %s644 = int_to_ptr.hbm [resolvable:$true] %s643
          %s645 = sshll.u32 [#allocation12], 4
          %s646 = int_to_ptr.vmem [resolvable:$true] %s645
          %651 = dma.hbm_to_vmem [thread:$0]  %s644, 3072, %s646, [#allocation11], 192, 192, 12
        $region68: #{mnist_decoder_forward.1} parent=11 // pred_fallthru
          _
        // Predicated region
        $region69: #{mnist_decoder_forward.1} parent=11 // pred_check
          %p652 = pneg %p352
        $region70: #{mnist_decoder_forward.1} parent=11 // pred_check_branch
          %654 = sbr.rel (%p652) target = $region72
        $region71: #{mnist_decoder_forward.1} parent=11 // pred_region
          _
        $region72: #{mnist_decoder_forward.1} parent=11 // pred_fallthru
          _
        // Predicated region
        $region73: #{mnist_decoder_forward.1} parent=11 // pred_check
          %p655 = pneg %p373
        $region74: #{mnist_decoder_forward.1} parent=11 // pred_check_branch
          %657 = sbr.rel (%p655) target = $region76
        $region75: #{mnist_decoder_forward.1} parent=11 // pred_region
          _
        $region76: #{mnist_decoder_forward.1} parent=11 // pred_fallthru
          _
        // Predicated region
        $region77: #{mnist_decoder_forward.1} parent=11 // pred_check
          %p658 = pneg %p394
        $region78: #{mnist_decoder_forward.1} parent=11 // pred_check_branch
          %660 = sbr.rel (%p658) target = $region80
        $region79: #{mnist_decoder_forward.1} parent=11 // pred_region
          _
        $region80: #{mnist_decoder_forward.1} parent=11 // pred_fallthru
          _
        // Predicated region
        $region81: #{mnist_decoder_forward.1} parent=11 // pred_check
          %p661 = pneg %p415
        $region82: #{mnist_decoder_forward.1} parent=11 // pred_check_branch
          %663 = sbr.rel (%p661) target = $region84
        $region83: #{mnist_decoder_forward.1} parent=11 // pred_region
          %665 = vsyncadd [#allocation14], 0
          %s667 = sshll.u32 %s17, 4
          %s668 = int_to_ptr.hbm [resolvable:$true] %s667
          %s669 = sshll.u32 [#allocation13], 4
          %s670 = int_to_ptr.vmem [resolvable:$true] %s669
          %672 = dma.hbm_to_vmem [thread:$0]  %s668, 16, %s670, [#allocation14]
        $region84: #{mnist_decoder_forward.1} parent=11 // pred_fallthru
          _
        // Predicated region
        $region85: #{mnist_decoder_forward.1} parent=11 // pred_check
          %p673 = pneg %p436
        $region86: #{mnist_decoder_forward.1} parent=11 // pred_check_branch
          %675 = sbr.rel (%p673) target = $region88
        $region87: #{mnist_decoder_forward.1} parent=11 // pred_region
          _
        $region88: #{mnist_decoder_forward.1} parent=11 // pred_fallthru
          _
        // Predicated region
        $region89: #{mnist_decoder_forward.1} parent=11 // pred_check
          %p676 = pneg %p457
        $region90: #{mnist_decoder_forward.1} parent=11 // pred_check_branch
          %678 = sbr.rel (%p676) target = $region92
        $region91: #{mnist_decoder_forward.1} parent=11 // pred_region
          _
        $region92: #{mnist_decoder_forward.1} parent=11 // pred_fallthru
          _
        // Predicated region
        $region93: #{mnist_decoder_forward.1} parent=11 // pred_check
          %p679 = pneg %p478
        $region94: #{mnist_decoder_forward.1} parent=11 // pred_check_branch
          %681 = sbr.rel (%p679) target = $region96
        $region95: #{mnist_decoder_forward.1} parent=11 // pred_region
          %683 = vsyncadd [#allocation14], 0
          %s684 = sshll.u32 %s20, 4
          %s685 = int_to_ptr.hbm [resolvable:$true] %s684
          %s686 = sshll.u32 [#allocation15], 4
          %s687 = int_to_ptr.vmem [resolvable:$true] %s686
          %692 = dma.hbm_to_vmem [thread:$0]  %s685, 3072, %s687, [#allocation14], 192, 192, 12
        $region96: #{mnist_decoder_forward.1} parent=11 // pred_fallthru
          _
        // Predicated region
        $region97: #{mnist_decoder_forward.1} parent=11 // pred_check
          %p693 = pneg %p499
        $region98: #{mnist_decoder_forward.1} parent=11 // pred_check_branch
          %695 = sbr.rel (%p693) target = $region100
        $region99: #{mnist_decoder_forward.1} parent=11 // pred_region
          %697 = vsyncadd [#allocation17], 0
          %s698 = sshll.u32 %s21, 4
          %s699 = int_to_ptr.hbm [resolvable:$true] %s698
          %s700 = sshll.u32 [#allocation16], 4
          %s701 = int_to_ptr.vmem [resolvable:$true] %s700
          %706 = dma.hbm_to_vmem [thread:$0]  %s699, 5376, %s701, [#allocation17], 192, 192, 12
        $region100: #{mnist_decoder_forward.1} parent=11 // pred_fallthru
          _
        // Predicated region
        $region101: #{mnist_decoder_forward.1} parent=11 // pred_check
          %p707 = pneg %p520
        $region102: #{mnist_decoder_forward.1} parent=11 // pred_check_branch
          %709 = sbr.rel (%p707) target = $region104
        $region103: #{mnist_decoder_forward.1} parent=11 // pred_region
          _
        $region104: #{mnist_decoder_forward.1} parent=11 // pred_fallthru
          _
      $region12: #{mnist_decoder_forward.1} parent=5 // pred_fallthru
        _
      %p710 = scmp.lt.s32.totalorder %s37, 2
      // Predicated region
      $region105: #{mnist_decoder_forward.1} parent=5 // pred_check
        %p711 = pneg %p710
      $region106: #{mnist_decoder_forward.1} parent=5 // pred_check_branch
        %713 = sbr.rel (%p711) target = $region108
      $region107: #{mnist_decoder_forward.1} parent=5 // pred_region
        _
      $region108: #{mnist_decoder_forward.1} parent=5 // pred_fallthru
        _
      %p714 = scmp.le.s32.totalorder 1, %s37
      %p715 = scmp.lt.s32.totalorder %s37, 3
      %p716 = pnand %p714, %p715
      %p717 = pneg %p716
      // Predicated region
      $region109: #{mnist_decoder_forward.1} parent=5 // pred_check
        _
      $region110: #{mnist_decoder_forward.1} parent=5 // pred_check_branch
        %719 = sbr.rel (%p716) target = $region112
      $region111: #{mnist_decoder_forward.1} parent=5 // pred_region
        %s720 = ssub.s32 %s37, 1
        // Predicated region
        $region113: #{mnist_decoder_forward.1} parent=111 // pred_check
          %p721 = pneg %p100
        $region114: #{mnist_decoder_forward.1} parent=111 // pred_check_branch
          %723 = sbr.rel (%p721) target = $region116
        $region115: #{mnist_decoder_forward.1} parent=111 // pred_region
          %725 = dma.done [#allocation5], 16
        $region116: #{mnist_decoder_forward.1} parent=111 // pred_fallthru
          _
        // Predicated region
        $region117: #{mnist_decoder_forward.1} parent=111 // pred_check
          %p726 = pneg %p163
        $region118: #{mnist_decoder_forward.1} parent=111 // pred_check_branch
          %728 = sbr.rel (%p726) target = $region120
        $region119: #{mnist_decoder_forward.1} parent=111 // pred_region
          %730 = dma.done [#allocation8], 192
        $region120: #{mnist_decoder_forward.1} parent=111 // pred_fallthru
          _
        // Predicated region
        $region121: #{mnist_decoder_forward.1} parent=111 // pred_check
          %p731 = pneg %p226
        $region122: #{mnist_decoder_forward.1} parent=111 // pred_check_branch
          %733 = sbr.rel (%p731) target = $region124
        $region123: #{mnist_decoder_forward.1} parent=111 // pred_region
          %735 = dma.done [#allocation8], 16
        $region124: #{mnist_decoder_forward.1} parent=111 // pred_fallthru
          _
        // Predicated region
        $region125: #{mnist_decoder_forward.1} parent=111 // pred_check
          %p736 = pneg %p268
        $region126: #{mnist_decoder_forward.1} parent=111 // pred_check_branch
          %738 = sbr.rel (%p736) target = $region128
        $region127: #{mnist_decoder_forward.1} parent=111 // pred_region
          %740 = dma.done [#allocation11], 16
        $region128: #{mnist_decoder_forward.1} parent=111 // pred_fallthru
          _
        // Predicated region
        $region129: #{mnist_decoder_forward.1} parent=111 // pred_check
          %p741 = pneg %p331
        $region130: #{mnist_decoder_forward.1} parent=111 // pred_check_branch
          %743 = sbr.rel (%p741) target = $region132
        $region131: #{mnist_decoder_forward.1} parent=111 // pred_region
          %745 = dma.done [#allocation11], 3072
        $region132: #{mnist_decoder_forward.1} parent=111 // pred_fallthru
          _
        // Predicated region
        $region133: #{mnist_decoder_forward.1} parent=111 // pred_check
          %p746 = pneg %p415
        $region134: #{mnist_decoder_forward.1} parent=111 // pred_check_branch
          %748 = sbr.rel (%p746) target = $region136
        $region135: #{mnist_decoder_forward.1} parent=111 // pred_region
          %750 = dma.done [#allocation14], 16
        $region136: #{mnist_decoder_forward.1} parent=111 // pred_fallthru
          _
        // Predicated region
        $region137: #{mnist_decoder_forward.1} parent=111 // pred_check
          %p751 = pneg %p478
        $region138: #{mnist_decoder_forward.1} parent=111 // pred_check_branch
          %753 = sbr.rel (%p751) target = $region140
        $region139: #{mnist_decoder_forward.1} parent=111 // pred_region
          %755 = dma.done [#allocation14], 3072
        $region140: #{mnist_decoder_forward.1} parent=111 // pred_fallthru
          _
        // Predicated region
        $region141: #{mnist_decoder_forward.1} parent=111 // pred_check
          %p756 = pneg %p499
        $region142: #{mnist_decoder_forward.1} parent=111 // pred_check_branch
          %758 = sbr.rel (%p756) target = $region144
        $region143: #{mnist_decoder_forward.1} parent=111 // pred_region
          %760 = dma.done [#allocation17], 5376
        $region144: #{mnist_decoder_forward.1} parent=111 // pred_fallthru
          _
        %p761 = pneg %p58
        %p762 = pneg %p55
        %p763 = pneg %p79
        %p764 = pneg %p76
        %p765 = pneg %p100
        %p766 = pneg %p97
        %p767 = pneg %p121
        %p768 = pneg %p118
        %p769 = pneg %p142
        %p770 = pneg %p139
        %p771 = pneg %p163
        %p772 = pneg %p160
        %p773 = pneg %p184
        %p774 = pneg %p181
        %p775 = pneg %p205
        %p776 = pneg %p202
        %p777 = pneg %p226
        %p778 = pneg %p223
        %p779 = pneg %p247
        %p780 = pneg %p244
        %p781 = pneg %p268
        %p782 = pneg %p265
        %p783 = pneg %p289
        %p784 = pneg %p286
        %p785 = pneg %p310
        %p786 = pneg %p307
        %p787 = pneg %p331
        %p788 = pneg %p328
        %p789 = pneg %p352
        %p790 = pneg %p349
        %p791 = pneg %p373
        %p792 = pneg %p370
        %p793 = pneg %p394
        %p794 = pneg %p391
        %p795 = pneg %p415
        %p796 = pneg %p412
        %p797 = pneg %p436
        %p798 = pneg %p433
        %p799 = pneg %p457
        %p800 = pneg %p454
        %p801 = pneg %p478
        %p802 = pneg %p475
        %p803 = pneg %p499
        %p804 = pneg %p496
        %p805 = pneg %p520
        %p806 = pneg %p517
        %p807 = pneg %p546
        %p808 = pneg %p543
        %s809 = sand.u32 %s533, 1
        %s810 = scalar_lea.sflag [#allocation6], %s809
        %s811 = sand.u32 %s533, 1
        %s812 = smul.addr %s811, 224
        %s813 = scalar_lea.vmem [#allocation18], %s812
        %s814 = smul.u32 28, %s42
        %p816 = scmp.eq.s32.totalorder %s42, 0
        // Predicated region
        $region145: #{mnist_decoder_forward.1} parent=111 // pred_check
          %p817 = pneg %p816
        $region146: #{mnist_decoder_forward.1} parent=111 // pred_check_branch
          %819 = sbr.rel (%p817) target = $region148
        $region147: #{mnist_decoder_forward.1} parent=111 // pred_region
          loop: start=0, step=1, limit=2
          $region149: #{mnist_decoder_forward.1} parent=147 // loop_pre_header
            _
          $region150: #{mnist_decoder_forward.1} parent=147 // loop_header
            %s821 = sphi 0, %s825
            %p822 = scmp.ge.s32.totalorder %s821, 2
            %v826 = vphi 0.0, %v1440
            %v827 = vphi 0.0, %v1441
          $region151: #{mnist_decoder_forward.1} parent=147 // loop_header_branch
            %824 = sbr.rel (%p822) target = $region155
          $region152: #{mnist_decoder_forward.1} parent=147 // loop_body
            %s828 = smul.u32 %s821, 8
            %s829 = scalar_lea.vmem %s0, %s828
            %v830 = vld [vmem:[%s829] sm:$0xff]
            %v831 = vld [vmem:[%s1] sm:$0xf]
            %v832 = vld [vmem:[%s1 + $0x4] sm:$0xf]
            %v833 = vpack.c.bf16 %v830, %v830
            %v834 = vld [vmem:[#allocation4] sm:$0x1]
            %v836 = vperm.slane %v834, 0
            %v840 = vunpack.c.l.b16 %v831
            %v841 = vunpack.c.l.b16 %v832
            %v842 = vpack.c.b16 %v841, %v840
            %vm844 = vcmask 130048
            %v846 = vsel %vm844, %v833, 0
            %848 = vmatpush.bf16.msra.mxu0 0
            %849 = vmatpush.bf16.msra.mxu0 0
            %850 = vmatpush.bf16.msra.mxu0 0
            %851 = vmatpush.bf16.msra.mxu0 0
            %852 = vmatpush.bf16.msra.mxu0 0
            %853 = vmatpush.bf16.msra.mxu0 0
            %854 = vmatpush.bf16.msra.mxu0 0
            %855 = vmatpush.bf16.msra.mxu0 %v842
            %856 = vmatmul.bf16.gmra.mxu0 %v846
            %v857 = vpop.f32.mrf.mxu0
            %v858 = vadd.f32 %v836, %v857
            %v859 = vpop.f32.mrf.mxu0
            %860 = vdwg.mxu0
            %v861 = vmax.f32 %v858, 0.0
            %v862 = vld [vmem:[%s3] sm:$0xff]
            %v863 = vld [vmem:[%s3 + $0x8] sm:$0xf]
            %v864 = vld [vmem:[%s3 + $0xc] sm:$0xff]
            %v865 = vld [vmem:[%s3 + $0x14] sm:$0xf]
            %v866 = vld [vmem:[%s3 + $0x18] sm:$0xff]
            %v867 = vld [vmem:[%s3 + $0x20] sm:$0xf]
            %v868 = vld [vmem:[%s3 + $0x24] sm:$0xff]
            %v869 = vld [vmem:[%s3 + $0x2c] sm:$0xf]
            %v870 = vld [vmem:[%s3 + $0x30] sm:$0xff]
            %v871 = vld [vmem:[%s3 + $0x38] sm:$0xf]
            %v872 = vld [vmem:[%s3 + $0x3c] sm:$0xff]
            %v873 = vld [vmem:[%s3 + $0x44] sm:$0xf]
            %v874 = vld [vmem:[%s3 + $0x48] sm:$0xff]
            %v875 = vld [vmem:[%s3 + $0x50] sm:$0xf]
            %v876 = vld [vmem:[%s3 + $0x54] sm:$0xff]
            %v877 = vld [vmem:[%s3 + $0x5c] sm:$0xf]
            %v878 = vld [vmem:[%s3 + $0x60] sm:$0xff]
            %v879 = vld [vmem:[%s3 + $0x68] sm:$0xf]
            %v880 = vld [vmem:[%s3 + $0x6c] sm:$0xff]
            %v881 = vld [vmem:[%s3 + $0x74] sm:$0xf]
            %v882 = vld [vmem:[%s3 + $0x78] sm:$0xff]
            %v883 = vld [vmem:[%s3 + $0x80] sm:$0xf]
            %v884 = vld [vmem:[%s3 + $0x84] sm:$0xff]
            %v885 = vld [vmem:[%s3 + $0x8c] sm:$0xf]
            %v886 = vld [vmem:[%s3 + $0x90] sm:$0xff]
            %v887 = vld [vmem:[%s3 + $0x98] sm:$0xf]
            %v888 = vld [vmem:[%s3 + $0x9c] sm:$0xff]
            %v889 = vld [vmem:[%s3 + $0xa4] sm:$0xf]
            %v890 = vld [vmem:[%s3 + $0xa8] sm:$0xff]
            %v891 = vld [vmem:[%s3 + $0xb0] sm:$0xf]
            %v892 = vld [vmem:[%s3 + $0xb4] sm:$0xff]
            %v893 = vld [vmem:[%s3 + $0xbc] sm:$0xf]
            %v894 = vpack.c.bf16 %v861, %v861
            %v895 = vld [vmem:[%s4] sm:$0x7]
            %v897 = vperm.slane %v895, 0
            %v898 = vperm.slane %v895, 1
            %v899 = vperm.slane %v895, 2
            %v935 = vunpack.c.l.b16 %v862
            %v936 = vunpack.c.h.b16 %v862
            %v937 = vunpack.c.l.b16 %v863
            %v938 = vunpack.c.l.b16 %v864
            %v939 = vunpack.c.h.b16 %v864
            %v940 = vunpack.c.l.b16 %v865
            %v941 = vunpack.c.l.b16 %v866
            %v942 = vunpack.c.h.b16 %v866
            %v943 = vunpack.c.l.b16 %v867
            %v944 = vunpack.c.l.b16 %v868
            %v945 = vunpack.c.h.b16 %v868
            %v946 = vunpack.c.l.b16 %v869
            %v947 = vunpack.c.l.b16 %v870
            %v948 = vunpack.c.h.b16 %v870
            %v949 = vunpack.c.l.b16 %v871
            %v950 = vunpack.c.l.b16 %v872
            %v951 = vunpack.c.h.b16 %v872
            %v952 = vunpack.c.l.b16 %v873
            %v953 = vunpack.c.l.b16 %v874
            %v954 = vunpack.c.h.b16 %v874
            %v955 = vunpack.c.l.b16 %v875
            %v956 = vunpack.c.l.b16 %v876
            %v957 = vunpack.c.h.b16 %v876
            %v958 = vunpack.c.l.b16 %v877
            %v959 = vunpack.c.l.b16 %v878
            %v960 = vunpack.c.h.b16 %v878
            %v961 = vunpack.c.l.b16 %v879
            %v962 = vunpack.c.l.b16 %v880
            %v963 = vunpack.c.h.b16 %v880
            %v964 = vunpack.c.l.b16 %v881
            %v965 = vunpack.c.l.b16 %v882
            %v966 = vunpack.c.h.b16 %v882
            %v967 = vunpack.c.l.b16 %v883
            %v968 = vunpack.c.l.b16 %v884
            %v969 = vunpack.c.h.b16 %v884
            %v970 = vunpack.c.l.b16 %v885
            %v971 = vunpack.c.l.b16 %v886
            %v972 = vunpack.c.h.b16 %v886
            %v973 = vunpack.c.l.b16 %v887
            %v974 = vunpack.c.l.b16 %v888
            %v975 = vunpack.c.h.b16 %v888
            %v976 = vunpack.c.l.b16 %v889
            %v977 = vunpack.c.l.b16 %v890
            %v978 = vunpack.c.h.b16 %v890
            %v979 = vunpack.c.l.b16 %v891
            %v980 = vunpack.c.l.b16 %v892
            %v981 = vunpack.c.h.b16 %v892
            %v982 = vunpack.c.l.b16 %v893
            %v983 = vpack.c.b16 %v938, %v935
            %v984 = vpack.c.b16 %v939, %v936
            %v985 = vpack.c.b16 %v940, %v937
            %v986 = vpack.c.b16 %v944, %v941
            %v987 = vpack.c.b16 %v945, %v942
            %v988 = vpack.c.b16 %v946, %v943
            %v989 = vpack.c.b16 %v950, %v947
            %v990 = vpack.c.b16 %v951, %v948
            %v991 = vpack.c.b16 %v952, %v949
            %v992 = vpack.c.b16 %v956, %v953
            %v993 = vpack.c.b16 %v957, %v954
            %v994 = vpack.c.b16 %v958, %v955
            %v995 = vpack.c.b16 %v962, %v959
            %v996 = vpack.c.b16 %v963, %v960
            %v997 = vpack.c.b16 %v964, %v961
            %v998 = vpack.c.b16 %v968, %v965
            %v999 = vpack.c.b16 %v969, %v966
            %v1000 = vpack.c.b16 %v970, %v967
            %v1001 = vpack.c.b16 %v974, %v971
            %v1002 = vpack.c.b16 %v975, %v972
            %v1003 = vpack.c.b16 %v976, %v973
            %v1004 = vpack.c.b16 %v980, %v977
            %v1005 = vpack.c.b16 %v981, %v978
            %v1006 = vpack.c.b16 %v982, %v979
            %1031 = vmatpush.bf16.msra.mxu0 %v1004
            %1032 = vmatpush.bf16.msra.mxu0 %v1001
            %1033 = vmatpush.bf16.msra.mxu0 %v998
            %1034 = vmatpush.bf16.msra.mxu0 %v995
            %1035 = vmatpush.bf16.msra.mxu0 %v992
            %1036 = vmatpush.bf16.msra.mxu0 %v989
            %1037 = vmatpush.bf16.msra.mxu0 %v986
            %1038 = vmatpush.bf16.msra.mxu0 %v983
            %1039 = vmatmul.bf16.gmra.mxu0 %v894
            %v1040 = vpop.f32.mrf.mxu0
            %v1041 = vadd.f32 %v897, %v1040
            %v1042 = vpop.f32.mrf.mxu0
            %1043 = vdwg.mxu0
            %1044 = vmatpush.bf16.msra.mxu0 %v1005
            %1045 = vmatpush.bf16.msra.mxu0 %v1002
            %1046 = vmatpush.bf16.msra.mxu0 %v999
            %1047 = vmatpush.bf16.msra.mxu0 %v996
            %1048 = vmatpush.bf16.msra.mxu0 %v993
            %1049 = vmatpush.bf16.msra.mxu0 %v990
            %1050 = vmatpush.bf16.msra.mxu0 %v987
            %1051 = vmatpush.bf16.msra.mxu0 %v984
            %1052 = vmatmul.bf16.gmra.mxu0 %v894
            %v1053 = vpop.f32.mrf.mxu0
            %v1054 = vadd.f32 %v898, %v1053
            %v1055 = vpop.f32.mrf.mxu0
            %1056 = vdwg.mxu0
            %1057 = vmatpush.bf16.msra.mxu0 %v1006
            %1058 = vmatpush.bf16.msra.mxu0 %v1003
            %1059 = vmatpush.bf16.msra.mxu0 %v1000
            %1060 = vmatpush.bf16.msra.mxu0 %v997
            %1061 = vmatpush.bf16.msra.mxu0 %v994
            %1062 = vmatpush.bf16.msra.mxu0 %v991
            %1063 = vmatpush.bf16.msra.mxu0 %v988
            %1064 = vmatpush.bf16.msra.mxu0 %v985
            %1065 = vmatmul.bf16.gmra.mxu0 %v894
            %v1066 = vpop.f32.mrf.mxu0
            %v1067 = vadd.f32 %v899, %v1066
            %v1068 = vpop.f32.mrf.mxu0
            %1069 = vdwg.mxu0
            %v1070 = vmax.f32 %v1041, 0.0
            %v1071 = vmax.f32 %v1054, 0.0
            %v1072 = vmax.f32 %v1067, 0.0
            %v1073 = vld [vmem:[#allocation7] sm:$0xf]
            %v1074 = vld [vmem:[#allocation7 + $0x4] sm:$0xf]
            %v1075 = vld [vmem:[#allocation7 + $0x8] sm:$0xf]
            %v1076 = vpack.c.bf16 %v1071, %v1070
            %v1077 = vpack.c.bf16 %v1072, %v1072
            %v1081 = vunpack.c.l.b16 %v1073
            %v1082 = vunpack.c.l.b16 %v1074
            %v1083 = vunpack.c.l.b16 %v1075
            %v1084 = vpack.c.b16 %v1082, %v1081
            %v1085 = vpack.c.b16 %v1083, %v1083
            %vm1086 = vcmask 195584
            %v1088 = vsel %vm1086, %v1084, 0
            %v1091 = vsel %vm1086, %v1085, 0
            %vm1093 = vcmask 1043456
            %v1095 = vsel %vm1093, %v1077, 0
            %1097 = vmatpush.bf16.msra.mxu0 0
            %1098 = vmatpush.bf16.msra.mxu0 0
            %1099 = vmatpush.bf16.msra.mxu0 0
            %1100 = vmatpush.bf16.msra.mxu0 0
            %1101 = vmatpush.bf16.msra.mxu0 0
            %1102 = vmatpush.bf16.msra.mxu0 0
            %1103 = vmatpush.bf16.msra.mxu0 %v1095
            %1104 = vmatpush.bf16.msra.mxu0 %v1076
            %1105 = vmatmul.bf16.gmra.mxu0 %v1088
            %v1106 = vpop.f32.mrf.mxu0
            %v1107 = vadd.f32 0.0, %v1106
            %v1108 = vpop.f32.mrf.mxu0
            %v1109 = vadd.f32 0.0, %v1108
            %1110 = vmatmul.bf16.gmra.mxu0 %v1091
            %v1111 = vpop.f32.mrf.mxu0
            %v1112 = vadd.f32 0.0, %v1111
            %v1113 = vpop.f32.mrf.mxu0
            %1114 = vdwg.mxu0
            %v1115 = vld [vmem:[%s6] sm:$0xff]
            %v1116 = vld [vmem:[%s6 + $0x8] sm:$0xf]
            %v1117 = vld [vmem:[%s6 + $0xc] sm:$0xff]
            %v1118 = vld [vmem:[%s6 + $0x14] sm:$0xf]
            %v1119 = vld [vmem:[%s6 + $0x18] sm:$0xff]
            %v1120 = vld [vmem:[%s6 + $0x20] sm:$0xf]
            %v1121 = vld [vmem:[%s6 + $0x24] sm:$0xff]
            %v1122 = vld [vmem:[%s6 + $0x2c] sm:$0xf]
            %v1123 = vld [vmem:[%s6 + $0x30] sm:$0xff]
            %v1124 = vld [vmem:[%s6 + $0x38] sm:$0xf]
            %v1125 = vld [vmem:[%s6 + $0x3c] sm:$0xff]
            %v1126 = vld [vmem:[%s6 + $0x44] sm:$0xf]
            %v1127 = vld [vmem:[%s6 + $0x48] sm:$0xff]
            %v1128 = vld [vmem:[%s6 + $0x50] sm:$0xf]
            %v1129 = vld [vmem:[%s6 + $0x54] sm:$0xff]
            %v1130 = vld [vmem:[%s6 + $0x5c] sm:$0xf]
            %v1131 = vld [vmem:[%s6 + $0x60] sm:$0xff]
            %v1132 = vld [vmem:[%s6 + $0x68] sm:$0xf]
            %v1133 = vld [vmem:[%s6 + $0x6c] sm:$0xff]
            %v1134 = vld [vmem:[%s6 + $0x74] sm:$0xf]
            %v1135 = vld [vmem:[%s6 + $0x78] sm:$0xff]
            %v1136 = vld [vmem:[%s6 + $0x80] sm:$0xf]
            %v1137 = vld [vmem:[%s6 + $0x84] sm:$0xff]
            %v1138 = vld [vmem:[%s6 + $0x8c] sm:$0xf]
            %v1139 = vld [vmem:[%s6 + $0x90] sm:$0xff]
            %v1140 = vld [vmem:[%s6 + $0x98] sm:$0xf]
            %v1141 = vld [vmem:[%s6 + $0x9c] sm:$0xff]
            %v1142 = vld [vmem:[%s6 + $0xa4] sm:$0xf]
            %v1143 = vld [vmem:[%s6 + $0xa8] sm:$0xff]
            %v1144 = vld [vmem:[%s6 + $0xb0] sm:$0xf]
            %v1145 = vld [vmem:[%s6 + $0xb4] sm:$0xff]
            %v1146 = vld [vmem:[%s6 + $0xbc] sm:$0xf]
            %v1147 = vld [vmem:[%s7] sm:$0xf]
            %v1148 = vld [vmem:[%s7 + $0x4] sm:$0xf]
            %v1149 = vld [vmem:[%s7 + $0x8] sm:$0xf]
            %v1150 = vld [vmem:[%s7 + $0xc] sm:$0xf]
            %v1151 = vld [vmem:[%s7 + $0x10] sm:$0xf]
            %v1152 = vld [vmem:[%s7 + $0x14] sm:$0xf]
            %v1153 = vld [vmem:[%s7 + $0x18] sm:$0xf]
            %v1154 = vld [vmem:[#allocation9] sm:$0x1]
            %v1155 = vpack.c.bf16 %v1109, %v1107
            %v1156 = vpack.c.bf16 %v1112, %v1112
            %v1189 = vunpack.c.l.b16 %v1115
            %v1190 = vunpack.c.h.b16 %v1115
            %v1191 = vunpack.c.l.b16 %v1116
            %v1192 = vunpack.c.l.b16 %v1117
            %v1193 = vunpack.c.h.b16 %v1117
            %v1194 = vunpack.c.l.b16 %v1118
            %v1195 = vunpack.c.l.b16 %v1119
            %v1196 = vunpack.c.h.b16 %v1119
            %v1197 = vunpack.c.l.b16 %v1120
            %v1198 = vunpack.c.l.b16 %v1121
            %v1199 = vunpack.c.h.b16 %v1121
            %v1200 = vunpack.c.l.b16 %v1122
            %v1201 = vunpack.c.l.b16 %v1123
            %v1202 = vunpack.c.h.b16 %v1123
            %v1203 = vunpack.c.l.b16 %v1124
            %v1204 = vunpack.c.l.b16 %v1125
            %v1205 = vunpack.c.h.b16 %v1125
            %v1206 = vunpack.c.l.b16 %v1126
            %v1207 = vunpack.c.l.b16 %v1127
            %v1208 = vunpack.c.h.b16 %v1127
            %v1209 = vunpack.c.l.b16 %v1128
            %v1210 = vunpack.c.l.b16 %v1129
            %v1211 = vunpack.c.h.b16 %v1129
            %v1212 = vunpack.c.l.b16 %v1130
            %v1213 = vunpack.c.l.b16 %v1131
            %v1214 = vunpack.c.h.b16 %v1131
            %v1215 = vunpack.c.l.b16 %v1132
            %v1216 = vunpack.c.l.b16 %v1133
            %v1217 = vunpack.c.h.b16 %v1133
            %v1218 = vunpack.c.l.b16 %v1134
            %v1219 = vunpack.c.l.b16 %v1135
            %v1220 = vunpack.c.h.b16 %v1135
            %v1221 = vunpack.c.l.b16 %v1136
            %v1222 = vunpack.c.l.b16 %v1137
            %v1223 = vunpack.c.h.b16 %v1137
            %v1224 = vunpack.c.l.b16 %v1138
            %v1225 = vunpack.c.l.b16 %v1139
            %v1226 = vunpack.c.h.b16 %v1139
            %v1227 = vunpack.c.l.b16 %v1140
            %v1228 = vunpack.c.l.b16 %v1141
            %v1229 = vunpack.c.h.b16 %v1141
            %v1230 = vunpack.c.l.b16 %v1142
            %v1231 = vunpack.c.l.b16 %v1143
            %v1232 = vunpack.c.h.b16 %v1143
            %v1233 = vunpack.c.l.b16 %v1144
            %v1234 = vunpack.c.l.b16 %v1145
            %v1235 = vunpack.c.h.b16 %v1145
            %v1236 = vunpack.c.l.b16 %v1146
            %v1237 = vpack.c.b16 %v1192, %v1189
            %v1238 = vpack.c.b16 %v1193, %v1190
            %v1239 = vpack.c.b16 %v1194, %v1191
            %v1240 = vpack.c.b16 %v1198, %v1195
            %v1241 = vpack.c.b16 %v1199, %v1196
            %v1242 = vpack.c.b16 %v1200, %v1197
            %v1243 = vpack.c.b16 %v1204, %v1201
            %v1244 = vpack.c.b16 %v1205, %v1202
            %v1245 = vpack.c.b16 %v1206, %v1203
            %v1246 = vpack.c.b16 %v1210, %v1207
            %v1247 = vpack.c.b16 %v1211, %v1208
            %v1248 = vpack.c.b16 %v1212, %v1209
            %v1249 = vpack.c.b16 %v1216, %v1213
            %v1250 = vpack.c.b16 %v1217, %v1214
            %v1251 = vpack.c.b16 %v1218, %v1215
            %v1252 = vpack.c.b16 %v1222, %v1219
            %v1253 = vpack.c.b16 %v1223, %v1220
            %v1254 = vpack.c.b16 %v1224, %v1221
            %v1255 = vpack.c.b16 %v1228, %v1225
            %v1256 = vpack.c.b16 %v1229, %v1226
            %v1257 = vpack.c.b16 %v1230, %v1227
            %v1258 = vpack.c.b16 %v1234, %v1231
            %v1259 = vpack.c.b16 %v1235, %v1232
            %v1260 = vpack.c.b16 %v1236, %v1233
            %1285 = vmatpush.bf16.msra.mxu0 %v1258
            %1286 = vmatpush.bf16.msra.mxu0 %v1255
            %1287 = vmatpush.bf16.msra.mxu0 %v1252
            %1288 = vmatpush.bf16.msra.mxu0 %v1249
            %1289 = vmatpush.bf16.msra.mxu0 %v1246
            %1290 = vmatpush.bf16.msra.mxu0 %v1243
            %1291 = vmatpush.bf16.msra.mxu0 %v1240
            %1292 = vmatpush.bf16.msra.mxu0 %v1237
            %1293 = vmatmul.bf16.gmra.mxu0 %v1155
            %v1294 = vpop.f32.mrf.mxu0
            %v1295 = vadd.f32 0.0, %v1294
            %v1296 = vpop.f32.mrf.mxu0
            %v1297 = vadd.f32 0.0, %v1296
            %1298 = vmatmul.bf16.gmra.mxu0 %v1156
            %v1299 = vpop.f32.mrf.mxu0
            %v1300 = vadd.f32 0.0, %v1299
            %v1301 = vpop.f32.mrf.mxu0
            %1302 = vdwg.mxu0
            %1303 = vmatpush.bf16.msra.mxu0 %v1259
            %1304 = vmatpush.bf16.msra.mxu0 %v1256
            %1305 = vmatpush.bf16.msra.mxu0 %v1253
            %1306 = vmatpush.bf16.msra.mxu0 %v1250
            %1307 = vmatpush.bf16.msra.mxu0 %v1247
            %1308 = vmatpush.bf16.msra.mxu0 %v1244
            %1309 = vmatpush.bf16.msra.mxu0 %v1241
            %1310 = vmatpush.bf16.msra.mxu0 %v1238
            %1311 = vmatmul.bf16.gmra.mxu0 %v1155
            %v1312 = vpop.f32.mrf.mxu0
            %v1313 = vadd.f32 0.0, %v1312
            %v1314 = vpop.f32.mrf.mxu0
            %v1315 = vadd.f32 0.0, %v1314
            %1316 = vmatmul.bf16.gmra.mxu0 %v1156
            %v1317 = vpop.f32.mrf.mxu0
            %v1318 = vadd.f32 0.0, %v1317
            %v1319 = vpop.f32.mrf.mxu0
            %1320 = vdwg.mxu0
            %1321 = vmatpush.bf16.msra.mxu0 %v1260
            %1322 = vmatpush.bf16.msra.mxu0 %v1257
            %1323 = vmatpush.bf16.msra.mxu0 %v1254
            %1324 = vmatpush.bf16.msra.mxu0 %v1251
            %1325 = vmatpush.bf16.msra.mxu0 %v1248
            %1326 = vmatpush.bf16.msra.mxu0 %v1245
            %1327 = vmatpush.bf16.msra.mxu0 %v1242
            %1328 = vmatpush.bf16.msra.mxu0 %v1239
            %1329 = vmatmul.bf16.gmra.mxu0 %v1155
            %v1330 = vpop.f32.mrf.mxu0
            %v1331 = vadd.f32 0.0, %v1330
            %v1332 = vpop.f32.mrf.mxu0
            %v1333 = vadd.f32 0.0, %v1332
            %1334 = vmatmul.bf16.gmra.mxu0 %v1156
            %v1335 = vpop.f32.mrf.mxu0
            %v1336 = vadd.f32 0.0, %v1335
            %v1337 = vpop.f32.mrf.mxu0
            %1338 = vdwg.mxu0
            %v1339 = vpack.c.bf16 %v1297, %v1295
            %v1340 = vpack.c.bf16 %v1313, %v1300
            %v1341 = vpack.c.bf16 %v1318, %v1315
            %v1342 = vpack.c.bf16 %v1333, %v1331
            %v1343 = vpack.c.bf16 %v1336, %v1336
            %v1345 = vperm.slane %v1154, 0
            %v1354 = vunpack.c.l.b16 %v1147
            %v1355 = vunpack.c.l.b16 %v1148
            %v1356 = vunpack.c.l.b16 %v1149
            %v1357 = vunpack.c.l.b16 %v1150
            %v1358 = vunpack.c.l.b16 %v1151
            %v1359 = vunpack.c.l.b16 %v1152
            %v1360 = vunpack.c.l.b16 %v1153
            %v1361 = vpack.c.b16 %v1355, %v1354
            %v1362 = vpack.c.b16 %v1357, %v1356
            %v1363 = vpack.c.b16 %v1359, %v1358
            %v1364 = vpack.c.b16 %v1360, %v1360
            %vm1365 = vcmask 588800
            %v1367 = vsel %vm1365, %v1361, 0
            %v1370 = vsel %vm1365, %v1362, 0
            %v1373 = vsel %vm1365, %v1363, 0
            %v1376 = vsel %vm1365, %v1364, 0
            %v1379 = vsel %vm1093, %v1343, 0
            %1381 = vmatpush.bf16.msra.mxu0 0
            %1382 = vmatpush.bf16.msra.mxu0 0
            %1383 = vmatpush.bf16.msra.mxu0 0
            %1384 = vmatpush.bf16.msra.mxu0 %v1379
            %1385 = vmatpush.bf16.msra.mxu0 %v1342
            %1386 = vmatpush.bf16.msra.mxu0 %v1341
            %1387 = vmatpush.bf16.msra.mxu0 %v1340
            %1388 = vmatpush.bf16.msra.mxu0 %v1339
            %1389 = vmatmul.bf16.gmra.mxu0 %v1367
            %v1390 = vpop.f32.mrf.mxu0
            %v1391 = vadd.f32 %v1345, %v1390
            %v1392 = vpop.f32.mrf.mxu0
            %v1393 = vadd.f32 %v1345, %v1392
            %1394 = vmatmul.bf16.gmra.mxu0 %v1370
            %v1395 = vpop.f32.mrf.mxu0
            %v1396 = vadd.f32 %v1345, %v1395
            %v1397 = vpop.f32.mrf.mxu0
            %v1398 = vadd.f32 %v1345, %v1397
            %1399 = vmatmul.bf16.gmra.mxu0 %v1373
            %v1400 = vpop.f32.mrf.mxu0
            %v1401 = vadd.f32 %v1345, %v1400
            %v1402 = vpop.f32.mrf.mxu0
            %v1403 = vadd.f32 %v1345, %v1402
            %1404 = vmatmul.bf16.gmra.mxu0 %v1376
            %v1405 = vpop.f32.mrf.mxu0
            %v1406 = vadd.f32 %v1345, %v1405
            %v1407 = vpop.f32.mrf.mxu0
            %1408 = vdwg.mxu0
            %v1409 = vadd.f32 %v1391, %v1393
            %v1410 = vadd.f32 %v1409, %v1396
            %v1411 = vadd.f32 %v1410, %v1398
            %v1412 = vadd.f32 %v1411, %v1401
            %v1413 = vadd.f32 %v1412, %v1403
            %v1414 = vadd.f32 %v1413, %v1406
            %v1415 = vrot.slane %v1414, 4
            %v1416 = vadd.f32 %v1414, %v1415
            %v1417 = vrot.slane %v1416, 2
            %v1418 = vadd.f32 %v1416, %v1417
            %v1419 = vrot.slane %v1418, 1
            %v1420 = vadd.f32 %v1418, %v1419
            %v1421 = vmul.f32 %v1391, %v1391
            %v1422 = vmul.f32 %v1393, %v1393
            %v1423 = vmul.f32 %v1396, %v1396
            %v1424 = vmul.f32 %v1398, %v1398
            %v1425 = vmul.f32 %v1401, %v1401
            %v1426 = vmul.f32 %v1403, %v1403
            %v1427 = vmul.f32 %v1406, %v1406
            %v1428 = vadd.f32 %v1421, %v1422
            %v1429 = vadd.f32 %v1428, %v1423
            %v1430 = vadd.f32 %v1429, %v1424
            %v1431 = vadd.f32 %v1430, %v1425
            %v1432 = vadd.f32 %v1431, %v1426
            %v1433 = vadd.f32 %v1432, %v1427
            %v1434 = vrot.slane %v1433, 4
            %v1435 = vadd.f32 %v1433, %v1434
            %v1436 = vrot.slane %v1435, 2
            %v1437 = vadd.f32 %v1435, %v1436
            %v1438 = vrot.slane %v1437, 1
            %v1439 = vadd.f32 %v1437, %v1438
            %v1440 = vadd.f32 %v826, %v1420
            %v1441 = vadd.f32 %v827, %v1439
          $region153: #{mnist_decoder_forward.1} parent=147 // loop_footer
            %s825 = sadd.s32 1, %s821
          $region154: #{mnist_decoder_forward.1} parent=147 // loop_footer_branch
            %820 = sbr.rel target = $region150
          $region155: #{mnist_decoder_forward.1} parent=147 // loop_exit
            _
          %v1442 = vld [vmem:[%s11] sm:$0xff]
          %v1443 = vld [vmem:[%s11 + $0x8] sm:$0xff]
          %v1444 = vld [vmem:[%s11 + $0x10] sm:$0xff]
          %v1445 = vld [vmem:[%s11 + $0x18] sm:$0xff]
          %v1446 = vld [vmem:[%s11 + $0x20] sm:$0xff]
          %v1447 = vld [vmem:[%s11 + $0x28] sm:$0xff]
          %v1448 = vld [vmem:[%s11 + $0x30] sm:$0xff]
          %v1449 = vld [vmem:[%s11 + $0x38] sm:$0xff]
          %v1450 = vld [vmem:[%s11 + $0x40] sm:$0xff]
          %v1451 = vld [vmem:[%s11 + $0x48] sm:$0xff]
          %v1452 = vld [vmem:[%s11 + $0x50] sm:$0xff]
          %v1453 = vld [vmem:[%s11 + $0x58] sm:$0xff]
          %v1454 = vld [vmem:[%s11 + $0x60] sm:$0xff]
          %v1455 = vld [vmem:[%s11 + $0x68] sm:$0xff]
          %v1456 = vld [vmem:[%s11 + $0x70] sm:$0xff]
          %v1457 = vld [vmem:[%s11 + $0x78] sm:$0xff]
          %v1458 = vld [vmem:[%s12] sm:$0xff]
          %v1459 = vld [vmem:[%s12 + $0x8] sm:$0xff]
          %v1460 = vld [vmem:[%s9] sm:$0x1]
          %v1461 = vld [vmem:[#allocation10] sm:$0x1]
          %vm1462 = vcmask 1040384
          %v1463 = vsel %vm1462, %v826, %v827
          %1464 = vmatpush.msra.mxu0 %v1457
          %1465 = vmatpush.msra.mxu0 %v1456
          %1466 = vmatpush.msra.mxu0 %v1455
          %1467 = vmatpush.msra.mxu0 %v1454
          %1468 = vmatpush.msra.mxu0 %v1453
          %1469 = vmatpush.msra.mxu0 %v1452
          %1470 = vmatpush.msra.mxu0 %v1451
          %1471 = vmatpush.msra.mxu0 %v1450
          %1472 = vmatpush.msra.mxu0 %v1449
          %1473 = vmatpush.msra.mxu0 %v1448
          %1474 = vmatpush.msra.mxu0 %v1447
          %1475 = vmatpush.msra.mxu0 %v1446
          %1476 = vmatpush.msra.mxu0 %v1445
          %1477 = vmatpush.msra.mxu0 %v1444
          %1478 = vmatpush.msra.mxu0 %v1443
          %1479 = vmatpush.msra.mxu0 %v1442
          %1480 = vmatmul.f32.gmra.mxu0 %v1463
          %v1481 = vpop.f32.mrf.mxu0
          %v1482 = vadd.f32 0.0, %v1481
          %1483 = vdwg.mxu0
          %v1484 = vmul.f32 %v1482, 0.0012755102
          %v1485 = vmul.f32 %v1484, %v1484
          %v1487 = vrot.slane %v1485, 7
          %v1489 = vsub.f32 %v1484, %v1487
          %v1490 = vadd.f32 %v1489, 1e-05
          %v1491 = vrsqrt.pop %v1490
          %v1492 = vmul.f32 %v1491, %v1490
          %v1493 = vmul.f32 %v1492, %v1491
          %v1494 = vmul.f32 0.5, %v1493
          %v1495 = vsub.f32 1.5, %v1494
          %v1496 = vmul.f32 %v1491, %v1495
          %vm1497 = vweird.f32 %v1490
          %vm1498 = vweird.f32 %v1491
          %vm1499 = vmor %vm1497, %vm1498
          %v1500 = vsel %vm1499, %v1491, %v1496
          %1502 = vst [vmem:[#allocation1] sm:$0xff] %v1500
          %s1503 = scalar_lea.vmem [#allocation1], 1
          %v1504 = vld [vmem:[%s1503] ss:$9 sm:$0xff]
          %v1506 = vmul.f32 %v1460, %v1504
          %v1507 = vmul.f32 %v1484, %v1506
          %v1508 = vsub.f32 %v1461, %v1507
          %v1510 = vperm.slane %v1508, 0
          %v1512 = vsel %vm1462, %v1506, %v1510
          %vm1513 = vcmask 130048
          %v1515 = vsel %vm1513, %v1512, 0
          %1517 = vmatpush.msra.mxu0 0.0
          %1518 = vmatpush.msra.mxu0 0.0
          %1519 = vmatpush.msra.mxu0 0.0
          %1520 = vmatpush.msra.mxu0 0.0
          %1521 = vmatpush.msra.mxu0 0.0
          %1522 = vmatpush.msra.mxu0 0.0
          %1523 = vmatpush.msra.mxu0 0.0
          %1524 = vmatpush.msra.mxu0 0.0
          %1525 = vmatpush.msra.mxu0 0.0
          %1526 = vmatpush.msra.mxu0 0.0
          %1527 = vmatpush.msra.mxu0 0.0
          %1528 = vmatpush.msra.mxu0 0.0
          %1529 = vmatpush.msra.mxu0 0.0
          %1530 = vmatpush.msra.mxu0 0.0
          %1531 = vmatpush.msra.mxu0 %v1459
          %1532 = vmatpush.msra.mxu0 %v1458
          %1533 = vmatmul.f32.gmra.mxu0 %v1515
          %v1534 = vpop.f32.mrf.mxu0
          %v1535 = vadd.f32 0.0, %v1534
          %1536 = vdwg.mxu0
          %1537 = vst [vmem:[#allocation2] sm:$0x3] %v1535
          loop: start=0, step=1, limit=2
          $region156: #{mnist_decoder_forward.1} parent=147 // loop_pre_header
            _
          $region157: #{mnist_decoder_forward.1} parent=147 // loop_header
            %s1539 = sphi 0, %s1543
            %p1540 = scmp.ge.s32.totalorder %s1539, 2
            %v1544 = vphi 0.0, %v2654
            %v1545 = vphi 0.0, %v2655
          $region158: #{mnist_decoder_forward.1} parent=147 // loop_header_branch
            %1542 = sbr.rel (%p1540) target = $region162
          $region159: #{mnist_decoder_forward.1} parent=147 // loop_body
            %s1546 = smul.u32 %s1539, 8
            %s1547 = scalar_lea.vmem %s0, %s1546
            %v1548 = vld [vmem:[%s1547] sm:$0xff]
            %v1549 = vld [vmem:[%s1] sm:$0xf]
            %v1550 = vld [vmem:[%s1 + $0x4] sm:$0xf]
            %v1551 = vpack.c.bf16 %v1548, %v1548
            %v1552 = vld [vmem:[#allocation4] sm:$0x1]
            %v1554 = vperm.slane %v1552, 0
            %v1558 = vunpack.c.l.b16 %v1549
            %v1559 = vunpack.c.l.b16 %v1550
            %v1560 = vpack.c.b16 %v1559, %v1558
            %v1563 = vsel %vm1513, %v1551, 0
            %1565 = vmatpush.bf16.msra.mxu0 0
            %1566 = vmatpush.bf16.msra.mxu0 0
            %1567 = vmatpush.bf16.msra.mxu0 0
            %1568 = vmatpush.bf16.msra.mxu0 0
            %1569 = vmatpush.bf16.msra.mxu0 0
            %1570 = vmatpush.bf16.msra.mxu0 0
            %1571 = vmatpush.bf16.msra.mxu0 0
            %1572 = vmatpush.bf16.msra.mxu0 %v1560
            %1573 = vmatmul.bf16.gmra.mxu0 %v1563
            %v1574 = vpop.f32.mrf.mxu0
            %v1575 = vadd.f32 %v1554, %v1574
            %v1576 = vpop.f32.mrf.mxu0
            %1577 = vdwg.mxu0
            %v1578 = vmax.f32 %v1575, 0.0
            %v1579 = vld [vmem:[%s3] sm:$0xff]
            %v1580 = vld [vmem:[%s3 + $0x8] sm:$0xf]
            %v1581 = vld [vmem:[%s3 + $0xc] sm:$0xff]
            %v1582 = vld [vmem:[%s3 + $0x14] sm:$0xf]
            %v1583 = vld [vmem:[%s3 + $0x18] sm:$0xff]
            %v1584 = vld [vmem:[%s3 + $0x20] sm:$0xf]
            %v1585 = vld [vmem:[%s3 + $0x24] sm:$0xff]
            %v1586 = vld [vmem:[%s3 + $0x2c] sm:$0xf]
            %v1587 = vld [vmem:[%s3 + $0x30] sm:$0xff]
            %v1588 = vld [vmem:[%s3 + $0x38] sm:$0xf]
            %v1589 = vld [vmem:[%s3 + $0x3c] sm:$0xff]
            %v1590 = vld [vmem:[%s3 + $0x44] sm:$0xf]
            %v1591 = vld [vmem:[%s3 + $0x48] sm:$0xff]
            %v1592 = vld [vmem:[%s3 + $0x50] sm:$0xf]
            %v1593 = vld [vmem:[%s3 + $0x54] sm:$0xff]
            %v1594 = vld [vmem:[%s3 + $0x5c] sm:$0xf]
            %v1595 = vld [vmem:[%s3 + $0x60] sm:$0xff]
            %v1596 = vld [vmem:[%s3 + $0x68] sm:$0xf]
            %v1597 = vld [vmem:[%s3 + $0x6c] sm:$0xff]
            %v1598 = vld [vmem:[%s3 + $0x74] sm:$0xf]
            %v1599 = vld [vmem:[%s3 + $0x78] sm:$0xff]
            %v1600 = vld [vmem:[%s3 + $0x80] sm:$0xf]
            %v1601 = vld [vmem:[%s3 + $0x84] sm:$0xff]
            %v1602 = vld [vmem:[%s3 + $0x8c] sm:$0xf]
            %v1603 = vld [vmem:[%s3 + $0x90] sm:$0xff]
            %v1604 = vld [vmem:[%s3 + $0x98] sm:$0xf]
            %v1605 = vld [vmem:[%s3 + $0x9c] sm:$0xff]
            %v1606 = vld [vmem:[%s3 + $0xa4] sm:$0xf]
            %v1607 = vld [vmem:[%s3 + $0xa8] sm:$0xff]
            %v1608 = vld [vmem:[%s3 + $0xb0] sm:$0xf]
            %v1609 = vld [vmem:[%s3 + $0xb4] sm:$0xff]
            %v1610 = vld [vmem:[%s3 + $0xbc] sm:$0xf]
            %v1611 = vpack.c.bf16 %v1578, %v1578
            %v1612 = vld [vmem:[%s4] sm:$0x7]
            %v1614 = vperm.slane %v1612, 0
            %v1615 = vperm.slane %v1612, 1
            %v1616 = vperm.slane %v1612, 2
            %v1652 = vunpack.c.l.b16 %v1579
            %v1653 = vunpack.c.h.b16 %v1579
            %v1654 = vunpack.c.l.b16 %v1580
            %v1655 = vunpack.c.l.b16 %v1581
            %v1656 = vunpack.c.h.b16 %v1581
            %v1657 = vunpack.c.l.b16 %v1582
            %v1658 = vunpack.c.l.b16 %v1583
            %v1659 = vunpack.c.h.b16 %v1583
            %v1660 = vunpack.c.l.b16 %v1584
            %v1661 = vunpack.c.l.b16 %v1585
            %v1662 = vunpack.c.h.b16 %v1585
            %v1663 = vunpack.c.l.b16 %v1586
            %v1664 = vunpack.c.l.b16 %v1587
            %v1665 = vunpack.c.h.b16 %v1587
            %v1666 = vunpack.c.l.b16 %v1588
            %v1667 = vunpack.c.l.b16 %v1589
            %v1668 = vunpack.c.h.b16 %v1589
            %v1669 = vunpack.c.l.b16 %v1590
            %v1670 = vunpack.c.l.b16 %v1591
            %v1671 = vunpack.c.h.b16 %v1591
            %v1672 = vunpack.c.l.b16 %v1592
            %v1673 = vunpack.c.l.b16 %v1593
            %v1674 = vunpack.c.h.b16 %v1593
            %v1675 = vunpack.c.l.b16 %v1594
            %v1676 = vunpack.c.l.b16 %v1595
            %v1677 = vunpack.c.h.b16 %v1595
            %v1678 = vunpack.c.l.b16 %v1596
            %v1679 = vunpack.c.l.b16 %v1597
            %v1680 = vunpack.c.h.b16 %v1597
            %v1681 = vunpack.c.l.b16 %v1598
            %v1682 = vunpack.c.l.b16 %v1599
            %v1683 = vunpack.c.h.b16 %v1599
            %v1684 = vunpack.c.l.b16 %v1600
            %v1685 = vunpack.c.l.b16 %v1601
            %v1686 = vunpack.c.h.b16 %v1601
            %v1687 = vunpack.c.l.b16 %v1602
            %v1688 = vunpack.c.l.b16 %v1603
            %v1689 = vunpack.c.h.b16 %v1603
            %v1690 = vunpack.c.l.b16 %v1604
            %v1691 = vunpack.c.l.b16 %v1605
            %v1692 = vunpack.c.h.b16 %v1605
            %v1693 = vunpack.c.l.b16 %v1606
            %v1694 = vunpack.c.l.b16 %v1607
            %v1695 = vunpack.c.h.b16 %v1607
            %v1696 = vunpack.c.l.b16 %v1608
            %v1697 = vunpack.c.l.b16 %v1609
            %v1698 = vunpack.c.h.b16 %v1609
            %v1699 = vunpack.c.l.b16 %v1610
            %v1700 = vpack.c.b16 %v1655, %v1652
            %v1701 = vpack.c.b16 %v1656, %v1653
            %v1702 = vpack.c.b16 %v1657, %v1654
            %v1703 = vpack.c.b16 %v1661, %v1658
            %v1704 = vpack.c.b16 %v1662, %v1659
            %v1705 = vpack.c.b16 %v1663, %v1660
            %v1706 = vpack.c.b16 %v1667, %v1664
            %v1707 = vpack.c.b16 %v1668, %v1665
            %v1708 = vpack.c.b16 %v1669, %v1666
            %v1709 = vpack.c.b16 %v1673, %v1670
            %v1710 = vpack.c.b16 %v1674, %v1671
            %v1711 = vpack.c.b16 %v1675, %v1672
            %v1712 = vpack.c.b16 %v1679, %v1676
            %v1713 = vpack.c.b16 %v1680, %v1677
            %v1714 = vpack.c.b16 %v1681, %v1678
            %v1715 = vpack.c.b16 %v1685, %v1682
            %v1716 = vpack.c.b16 %v1686, %v1683
            %v1717 = vpack.c.b16 %v1687, %v1684
            %v1718 = vpack.c.b16 %v1691, %v1688
            %v1719 = vpack.c.b16 %v1692, %v1689
            %v1720 = vpack.c.b16 %v1693, %v1690
            %v1721 = vpack.c.b16 %v1697, %v1694
            %v1722 = vpack.c.b16 %v1698, %v1695
            %v1723 = vpack.c.b16 %v1699, %v1696
            %1748 = vmatpush.bf16.msra.mxu0 %v1721
            %1749 = vmatpush.bf16.msra.mxu0 %v1718
            %1750 = vmatpush.bf16.msra.mxu0 %v1715
            %1751 = vmatpush.bf16.msra.mxu0 %v1712
            %1752 = vmatpush.bf16.msra.mxu0 %v1709
            %1753 = vmatpush.bf16.msra.mxu0 %v1706
            %1754 = vmatpush.bf16.msra.mxu0 %v1703
            %1755 = vmatpush.bf16.msra.mxu0 %v1700
            %1756 = vmatmul.bf16.gmra.mxu0 %v1611
            %v1757 = vpop.f32.mrf.mxu0
            %v1758 = vadd.f32 %v1614, %v1757
            %v1759 = vpop.f32.mrf.mxu0
            %1760 = vdwg.mxu0
            %1761 = vmatpush.bf16.msra.mxu0 %v1722
            %1762 = vmatpush.bf16.msra.mxu0 %v1719
            %1763 = vmatpush.bf16.msra.mxu0 %v1716
            %1764 = vmatpush.bf16.msra.mxu0 %v1713
            %1765 = vmatpush.bf16.msra.mxu0 %v1710
            %1766 = vmatpush.bf16.msra.mxu0 %v1707
            %1767 = vmatpush.bf16.msra.mxu0 %v1704
            %1768 = vmatpush.bf16.msra.mxu0 %v1701
            %1769 = vmatmul.bf16.gmra.mxu0 %v1611
            %v1770 = vpop.f32.mrf.mxu0
            %v1771 = vadd.f32 %v1615, %v1770
            %v1772 = vpop.f32.mrf.mxu0
            %1773 = vdwg.mxu0
            %1774 = vmatpush.bf16.msra.mxu0 %v1723
            %1775 = vmatpush.bf16.msra.mxu0 %v1720
            %1776 = vmatpush.bf16.msra.mxu0 %v1717
            %1777 = vmatpush.bf16.msra.mxu0 %v1714
            %1778 = vmatpush.bf16.msra.mxu0 %v1711
            %1779 = vmatpush.bf16.msra.mxu0 %v1708
            %1780 = vmatpush.bf16.msra.mxu0 %v1705
            %1781 = vmatpush.bf16.msra.mxu0 %v1702
            %1782 = vmatmul.bf16.gmra.mxu0 %v1611
            %v1783 = vpop.f32.mrf.mxu0
            %v1784 = vadd.f32 %v1616, %v1783
            %v1785 = vpop.f32.mrf.mxu0
            %1786 = vdwg.mxu0
            %v1787 = vmax.f32 %v1758, 0.0
            %v1788 = vmax.f32 %v1771, 0.0
            %v1789 = vmax.f32 %v1784, 0.0
            %v1790 = vld [vmem:[#allocation7] sm:$0xf]
            %v1791 = vld [vmem:[#allocation7 + $0x4] sm:$0xf]
            %v1792 = vld [vmem:[#allocation7 + $0x8] sm:$0xf]
            %v1793 = vpack.c.bf16 %v1788, %v1787
            %v1794 = vpack.c.bf16 %v1789, %v1789
            %v1798 = vunpack.c.l.b16 %v1790
            %v1799 = vunpack.c.l.b16 %v1791
            %v1800 = vunpack.c.l.b16 %v1792
            %v1801 = vpack.c.b16 %v1799, %v1798
            %v1802 = vpack.c.b16 %v1800, %v1800
            %vm1803 = vcmask 195584
            %v1805 = vsel %vm1803, %v1801, 0
            %v1808 = vsel %vm1803, %v1802, 0
            %vm1810 = vcmask 1043456
            %v1812 = vsel %vm1810, %v1794, 0
            %1814 = vmatpush.bf16.msra.mxu0 0
            %1815 = vmatpush.bf16.msra.mxu0 0
            %1816 = vmatpush.bf16.msra.mxu0 0
            %1817 = vmatpush.bf16.msra.mxu0 0
            %1818 = vmatpush.bf16.msra.mxu0 0
            %1819 = vmatpush.bf16.msra.mxu0 0
            %1820 = vmatpush.bf16.msra.mxu0 %v1812
            %1821 = vmatpush.bf16.msra.mxu0 %v1793
            %1822 = vmatmul.bf16.gmra.mxu0 %v1805
            %v1823 = vpop.f32.mrf.mxu0
            %v1824 = vadd.f32 0.0, %v1823
            %v1825 = vpop.f32.mrf.mxu0
            %v1826 = vadd.f32 0.0, %v1825
            %1827 = vmatmul.bf16.gmra.mxu0 %v1808
            %v1828 = vpop.f32.mrf.mxu0
            %v1829 = vadd.f32 0.0, %v1828
            %v1830 = vpop.f32.mrf.mxu0
            %1831 = vdwg.mxu0
            %v1832 = vld [vmem:[%s6] sm:$0xff]
            %v1833 = vld [vmem:[%s6 + $0x8] sm:$0xf]
            %v1834 = vld [vmem:[%s6 + $0xc] sm:$0xff]
            %v1835 = vld [vmem:[%s6 + $0x14] sm:$0xf]
            %v1836 = vld [vmem:[%s6 + $0x18] sm:$0xff]
            %v1837 = vld [vmem:[%s6 + $0x20] sm:$0xf]
            %v1838 = vld [vmem:[%s6 + $0x24] sm:$0xff]
            %v1839 = vld [vmem:[%s6 + $0x2c] sm:$0xf]
            %v1840 = vld [vmem:[%s6 + $0x30] sm:$0xff]
            %v1841 = vld [vmem:[%s6 + $0x38] sm:$0xf]
            %v1842 = vld [vmem:[%s6 + $0x3c] sm:$0xff]
            %v1843 = vld [vmem:[%s6 + $0x44] sm:$0xf]
            %v1844 = vld [vmem:[%s6 + $0x48] sm:$0xff]
            %v1845 = vld [vmem:[%s6 + $0x50] sm:$0xf]
            %v1846 = vld [vmem:[%s6 + $0x54] sm:$0xff]
            %v1847 = vld [vmem:[%s6 + $0x5c] sm:$0xf]
            %v1848 = vld [vmem:[%s6 + $0x60] sm:$0xff]
            %v1849 = vld [vmem:[%s6 + $0x68] sm:$0xf]
            %v1850 = vld [vmem:[%s6 + $0x6c] sm:$0xff]
            %v1851 = vld [vmem:[%s6 + $0x74] sm:$0xf]
            %v1852 = vld [vmem:[%s6 + $0x78] sm:$0xff]
            %v1853 = vld [vmem:[%s6 + $0x80] sm:$0xf]
            %v1854 = vld [vmem:[%s6 + $0x84] sm:$0xff]
            %v1855 = vld [vmem:[%s6 + $0x8c] sm:$0xf]
            %v1856 = vld [vmem:[%s6 + $0x90] sm:$0xff]
            %v1857 = vld [vmem:[%s6 + $0x98] sm:$0xf]
            %v1858 = vld [vmem:[%s6 + $0x9c] sm:$0xff]
            %v1859 = vld [vmem:[%s6 + $0xa4] sm:$0xf]
            %v1860 = vld [vmem:[%s6 + $0xa8] sm:$0xff]
            %v1861 = vld [vmem:[%s6 + $0xb0] sm:$0xf]
            %v1862 = vld [vmem:[%s6 + $0xb4] sm:$0xff]
            %v1863 = vld [vmem:[%s6 + $0xbc] sm:$0xf]
            %v1864 = vld [vmem:[%s7] sm:$0xf]
            %v1865 = vld [vmem:[%s7 + $0x4] sm:$0xf]
            %v1866 = vld [vmem:[%s7 + $0x8] sm:$0xf]
            %v1867 = vld [vmem:[%s7 + $0xc] sm:$0xf]
            %v1868 = vld [vmem:[%s7 + $0x10] sm:$0xf]
            %v1869 = vld [vmem:[%s7 + $0x14] sm:$0xf]
            %v1870 = vld [vmem:[%s7 + $0x18] sm:$0xf]
            %v1871 = vld [vmem:[#allocation9] sm:$0x1]
            %v1872 = vpack.c.bf16 %v1826, %v1824
            %v1873 = vpack.c.bf16 %v1829, %v1829
            %v1906 = vunpack.c.l.b16 %v1832
            %v1907 = vunpack.c.h.b16 %v1832
            %v1908 = vunpack.c.l.b16 %v1833
            %v1909 = vunpack.c.l.b16 %v1834
            %v1910 = vunpack.c.h.b16 %v1834
            %v1911 = vunpack.c.l.b16 %v1835
            %v1912 = vunpack.c.l.b16 %v1836
            %v1913 = vunpack.c.h.b16 %v1836
            %v1914 = vunpack.c.l.b16 %v1837
            %v1915 = vunpack.c.l.b16 %v1838
            %v1916 = vunpack.c.h.b16 %v1838
            %v1917 = vunpack.c.l.b16 %v1839
            %v1918 = vunpack.c.l.b16 %v1840
            %v1919 = vunpack.c.h.b16 %v1840
            %v1920 = vunpack.c.l.b16 %v1841
            %v1921 = vunpack.c.l.b16 %v1842
            %v1922 = vunpack.c.h.b16 %v1842
            %v1923 = vunpack.c.l.b16 %v1843
            %v1924 = vunpack.c.l.b16 %v1844
            %v1925 = vunpack.c.h.b16 %v1844
            %v1926 = vunpack.c.l.b16 %v1845
            %v1927 = vunpack.c.l.b16 %v1846
            %v1928 = vunpack.c.h.b16 %v1846
            %v1929 = vunpack.c.l.b16 %v1847
            %v1930 = vunpack.c.l.b16 %v1848
            %v1931 = vunpack.c.h.b16 %v1848
            %v1932 = vunpack.c.l.b16 %v1849
            %v1933 = vunpack.c.l.b16 %v1850
            %v1934 = vunpack.c.h.b16 %v1850
            %v1935 = vunpack.c.l.b16 %v1851
            %v1936 = vunpack.c.l.b16 %v1852
            %v1937 = vunpack.c.h.b16 %v1852
            %v1938 = vunpack.c.l.b16 %v1853
            %v1939 = vunpack.c.l.b16 %v1854
            %v1940 = vunpack.c.h.b16 %v1854
            %v1941 = vunpack.c.l.b16 %v1855
            %v1942 = vunpack.c.l.b16 %v1856
            %v1943 = vunpack.c.h.b16 %v1856
            %v1944 = vunpack.c.l.b16 %v1857
            %v1945 = vunpack.c.l.b16 %v1858
            %v1946 = vunpack.c.h.b16 %v1858
            %v1947 = vunpack.c.l.b16 %v1859
            %v1948 = vunpack.c.l.b16 %v1860
            %v1949 = vunpack.c.h.b16 %v1860
            %v1950 = vunpack.c.l.b16 %v1861
            %v1951 = vunpack.c.l.b16 %v1862
            %v1952 = vunpack.c.h.b16 %v1862
            %v1953 = vunpack.c.l.b16 %v1863
            %v1954 = vpack.c.b16 %v1909, %v1906
            %v1955 = vpack.c.b16 %v1910, %v1907
            %v1956 = vpack.c.b16 %v1911, %v1908
            %v1957 = vpack.c.b16 %v1915, %v1912
            %v1958 = vpack.c.b16 %v1916, %v1913
            %v1959 = vpack.c.b16 %v1917, %v1914
            %v1960 = vpack.c.b16 %v1921, %v1918
            %v1961 = vpack.c.b16 %v1922, %v1919
            %v1962 = vpack.c.b16 %v1923, %v1920
            %v1963 = vpack.c.b16 %v1927, %v1924
            %v1964 = vpack.c.b16 %v1928, %v1925
            %v1965 = vpack.c.b16 %v1929, %v1926
            %v1966 = vpack.c.b16 %v1933, %v1930
            %v1967 = vpack.c.b16 %v1934, %v1931
            %v1968 = vpack.c.b16 %v1935, %v1932
            %v1969 = vpack.c.b16 %v1939, %v1936
            %v1970 = vpack.c.b16 %v1940, %v1937
            %v1971 = vpack.c.b16 %v1941, %v1938
            %v1972 = vpack.c.b16 %v1945, %v1942
            %v1973 = vpack.c.b16 %v1946, %v1943
            %v1974 = vpack.c.b16 %v1947, %v1944
            %v1975 = vpack.c.b16 %v1951, %v1948
            %v1976 = vpack.c.b16 %v1952, %v1949
            %v1977 = vpack.c.b16 %v1953, %v1950
            %2002 = vmatpush.bf16.msra.mxu0 %v1975
            %2003 = vmatpush.bf16.msra.mxu0 %v1972
            %2004 = vmatpush.bf16.msra.mxu0 %v1969
            %2005 = vmatpush.bf16.msra.mxu0 %v1966
            %2006 = vmatpush.bf16.msra.mxu0 %v1963
            %2007 = vmatpush.bf16.msra.mxu0 %v1960
            %2008 = vmatpush.bf16.msra.mxu0 %v1957
            %2009 = vmatpush.bf16.msra.mxu0 %v1954
            %2010 = vmatmul.bf16.gmra.mxu0 %v1872
            %v2011 = vpop.f32.mrf.mxu0
            %v2012 = vadd.f32 0.0, %v2011
            %v2013 = vpop.f32.mrf.mxu0
            %v2014 = vadd.f32 0.0, %v2013
            %2015 = vmatmul.bf16.gmra.mxu0 %v1873
            %v2016 = vpop.f32.mrf.mxu0
            %v2017 = vadd.f32 0.0, %v2016
            %v2018 = vpop.f32.mrf.mxu0
            %2019 = vdwg.mxu0
            %2020 = vmatpush.bf16.msra.mxu0 %v1976
            %2021 = vmatpush.bf16.msra.mxu0 %v1973
            %2022 = vmatpush.bf16.msra.mxu0 %v1970
            %2023 = vmatpush.bf16.msra.mxu0 %v1967
            %2024 = vmatpush.bf16.msra.mxu0 %v1964
            %2025 = vmatpush.bf16.msra.mxu0 %v1961
            %2026 = vmatpush.bf16.msra.mxu0 %v1958
            %2027 = vmatpush.bf16.msra.mxu0 %v1955
            %2028 = vmatmul.bf16.gmra.mxu0 %v1872
            %v2029 = vpop.f32.mrf.mxu0
            %v2030 = vadd.f32 0.0, %v2029
            %v2031 = vpop.f32.mrf.mxu0
            %v2032 = vadd.f32 0.0, %v2031
            %2033 = vmatmul.bf16.gmra.mxu0 %v1873
            %v2034 = vpop.f32.mrf.mxu0
            %v2035 = vadd.f32 0.0, %v2034
            %v2036 = vpop.f32.mrf.mxu0
            %2037 = vdwg.mxu0
            %2038 = vmatpush.bf16.msra.mxu0 %v1977
            %2039 = vmatpush.bf16.msra.mxu0 %v1974
            %2040 = vmatpush.bf16.msra.mxu0 %v1971
            %2041 = vmatpush.bf16.msra.mxu0 %v1968
            %2042 = vmatpush.bf16.msra.mxu0 %v1965
            %2043 = vmatpush.bf16.msra.mxu0 %v1962
            %2044 = vmatpush.bf16.msra.mxu0 %v1959
            %2045 = vmatpush.bf16.msra.mxu0 %v1956
            %2046 = vmatmul.bf16.gmra.mxu0 %v1872
            %v2047 = vpop.f32.mrf.mxu0
            %v2048 = vadd.f32 0.0, %v2047
            %v2049 = vpop.f32.mrf.mxu0
            %v2050 = vadd.f32 0.0, %v2049
            %2051 = vmatmul.bf16.gmra.mxu0 %v1873
            %v2052 = vpop.f32.mrf.mxu0
            %v2053 = vadd.f32 0.0, %v2052
            %v2054 = vpop.f32.mrf.mxu0
            %2055 = vdwg.mxu0
            %v2056 = vpack.c.bf16 %v2014, %v2012
            %v2057 = vpack.c.bf16 %v2030, %v2017
            %v2058 = vpack.c.bf16 %v2035, %v2032
            %v2059 = vpack.c.bf16 %v2050, %v2048
            %v2060 = vpack.c.bf16 %v2053, %v2053
            %v2062 = vperm.slane %v1871, 0
            %v2071 = vunpack.c.l.b16 %v1864
            %v2072 = vunpack.c.l.b16 %v1865
            %v2073 = vunpack.c.l.b16 %v1866
            %v2074 = vunpack.c.l.b16 %v1867
            %v2075 = vunpack.c.l.b16 %v1868
            %v2076 = vunpack.c.l.b16 %v1869
            %v2077 = vunpack.c.l.b16 %v1870
            %v2078 = vpack.c.b16 %v2072, %v2071
            %v2079 = vpack.c.b16 %v2074, %v2073
            %v2080 = vpack.c.b16 %v2076, %v2075
            %v2081 = vpack.c.b16 %v2077, %v2077
            %vm2082 = vcmask 588800
            %v2084 = vsel %vm2082, %v2078, 0
            %v2087 = vsel %vm2082, %v2079, 0
            %v2090 = vsel %vm2082, %v2080, 0
            %v2093 = vsel %vm2082, %v2081, 0
            %v2096 = vsel %vm1810, %v2060, 0
            %2098 = vmatpush.bf16.msra.mxu0 0
            %2099 = vmatpush.bf16.msra.mxu0 0
            %2100 = vmatpush.bf16.msra.mxu0 0
            %2101 = vmatpush.bf16.msra.mxu0 %v2096
            %2102 = vmatpush.bf16.msra.mxu0 %v2059
            %2103 = vmatpush.bf16.msra.mxu0 %v2058
            %2104 = vmatpush.bf16.msra.mxu0 %v2057
            %2105 = vmatpush.bf16.msra.mxu0 %v2056
            %2106 = vmatmul.bf16.gmra.mxu0 %v2084
            %v2107 = vpop.f32.mrf.mxu0
            %v2108 = vadd.f32 %v2062, %v2107
            %v2109 = vpop.f32.mrf.mxu0
            %v2110 = vadd.f32 %v2062, %v2109
            %2111 = vmatmul.bf16.gmra.mxu0 %v2087
            %v2112 = vpop.f32.mrf.mxu0
            %v2113 = vadd.f32 %v2062, %v2112
            %v2114 = vpop.f32.mrf.mxu0
            %v2115 = vadd.f32 %v2062, %v2114
            %2116 = vmatmul.bf16.gmra.mxu0 %v2090
            %v2117 = vpop.f32.mrf.mxu0
            %v2118 = vadd.f32 %v2062, %v2117
            %v2119 = vpop.f32.mrf.mxu0
            %v2120 = vadd.f32 %v2062, %v2119
            %2121 = vmatmul.bf16.gmra.mxu0 %v2093
            %v2122 = vpop.f32.mrf.mxu0
            %v2123 = vadd.f32 %v2062, %v2122
            %v2124 = vpop.f32.mrf.mxu0
            %2125 = vdwg.mxu0
            %v2126 = vperm.slane %v1535, 0
            %v2127 = vmul.f32 %v2108, %v2126
            %v2128 = vmul.f32 %v2110, %v2126
            %v2129 = vmul.f32 %v2113, %v2126
            %v2130 = vmul.f32 %v2115, %v2126
            %v2131 = vmul.f32 %v2118, %v2126
            %v2132 = vmul.f32 %v2120, %v2126
            %v2133 = vmul.f32 %v2123, %v2126
            %v2134 = vperm.slane %v1535, 1
            %v2135 = vadd.f32 %v2127, %v2134
            %v2136 = vadd.f32 %v2128, %v2134
            %v2137 = vadd.f32 %v2129, %v2134
            %v2138 = vadd.f32 %v2130, %v2134
            %v2139 = vadd.f32 %v2131, %v2134
            %v2140 = vadd.f32 %v2132, %v2134
            %v2141 = vadd.f32 %v2133, %v2134
            %v2142 = vmax.f32 %v2135, 0.0
            %v2143 = vmax.f32 %v2136, 0.0
            %v2144 = vmax.f32 %v2137, 0.0
            %v2145 = vmax.f32 %v2138, 0.0
            %v2146 = vmax.f32 %v2139, 0.0
            %v2147 = vmax.f32 %v2140, 0.0
            %v2148 = vmax.f32 %v2141, 0.0
            %v2149 = vld [vmem:[#allocation12] sm:$0xff]
            %v2150 = vld [vmem:[#allocation12 + $0x8] sm:$0xf]
            %v2151 = vld [vmem:[#allocation12 + $0xc] sm:$0xff]
            %v2152 = vld [vmem:[#allocation12 + $0x14] sm:$0xf]
            %v2153 = vld [vmem:[#allocation12 + $0x18] sm:$0xff]
            %v2154 = vld [vmem:[#allocation12 + $0x20] sm:$0xf]
            %v2155 = vld [vmem:[#allocation12 + $0x24] sm:$0xff]
            %v2156 = vld [vmem:[#allocation12 + $0x2c] sm:$0xf]
            %v2157 = vld [vmem:[#allocation12 + $0x30] sm:$0xff]
            %v2158 = vld [vmem:[#allocation12 + $0x38] sm:$0xf]
            %v2159 = vld [vmem:[#allocation12 + $0x3c] sm:$0xff]
            %v2160 = vld [vmem:[#allocation12 + $0x44] sm:$0xf]
            %v2161 = vld [vmem:[#allocation12 + $0x48] sm:$0xff]
            %v2162 = vld [vmem:[#allocation12 + $0x50] sm:$0xf]
            %v2163 = vld [vmem:[#allocation12 + $0x54] sm:$0xff]
            %v2164 = vld [vmem:[#allocation12 + $0x5c] sm:$0xf]
            %v2165 = vld [vmem:[#allocation12 + $0x60] sm:$0xff]
            %v2166 = vld [vmem:[#allocation12 + $0x68] sm:$0xf]
            %v2167 = vld [vmem:[#allocation12 + $0x6c] sm:$0xff]
            %v2168 = vld [vmem:[#allocation12 + $0x74] sm:$0xf]
            %v2169 = vld [vmem:[#allocation12 + $0x78] sm:$0xff]
            %v2170 = vld [vmem:[#allocation12 + $0x80] sm:$0xf]
            %v2171 = vld [vmem:[#allocation12 + $0x84] sm:$0xff]
            %v2172 = vld [vmem:[#allocation12 + $0x8c] sm:$0xf]
            %v2173 = vld [vmem:[#allocation12 + $0x90] sm:$0xff]
            %v2174 = vld [vmem:[#allocation12 + $0x98] sm:$0xf]
            %v2175 = vld [vmem:[#allocation12 + $0x9c] sm:$0xff]
            %v2176 = vld [vmem:[#allocation12 + $0xa4] sm:$0xf]
            %v2177 = vld [vmem:[#allocation12 + $0xa8] sm:$0xff]
            %v2178 = vld [vmem:[#allocation12 + $0xb0] sm:$0xf]
            %v2179 = vld [vmem:[#allocation12 + $0xb4] sm:$0xff]
            %v2180 = vld [vmem:[#allocation12 + $0xbc] sm:$0xf]
            %v2181 = vld [vmem:[%s14] sm:$0xff]
            %v2182 = vld [vmem:[%s14 + $0x8] sm:$0xff]
            %v2183 = vld [vmem:[%s14 + $0x10] sm:$0xff]
            %v2184 = vld [vmem:[%s14 + $0x18] sm:$0xff]
            %v2185 = vld [vmem:[%s14 + $0x20] sm:$0xff]
            %v2186 = vld [vmem:[%s14 + $0x28] sm:$0xff]
            %v2187 = vld [vmem:[%s14 + $0x30] sm:$0xff]
            %v2188 = vld [vmem:[%s14 + $0x38] sm:$0xff]
            %v2189 = vld [vmem:[%s14 + $0x40] sm:$0xff]
            %v2190 = vld [vmem:[%s14 + $0x48] sm:$0xff]
            %v2191 = vld [vmem:[%s14 + $0x50] sm:$0xff]
            %v2192 = vld [vmem:[%s14 + $0x58] sm:$0xff]
            %v2193 = vld [vmem:[%s14 + $0x60] sm:$0xff]
            %v2194 = vld [vmem:[%s14 + $0x68] sm:$0xff]
            %v2195 = vld [vmem:[%s15] sm:$0x1]
            %v2196 = vpack.c.bf16 %v2143, %v2142
            %v2197 = vpack.c.bf16 %v2145, %v2144
            %v2198 = vpack.c.bf16 %v2147, %v2146
            %v2199 = vpack.c.bf16 %v2148, %v2148
            %v2232 = vunpack.c.l.b16 %v2149
            %v2233 = vunpack.c.h.b16 %v2149
            %v2234 = vunpack.c.l.b16 %v2150
            %v2235 = vunpack.c.l.b16 %v2151
            %v2236 = vunpack.c.h.b16 %v2151
            %v2237 = vunpack.c.l.b16 %v2152
            %v2238 = vunpack.c.l.b16 %v2153
            %v2239 = vunpack.c.h.b16 %v2153
            %v2240 = vunpack.c.l.b16 %v2154
            %v2241 = vunpack.c.l.b16 %v2155
            %v2242 = vunpack.c.h.b16 %v2155
            %v2243 = vunpack.c.l.b16 %v2156
            %v2244 = vunpack.c.l.b16 %v2157
            %v2245 = vunpack.c.h.b16 %v2157
            %v2246 = vunpack.c.l.b16 %v2158
            %v2247 = vunpack.c.l.b16 %v2159
            %v2248 = vunpack.c.h.b16 %v2159
            %v2249 = vunpack.c.l.b16 %v2160
            %v2250 = vunpack.c.l.b16 %v2161
            %v2251 = vunpack.c.h.b16 %v2161
            %v2252 = vunpack.c.l.b16 %v2162
            %v2253 = vunpack.c.l.b16 %v2163
            %v2254 = vunpack.c.h.b16 %v2163
            %v2255 = vunpack.c.l.b16 %v2164
            %v2256 = vunpack.c.l.b16 %v2165
            %v2257 = vunpack.c.h.b16 %v2165
            %v2258 = vunpack.c.l.b16 %v2166
            %v2259 = vunpack.c.l.b16 %v2167
            %v2260 = vunpack.c.h.b16 %v2167
            %v2261 = vunpack.c.l.b16 %v2168
            %v2262 = vunpack.c.l.b16 %v2169
            %v2263 = vunpack.c.h.b16 %v2169
            %v2264 = vunpack.c.l.b16 %v2170
            %v2265 = vunpack.c.l.b16 %v2171
            %v2266 = vunpack.c.h.b16 %v2171
            %v2267 = vunpack.c.l.b16 %v2172
            %v2268 = vunpack.c.l.b16 %v2173
            %v2269 = vunpack.c.h.b16 %v2173
            %v2270 = vunpack.c.l.b16 %v2174
            %v2271 = vunpack.c.l.b16 %v2175
            %v2272 = vunpack.c.h.b16 %v2175
            %v2273 = vunpack.c.l.b16 %v2176
            %v2274 = vunpack.c.l.b16 %v2177
            %v2275 = vunpack.c.h.b16 %v2177
            %v2276 = vunpack.c.l.b16 %v2178
            %v2277 = vunpack.c.l.b16 %v2179
            %v2278 = vunpack.c.h.b16 %v2179
            %v2279 = vunpack.c.l.b16 %v2180
            %v2280 = vpack.c.b16 %v2235, %v2232
            %v2281 = vpack.c.b16 %v2236, %v2233
            %v2282 = vpack.c.b16 %v2237, %v2234
            %v2283 = vpack.c.b16 %v2241, %v2238
            %v2284 = vpack.c.b16 %v2242, %v2239
            %v2285 = vpack.c.b16 %v2243, %v2240
            %v2286 = vpack.c.b16 %v2247, %v2244
            %v2287 = vpack.c.b16 %v2248, %v2245
            %v2288 = vpack.c.b16 %v2249, %v2246
            %v2289 = vpack.c.b16 %v2253, %v2250
            %v2290 = vpack.c.b16 %v2254, %v2251
            %v2291 = vpack.c.b16 %v2255, %v2252
            %v2292 = vpack.c.b16 %v2259, %v2256
            %v2293 = vpack.c.b16 %v2260, %v2257
            %v2294 = vpack.c.b16 %v2261, %v2258
            %v2295 = vpack.c.b16 %v2265, %v2262
            %v2296 = vpack.c.b16 %v2266, %v2263
            %v2297 = vpack.c.b16 %v2267, %v2264
            %v2298 = vpack.c.b16 %v2271, %v2268
            %v2299 = vpack.c.b16 %v2272, %v2269
            %v2300 = vpack.c.b16 %v2273, %v2270
            %v2301 = vpack.c.b16 %v2277, %v2274
            %v2302 = vpack.c.b16 %v2278, %v2275
            %v2303 = vpack.c.b16 %v2279, %v2276
            %2328 = vmatpush.bf16.msra.mxu0 %v2301
            %2329 = vmatpush.bf16.msra.mxu0 %v2298
            %2330 = vmatpush.bf16.msra.mxu0 %v2295
            %2331 = vmatpush.bf16.msra.mxu0 %v2292
            %2332 = vmatpush.bf16.msra.mxu0 %v2289
            %2333 = vmatpush.bf16.msra.mxu0 %v2286
            %2334 = vmatpush.bf16.msra.mxu0 %v2283
            %2335 = vmatpush.bf16.msra.mxu0 %v2280
            %2336 = vmatmul.bf16.gmra.mxu0 %v2196
            %v2337 = vpop.f32.mrf.mxu0
            %v2338 = vadd.f32 0.0, %v2337
            %v2339 = vpop.f32.mrf.mxu0
            %v2340 = vadd.f32 0.0, %v2339
            %2341 = vmatmul.bf16.gmra.mxu0 %v2197
            %v2342 = vpop.f32.mrf.mxu0
            %v2343 = vadd.f32 0.0, %v2342
            %v2344 = vpop.f32.mrf.mxu0
            %v2345 = vadd.f32 0.0, %v2344
            %2346 = vmatmul.bf16.gmra.mxu0 %v2198
            %v2347 = vpop.f32.mrf.mxu0
            %v2348 = vadd.f32 0.0, %v2347
            %v2349 = vpop.f32.mrf.mxu0
            %v2350 = vadd.f32 0.0, %v2349
            %2351 = vmatmul.bf16.gmra.mxu0 %v2199
            %v2352 = vpop.f32.mrf.mxu0
            %v2353 = vadd.f32 0.0, %v2352
            %v2354 = vpop.f32.mrf.mxu0
            %2355 = vdwg.mxu0
            %2356 = vmatpush.bf16.msra.mxu0 %v2302
            %2357 = vmatpush.bf16.msra.mxu0 %v2299
            %2358 = vmatpush.bf16.msra.mxu0 %v2296
            %2359 = vmatpush.bf16.msra.mxu0 %v2293
            %2360 = vmatpush.bf16.msra.mxu0 %v2290
            %2361 = vmatpush.bf16.msra.mxu0 %v2287
            %2362 = vmatpush.bf16.msra.mxu0 %v2284
            %2363 = vmatpush.bf16.msra.mxu0 %v2281
            %2364 = vmatmul.bf16.gmra.mxu0 %v2196
            %v2365 = vpop.f32.mrf.mxu0
            %v2366 = vadd.f32 0.0, %v2365
            %v2367 = vpop.f32.mrf.mxu0
            %v2368 = vadd.f32 0.0, %v2367
            %2369 = vmatmul.bf16.gmra.mxu0 %v2197
            %v2370 = vpop.f32.mrf.mxu0
            %v2371 = vadd.f32 0.0, %v2370
            %v2372 = vpop.f32.mrf.mxu0
            %v2373 = vadd.f32 0.0, %v2372
            %2374 = vmatmul.bf16.gmra.mxu0 %v2198
            %v2375 = vpop.f32.mrf.mxu0
            %v2376 = vadd.f32 0.0, %v2375
            %v2377 = vpop.f32.mrf.mxu0
            %v2378 = vadd.f32 0.0, %v2377
            %2379 = vmatmul.bf16.gmra.mxu0 %v2199
            %v2380 = vpop.f32.mrf.mxu0
            %v2381 = vadd.f32 0.0, %v2380
            %v2382 = vpop.f32.mrf.mxu0
            %2383 = vdwg.mxu0
            %2384 = vmatpush.bf16.msra.mxu0 %v2303
            %2385 = vmatpush.bf16.msra.mxu0 %v2300
            %2386 = vmatpush.bf16.msra.mxu0 %v2297
            %2387 = vmatpush.bf16.msra.mxu0 %v2294
            %2388 = vmatpush.bf16.msra.mxu0 %v2291
            %2389 = vmatpush.bf16.msra.mxu0 %v2288
            %2390 = vmatpush.bf16.msra.mxu0 %v2285
            %2391 = vmatpush.bf16.msra.mxu0 %v2282
            %2392 = vmatmul.bf16.gmra.mxu0 %v2196
            %v2393 = vpop.f32.mrf.mxu0
            %v2394 = vadd.f32 0.0, %v2393
            %v2395 = vpop.f32.mrf.mxu0
            %v2396 = vadd.f32 0.0, %v2395
            %2397 = vmatmul.bf16.gmra.mxu0 %v2197
            %v2398 = vpop.f32.mrf.mxu0
            %v2399 = vadd.f32 0.0, %v2398
            %v2400 = vpop.f32.mrf.mxu0
            %v2401 = vadd.f32 0.0, %v2400
            %2402 = vmatmul.bf16.gmra.mxu0 %v2198
            %v2403 = vpop.f32.mrf.mxu0
            %v2404 = vadd.f32 0.0, %v2403
            %v2405 = vpop.f32.mrf.mxu0
            %v2406 = vadd.f32 0.0, %v2405
            %2407 = vmatmul.bf16.gmra.mxu0 %v2199
            %v2408 = vpop.f32.mrf.mxu0
            %v2409 = vadd.f32 0.0, %v2408
            %v2410 = vpop.f32.mrf.mxu0
            %2411 = vdwg.mxu0
            %v2412 = vpack.c.bf16 %v2340, %v2338
            %v2413 = vpack.c.bf16 %v2345, %v2343
            %v2414 = vpack.c.bf16 %v2350, %v2348
            %v2415 = vpack.c.bf16 %v2366, %v2353
            %v2416 = vpack.c.bf16 %v2371, %v2368
            %v2417 = vpack.c.bf16 %v2376, %v2373
            %v2418 = vpack.c.bf16 %v2381, %v2378
            %v2419 = vpack.c.bf16 %v2396, %v2394
            %v2420 = vpack.c.bf16 %v2401, %v2399
            %v2421 = vpack.c.bf16 %v2406, %v2404
            %v2422 = vpack.c.bf16 %v2409, %v2409
            %v2424 = vperm.slane %v2195, 0
            %v2440 = vunpack.c.l.b16 %v2181
            %v2441 = vunpack.c.h.b16 %v2181
            %v2442 = vunpack.c.l.b16 %v2182
            %v2443 = vunpack.c.h.b16 %v2182
            %v2444 = vunpack.c.l.b16 %v2183
            %v2445 = vunpack.c.h.b16 %v2183
            %v2446 = vunpack.c.l.b16 %v2184
            %v2447 = vunpack.c.h.b16 %v2184
            %v2448 = vunpack.c.l.b16 %v2185
            %v2449 = vunpack.c.h.b16 %v2185
            %v2450 = vunpack.c.l.b16 %v2186
            %v2451 = vunpack.c.h.b16 %v2186
            %v2452 = vunpack.c.l.b16 %v2187
            %v2453 = vunpack.c.h.b16 %v2187
            %v2454 = vunpack.c.l.b16 %v2188
            %v2455 = vunpack.c.h.b16 %v2188
            %v2456 = vunpack.c.l.b16 %v2189
            %v2457 = vunpack.c.h.b16 %v2189
            %v2458 = vunpack.c.l.b16 %v2190
            %v2459 = vunpack.c.h.b16 %v2190
            %v2460 = vunpack.c.l.b16 %v2191
            %v2461 = vunpack.c.h.b16 %v2191
            %v2462 = vunpack.c.l.b16 %v2192
            %v2463 = vunpack.c.h.b16 %v2192
            %v2464 = vunpack.c.l.b16 %v2193
            %v2465 = vunpack.c.h.b16 %v2193
            %v2466 = vunpack.c.l.b16 %v2194
            %v2467 = vunpack.c.h.b16 %v2194
            %v2468 = vpack.c.b16 %v2442, %v2440
            %v2469 = vpack.c.b16 %v2443, %v2441
            %v2470 = vpack.c.b16 %v2446, %v2444
            %v2471 = vpack.c.b16 %v2447, %v2445
            %v2472 = vpack.c.b16 %v2450, %v2448
            %v2473 = vpack.c.b16 %v2451, %v2449
            %v2474 = vpack.c.b16 %v2454, %v2452
            %v2475 = vpack.c.b16 %v2455, %v2453
            %v2476 = vpack.c.b16 %v2458, %v2456
            %v2477 = vpack.c.b16 %v2459, %v2457
            %v2478 = vpack.c.b16 %v2462, %v2460
            %v2479 = vpack.c.b16 %v2463, %v2461
            %v2480 = vpack.c.b16 %v2466, %v2464
            %v2481 = vpack.c.b16 %v2467, %v2465
            %vm2489 = vcmask 326656
            %v2491 = vsel %vm2489, %v2469, 0
            %v2494 = vsel %vm2489, %v2471, 0
            %v2497 = vsel %vm2489, %v2473, 0
            %v2500 = vsel %vm2489, %v2475, 0
            %v2503 = vsel %vm2489, %v2477, 0
            %v2506 = vsel %vm2489, %v2479, 0
            %v2509 = vsel %vm2489, %v2481, 0
            %v2512 = vsel %vm1810, %v2422, 0
            %2514 = vmatpush.bf16.msra.mxu0 %v2419
            %2515 = vmatpush.bf16.msra.mxu0 %v2418
            %2516 = vmatpush.bf16.msra.mxu0 %v2417
            %2517 = vmatpush.bf16.msra.mxu0 %v2416
            %2518 = vmatpush.bf16.msra.mxu0 %v2415
            %2519 = vmatpush.bf16.msra.mxu0 %v2414
            %2520 = vmatpush.bf16.msra.mxu0 %v2413
            %2521 = vmatpush.bf16.msra.mxu0 %v2412
            %2522 = vmatmul.bf16.gmra.mxu0 %v2468
            %v2523 = vpop.f32.mrf.mxu0
            %v2524 = vadd.f32 %v2424, %v2523
            %v2525 = vpop.f32.mrf.mxu0
            %v2526 = vadd.f32 %v2424, %v2525
            %2527 = vmatmul.bf16.gmra.mxu0 %v2470
            %v2528 = vpop.f32.mrf.mxu0
            %v2529 = vadd.f32 %v2424, %v2528
            %v2530 = vpop.f32.mrf.mxu0
            %v2531 = vadd.f32 %v2424, %v2530
            %2532 = vmatmul.bf16.gmra.mxu0 %v2472
            %v2533 = vpop.f32.mrf.mxu0
            %v2534 = vadd.f32 %v2424, %v2533
            %v2535 = vpop.f32.mrf.mxu0
            %v2536 = vadd.f32 %v2424, %v2535
            %2537 = vmatmul.bf16.gmra.mxu0 %v2474
            %v2538 = vpop.f32.mrf.mxu0
            %v2539 = vadd.f32 %v2424, %v2538
            %v2540 = vpop.f32.mrf.mxu0
            %v2541 = vadd.f32 %v2424, %v2540
            %2542 = vmatmul.bf16.gmra.mxu0 %v2476
            %v2543 = vpop.f32.mrf.mxu0
            %v2544 = vadd.f32 %v2424, %v2543
            %v2545 = vpop.f32.mrf.mxu0
            %v2546 = vadd.f32 %v2424, %v2545
            %2547 = vmatmul.bf16.gmra.mxu0 %v2478
            %v2548 = vpop.f32.mrf.mxu0
            %v2549 = vadd.f32 %v2424, %v2548
            %v2550 = vpop.f32.mrf.mxu0
            %v2551 = vadd.f32 %v2424, %v2550
            %2552 = vmatmul.bf16.gmra.mxu0 %v2480
            %v2553 = vpop.f32.mrf.mxu0
            %v2554 = vadd.f32 %v2424, %v2553
            %v2555 = vpop.f32.mrf.mxu0
            %v2556 = vadd.f32 %v2424, %v2555
            %2557 = vdwg.mxu0
            %2558 = vmatpush.bf16.msra.mxu0 0
            %2559 = vmatpush.bf16.msra.mxu0 0
            %2560 = vmatpush.bf16.msra.mxu0 0
            %2561 = vmatpush.bf16.msra.mxu0 0
            %2562 = vmatpush.bf16.msra.mxu0 0
            %2563 = vmatpush.bf16.msra.mxu0 %v2512
            %2564 = vmatpush.bf16.msra.mxu0 %v2421
            %2565 = vmatpush.bf16.msra.mxu0 %v2420
            %2566 = vmatmul.bf16.gmra.mxu0 %v2491
            %v2567 = vpop.f32.mrf.mxu0
            %v2568 = vadd.f32 %v2524, %v2567
            %v2569 = vpop.f32.mrf.mxu0
            %v2570 = vadd.f32 %v2526, %v2569
            %2571 = vmatmul.bf16.gmra.mxu0 %v2494
            %v2572 = vpop.f32.mrf.mxu0
            %v2573 = vadd.f32 %v2529, %v2572
            %v2574 = vpop.f32.mrf.mxu0
            %v2575 = vadd.f32 %v2531, %v2574
            %2576 = vmatmul.bf16.gmra.mxu0 %v2497
            %v2577 = vpop.f32.mrf.mxu0
            %v2578 = vadd.f32 %v2534, %v2577
            %v2579 = vpop.f32.mrf.mxu0
            %v2580 = vadd.f32 %v2536, %v2579
            %2581 = vmatmul.bf16.gmra.mxu0 %v2500
            %v2582 = vpop.f32.mrf.mxu0
            %v2583 = vadd.f32 %v2539, %v2582
            %v2584 = vpop.f32.mrf.mxu0
            %v2585 = vadd.f32 %v2541, %v2584
            %2586 = vmatmul.bf16.gmra.mxu0 %v2503
            %v2587 = vpop.f32.mrf.mxu0
            %v2588 = vadd.f32 %v2544, %v2587
            %v2589 = vpop.f32.mrf.mxu0
            %v2590 = vadd.f32 %v2546, %v2589
            %2591 = vmatmul.bf16.gmra.mxu0 %v2506
            %v2592 = vpop.f32.mrf.mxu0
            %v2593 = vadd.f32 %v2549, %v2592
            %v2594 = vpop.f32.mrf.mxu0
            %v2595 = vadd.f32 %v2551, %v2594
            %2596 = vmatmul.bf16.gmra.mxu0 %v2509
            %v2597 = vpop.f32.mrf.mxu0
            %v2598 = vadd.f32 %v2554, %v2597
            %v2599 = vpop.f32.mrf.mxu0
            %v2600 = vadd.f32 %v2556, %v2599
            %2601 = vdwg.mxu0
            %v2602 = vadd.f32 %v2568, %v2570
            %v2603 = vadd.f32 %v2602, %v2573
            %v2604 = vadd.f32 %v2603, %v2575
            %v2605 = vadd.f32 %v2604, %v2578
            %v2606 = vadd.f32 %v2605, %v2580
            %v2607 = vadd.f32 %v2606, %v2583
            %v2608 = vadd.f32 %v2607, %v2585
            %v2609 = vadd.f32 %v2608, %v2588
            %v2610 = vadd.f32 %v2609, %v2590
            %v2611 = vadd.f32 %v2610, %v2593
            %v2612 = vadd.f32 %v2611, %v2595
            %v2613 = vadd.f32 %v2612, %v2598
            %v2614 = vadd.f32 %v2613, %v2600
            %v2615 = vrot.slane %v2614, 4
            %v2616 = vadd.f32 %v2614, %v2615
            %v2617 = vrot.slane %v2616, 2
            %v2618 = vadd.f32 %v2616, %v2617
            %v2619 = vrot.slane %v2618, 1
            %v2620 = vadd.f32 %v2618, %v2619
            %v2621 = vmul.f32 %v2568, %v2568
            %v2622 = vmul.f32 %v2570, %v2570
            %v2623 = vmul.f32 %v2573, %v2573
            %v2624 = vmul.f32 %v2575, %v2575
            %v2625 = vmul.f32 %v2578, %v2578
            %v2626 = vmul.f32 %v2580, %v2580
            %v2627 = vmul.f32 %v2583, %v2583
            %v2628 = vmul.f32 %v2585, %v2585
            %v2629 = vmul.f32 %v2588, %v2588
            %v2630 = vmul.f32 %v2590, %v2590
            %v2631 = vmul.f32 %v2593, %v2593
            %v2632 = vmul.f32 %v2595, %v2595
            %v2633 = vmul.f32 %v2598, %v2598
            %v2634 = vmul.f32 %v2600, %v2600
            %v2635 = vadd.f32 %v2621, %v2622
            %v2636 = vadd.f32 %v2635, %v2623
            %v2637 = vadd.f32 %v2636, %v2624
            %v2638 = vadd.f32 %v2637, %v2625
            %v2639 = vadd.f32 %v2638, %v2626
            %v2640 = vadd.f32 %v2639, %v2627
            %v2641 = vadd.f32 %v2640, %v2628
            %v2642 = vadd.f32 %v2641, %v2629
            %v2643 = vadd.f32 %v2642, %v2630
            %v2644 = vadd.f32 %v2643, %v2631
            %v2645 = vadd.f32 %v2644, %v2632
            %v2646 = vadd.f32 %v2645, %v2633
            %v2647 = vadd.f32 %v2646, %v2634
            %v2648 = vrot.slane %v2647, 4
            %v2649 = vadd.f32 %v2647, %v2648
            %v2650 = vrot.slane %v2649, 2
            %v2651 = vadd.f32 %v2649, %v2650
            %v2652 = vrot.slane %v2651, 1
            %v2653 = vadd.f32 %v2651, %v2652
            %v2654 = vadd.f32 %v1544, %v2620
            %v2655 = vadd.f32 %v1545, %v2653
          $region160: #{mnist_decoder_forward.1} parent=147 // loop_footer
            %s1543 = sadd.s32 1, %s1539
          $region161: #{mnist_decoder_forward.1} parent=147 // loop_footer_branch
            %1538 = sbr.rel target = $region157
          $region162: #{mnist_decoder_forward.1} parent=147 // loop_exit
            _
          %v2656 = vld [vmem:[%s18] sm:$0xff]
          %v2657 = vld [vmem:[%s18 + $0x8] sm:$0xff]
          %v2658 = vld [vmem:[%s18 + $0x10] sm:$0xff]
          %v2659 = vld [vmem:[%s18 + $0x18] sm:$0xff]
          %v2660 = vld [vmem:[%s18 + $0x20] sm:$0xff]
          %v2661 = vld [vmem:[%s18 + $0x28] sm:$0xff]
          %v2662 = vld [vmem:[%s18 + $0x30] sm:$0xff]
          %v2663 = vld [vmem:[%s18 + $0x38] sm:$0xff]
          %v2664 = vld [vmem:[%s18 + $0x40] sm:$0xff]
          %v2665 = vld [vmem:[%s18 + $0x48] sm:$0xff]
          %v2666 = vld [vmem:[%s18 + $0x50] sm:$0xff]
          %v2667 = vld [vmem:[%s18 + $0x58] sm:$0xff]
          %v2668 = vld [vmem:[%s18 + $0x60] sm:$0xff]
          %v2669 = vld [vmem:[%s18 + $0x68] sm:$0xff]
          %v2670 = vld [vmem:[%s18 + $0x70] sm:$0xff]
          %v2671 = vld [vmem:[%s18 + $0x78] sm:$0xff]
          %v2672 = vld [vmem:[%s19] sm:$0xff]
          %v2673 = vld [vmem:[%s16] sm:$0x1]
          %v2674 = vld [vmem:[#allocation13] sm:$0x1]
          %v2675 = vsel %vm1462, %v1544, %v1545
          %2676 = vmatpush.msra.mxu0 %v2671
          %2677 = vmatpush.msra.mxu0 %v2670
          %2678 = vmatpush.msra.mxu0 %v2669
          %2679 = vmatpush.msra.mxu0 %v2668
          %2680 = vmatpush.msra.mxu0 %v2667
          %2681 = vmatpush.msra.mxu0 %v2666
          %2682 = vmatpush.msra.mxu0 %v2665
          %2683 = vmatpush.msra.mxu0 %v2664
          %2684 = vmatpush.msra.mxu0 %v2663
          %2685 = vmatpush.msra.mxu0 %v2662
          %2686 = vmatpush.msra.mxu0 %v2661
          %2687 = vmatpush.msra.mxu0 %v2660
          %2688 = vmatpush.msra.mxu0 %v2659
          %2689 = vmatpush.msra.mxu0 %v2658
          %2690 = vmatpush.msra.mxu0 %v2657
          %2691 = vmatpush.msra.mxu0 %v2656
          %2692 = vmatmul.f32.gmra.mxu0 %v2675
          %v2693 = vpop.f32.mrf.mxu0
          %v2694 = vadd.f32 0.0, %v2693
          %2695 = vdwg.mxu0
          %v2696 = vmul.f32 %v2694, 0.00031887754
          %v2697 = vmul.f32 %v2696, %v2696
          %v2699 = vrot.slane %v2697, 7
          %v2701 = vsub.f32 %v2696, %v2699
          %v2702 = vadd.f32 %v2701, 1e-05
          %v2703 = vrsqrt.pop %v2702
          %v2704 = vmul.f32 %v2703, %v2702
          %v2705 = vmul.f32 %v2704, %v2703
          %v2706 = vmul.f32 0.5, %v2705
          %v2707 = vsub.f32 1.5, %v2706
          %v2708 = vmul.f32 %v2703, %v2707
          %vm2709 = vweird.f32 %v2702
          %vm2710 = vweird.f32 %v2703
          %vm2711 = vmor %vm2709, %vm2710
          %v2712 = vsel %vm2711, %v2703, %v2708
          %2714 = vst [vmem:[#allocation1] sm:$0xff] %v2712
          %s2715 = scalar_lea.vmem [#allocation1], 1
          %v2716 = vld [vmem:[%s2715] ss:$9 sm:$0xff]
          %v2718 = vmul.f32 %v2673, %v2716
          %v2719 = vmul.f32 %v2696, %v2718
          %v2720 = vsub.f32 %v2674, %v2719
          %v2722 = vperm.slane %v2720, 0
          %v2724 = vsel %vm1462, %v2718, %v2722
          %vm2725 = vcmask 64512
          %v2727 = vsel %vm2725, %v2724, 0
          %2729 = vmatpush.msra.mxu0 0.0
          %2730 = vmatpush.msra.mxu0 0.0
          %2731 = vmatpush.msra.mxu0 0.0
          %2732 = vmatpush.msra.mxu0 0.0
          %2733 = vmatpush.msra.mxu0 0.0
          %2734 = vmatpush.msra.mxu0 0.0
          %2735 = vmatpush.msra.mxu0 0.0
          %2736 = vmatpush.msra.mxu0 0.0
          %2737 = vmatpush.msra.mxu0 0.0
          %2738 = vmatpush.msra.mxu0 0.0
          %2739 = vmatpush.msra.mxu0 0.0
          %2740 = vmatpush.msra.mxu0 0.0
          %2741 = vmatpush.msra.mxu0 0.0
          %2742 = vmatpush.msra.mxu0 0.0
          %2743 = vmatpush.msra.mxu0 0.0
          %2744 = vmatpush.msra.mxu0 %v2672
          %2745 = vmatmul.f32.gmra.mxu0 %v2727
          %v2746 = vpop.f32.mrf.mxu0
          %v2747 = vadd.f32 0.0, %v2746
          %2748 = vdwg.mxu0
          %2749 = vst [vmem:[#allocation3] sm:$0x3] %v2747
        $region148: #{mnist_decoder_forward.1} parent=111 // pred_fallthru
          _
        %s2750 = smul.u32 %s42, 8
        %s2751 = scalar_lea.vmem %s0, %s2750
        %v2752 = vld [vmem:[%s2751] sm:$0xff]
        %v2753 = vld [vmem:[%s1] sm:$0xf]
        %v2754 = vld [vmem:[%s1 + $0x4] sm:$0xf]
        %v2755 = vpack.c.bf16 %v2752, %v2752
        %v2756 = vld [vmem:[#allocation4] sm:$0x1]
        %v2758 = vperm.slane %v2756, 0
        %v2762 = vunpack.c.l.b16 %v2753
        %v2763 = vunpack.c.l.b16 %v2754
        %v2764 = vpack.c.b16 %v2763, %v2762
        %vm2766 = vcmask 130048
        %v2768 = vsel %vm2766, %v2755, 0
        %2770 = vmatpush.bf16.msra.mxu0 0
        %2771 = vmatpush.bf16.msra.mxu0 0
        %2772 = vmatpush.bf16.msra.mxu0 0
        %2773 = vmatpush.bf16.msra.mxu0 0
        %2774 = vmatpush.bf16.msra.mxu0 0
        %2775 = vmatpush.bf16.msra.mxu0 0
        %2776 = vmatpush.bf16.msra.mxu0 0
        %2777 = vmatpush.bf16.msra.mxu0 %v2764
        %2778 = vmatmul.bf16.gmra.mxu0 %v2768
        %v2779 = vpop.f32.mrf.mxu0
        %v2780 = vadd.f32 %v2758, %v2779
        %v2781 = vpop.f32.mrf.mxu0
        %2782 = vdwg.mxu0
        %v2783 = vmax.f32 %v2780, 0.0
        %v2784 = vld [vmem:[%s3] sm:$0xff]
        %v2785 = vld [vmem:[%s3 + $0x8] sm:$0xf]
        %v2786 = vld [vmem:[%s3 + $0xc] sm:$0xff]
        %v2787 = vld [vmem:[%s3 + $0x14] sm:$0xf]
        %v2788 = vld [vmem:[%s3 + $0x18] sm:$0xff]
        %v2789 = vld [vmem:[%s3 + $0x20] sm:$0xf]
        %v2790 = vld [vmem:[%s3 + $0x24] sm:$0xff]
        %v2791 = vld [vmem:[%s3 + $0x2c] sm:$0xf]
        %v2792 = vld [vmem:[%s3 + $0x30] sm:$0xff]
        %v2793 = vld [vmem:[%s3 + $0x38] sm:$0xf]
        %v2794 = vld [vmem:[%s3 + $0x3c] sm:$0xff]
        %v2795 = vld [vmem:[%s3 + $0x44] sm:$0xf]
        %v2796 = vld [vmem:[%s3 + $0x48] sm:$0xff]
        %v2797 = vld [vmem:[%s3 + $0x50] sm:$0xf]
        %v2798 = vld [vmem:[%s3 + $0x54] sm:$0xff]
        %v2799 = vld [vmem:[%s3 + $0x5c] sm:$0xf]
        %v2800 = vld [vmem:[%s3 + $0x60] sm:$0xff]
        %v2801 = vld [vmem:[%s3 + $0x68] sm:$0xf]
        %v2802 = vld [vmem:[%s3 + $0x6c] sm:$0xff]
        %v2803 = vld [vmem:[%s3 + $0x74] sm:$0xf]
        %v2804 = vld [vmem:[%s3 + $0x78] sm:$0xff]
        %v2805 = vld [vmem:[%s3 + $0x80] sm:$0xf]
        %v2806 = vld [vmem:[%s3 + $0x84] sm:$0xff]
        %v2807 = vld [vmem:[%s3 + $0x8c] sm:$0xf]
        %v2808 = vld [vmem:[%s3 + $0x90] sm:$0xff]
        %v2809 = vld [vmem:[%s3 + $0x98] sm:$0xf]
        %v2810 = vld [vmem:[%s3 + $0x9c] sm:$0xff]
        %v2811 = vld [vmem:[%s3 + $0xa4] sm:$0xf]
        %v2812 = vld [vmem:[%s3 + $0xa8] sm:$0xff]
        %v2813 = vld [vmem:[%s3 + $0xb0] sm:$0xf]
        %v2814 = vld [vmem:[%s3 + $0xb4] sm:$0xff]
        %v2815 = vld [vmem:[%s3 + $0xbc] sm:$0xf]
        %v2816 = vpack.c.bf16 %v2783, %v2783
        %v2817 = vld [vmem:[%s4] sm:$0x7]
        %v2819 = vperm.slane %v2817, 0
        %v2820 = vperm.slane %v2817, 1
        %v2821 = vperm.slane %v2817, 2
        %v2857 = vunpack.c.l.b16 %v2784
        %v2858 = vunpack.c.h.b16 %v2784
        %v2859 = vunpack.c.l.b16 %v2785
        %v2860 = vunpack.c.l.b16 %v2786
        %v2861 = vunpack.c.h.b16 %v2786
        %v2862 = vunpack.c.l.b16 %v2787
        %v2863 = vunpack.c.l.b16 %v2788
        %v2864 = vunpack.c.h.b16 %v2788
        %v2865 = vunpack.c.l.b16 %v2789
        %v2866 = vunpack.c.l.b16 %v2790
        %v2867 = vunpack.c.h.b16 %v2790
        %v2868 = vunpack.c.l.b16 %v2791
        %v2869 = vunpack.c.l.b16 %v2792
        %v2870 = vunpack.c.h.b16 %v2792
        %v2871 = vunpack.c.l.b16 %v2793
        %v2872 = vunpack.c.l.b16 %v2794
        %v2873 = vunpack.c.h.b16 %v2794
        %v2874 = vunpack.c.l.b16 %v2795
        %v2875 = vunpack.c.l.b16 %v2796
        %v2876 = vunpack.c.h.b16 %v2796
        %v2877 = vunpack.c.l.b16 %v2797
        %v2878 = vunpack.c.l.b16 %v2798
        %v2879 = vunpack.c.h.b16 %v2798
        %v2880 = vunpack.c.l.b16 %v2799
        %v2881 = vunpack.c.l.b16 %v2800
        %v2882 = vunpack.c.h.b16 %v2800
        %v2883 = vunpack.c.l.b16 %v2801
        %v2884 = vunpack.c.l.b16 %v2802
        %v2885 = vunpack.c.h.b16 %v2802
        %v2886 = vunpack.c.l.b16 %v2803
        %v2887 = vunpack.c.l.b16 %v2804
        %v2888 = vunpack.c.h.b16 %v2804
        %v2889 = vunpack.c.l.b16 %v2805
        %v2890 = vunpack.c.l.b16 %v2806
        %v2891 = vunpack.c.h.b16 %v2806
        %v2892 = vunpack.c.l.b16 %v2807
        %v2893 = vunpack.c.l.b16 %v2808
        %v2894 = vunpack.c.h.b16 %v2808
        %v2895 = vunpack.c.l.b16 %v2809
        %v2896 = vunpack.c.l.b16 %v2810
        %v2897 = vunpack.c.h.b16 %v2810
        %v2898 = vunpack.c.l.b16 %v2811
        %v2899 = vunpack.c.l.b16 %v2812
        %v2900 = vunpack.c.h.b16 %v2812
        %v2901 = vunpack.c.l.b16 %v2813
        %v2902 = vunpack.c.l.b16 %v2814
        %v2903 = vunpack.c.h.b16 %v2814
        %v2904 = vunpack.c.l.b16 %v2815
        %v2905 = vpack.c.b16 %v2860, %v2857
        %v2906 = vpack.c.b16 %v2861, %v2858
        %v2907 = vpack.c.b16 %v2862, %v2859
        %v2908 = vpack.c.b16 %v2866, %v2863
        %v2909 = vpack.c.b16 %v2867, %v2864
        %v2910 = vpack.c.b16 %v2868, %v2865
        %v2911 = vpack.c.b16 %v2872, %v2869
        %v2912 = vpack.c.b16 %v2873, %v2870
        %v2913 = vpack.c.b16 %v2874, %v2871
        %v2914 = vpack.c.b16 %v2878, %v2875
        %v2915 = vpack.c.b16 %v2879, %v2876
        %v2916 = vpack.c.b16 %v2880, %v2877
        %v2917 = vpack.c.b16 %v2884, %v2881
        %v2918 = vpack.c.b16 %v2885, %v2882
        %v2919 = vpack.c.b16 %v2886, %v2883
        %v2920 = vpack.c.b16 %v2890, %v2887
        %v2921 = vpack.c.b16 %v2891, %v2888
        %v2922 = vpack.c.b16 %v2892, %v2889
        %v2923 = vpack.c.b16 %v2896, %v2893
        %v2924 = vpack.c.b16 %v2897, %v2894
        %v2925 = vpack.c.b16 %v2898, %v2895
        %v2926 = vpack.c.b16 %v2902, %v2899
        %v2927 = vpack.c.b16 %v2903, %v2900
        %v2928 = vpack.c.b16 %v2904, %v2901
        %2953 = vmatpush.bf16.msra.mxu0 %v2926
        %2954 = vmatpush.bf16.msra.mxu0 %v2923
        %2955 = vmatpush.bf16.msra.mxu0 %v2920
        %2956 = vmatpush.bf16.msra.mxu0 %v2917
        %2957 = vmatpush.bf16.msra.mxu0 %v2914
        %2958 = vmatpush.bf16.msra.mxu0 %v2911
        %2959 = vmatpush.bf16.msra.mxu0 %v2908
        %2960 = vmatpush.bf16.msra.mxu0 %v2905
        %2961 = vmatmul.bf16.gmra.mxu0 %v2816
        %v2962 = vpop.f32.mrf.mxu0
        %v2963 = vadd.f32 %v2819, %v2962
        %v2964 = vpop.f32.mrf.mxu0
        %2965 = vdwg.mxu0
        %2966 = vmatpush.bf16.msra.mxu0 %v2927
        %2967 = vmatpush.bf16.msra.mxu0 %v2924
        %2968 = vmatpush.bf16.msra.mxu0 %v2921
        %2969 = vmatpush.bf16.msra.mxu0 %v2918
        %2970 = vmatpush.bf16.msra.mxu0 %v2915
        %2971 = vmatpush.bf16.msra.mxu0 %v2912
        %2972 = vmatpush.bf16.msra.mxu0 %v2909
        %2973 = vmatpush.bf16.msra.mxu0 %v2906
        %2974 = vmatmul.bf16.gmra.mxu0 %v2816
        %v2975 = vpop.f32.mrf.mxu0
        %v2976 = vadd.f32 %v2820, %v2975
        %v2977 = vpop.f32.mrf.mxu0
        %2978 = vdwg.mxu0
        %2979 = vmatpush.bf16.msra.mxu0 %v2928
        %2980 = vmatpush.bf16.msra.mxu0 %v2925
        %2981 = vmatpush.bf16.msra.mxu0 %v2922
        %2982 = vmatpush.bf16.msra.mxu0 %v2919
        %2983 = vmatpush.bf16.msra.mxu0 %v2916
        %2984 = vmatpush.bf16.msra.mxu0 %v2913
        %2985 = vmatpush.bf16.msra.mxu0 %v2910
        %2986 = vmatpush.bf16.msra.mxu0 %v2907
        %2987 = vmatmul.bf16.gmra.mxu0 %v2816
        %v2988 = vpop.f32.mrf.mxu0
        %v2989 = vadd.f32 %v2821, %v2988
        %v2990 = vpop.f32.mrf.mxu0
        %2991 = vdwg.mxu0
        %v2992 = vmax.f32 %v2963, 0.0
        %v2993 = vmax.f32 %v2976, 0.0
        %v2994 = vmax.f32 %v2989, 0.0
        %v2995 = vld [vmem:[#allocation7] sm:$0xf]
        %v2996 = vld [vmem:[#allocation7 + $0x4] sm:$0xf]
        %v2997 = vld [vmem:[#allocation7 + $0x8] sm:$0xf]
        %v2998 = vpack.c.bf16 %v2993, %v2992
        %v2999 = vpack.c.bf16 %v2994, %v2994
        %v3003 = vunpack.c.l.b16 %v2995
        %v3004 = vunpack.c.l.b16 %v2996
        %v3005 = vunpack.c.l.b16 %v2997
        %v3006 = vpack.c.b16 %v3004, %v3003
        %v3007 = vpack.c.b16 %v3005, %v3005
        %vm3008 = vcmask 195584
        %v3010 = vsel %vm3008, %v3006, 0
        %v3013 = vsel %vm3008, %v3007, 0
        %vm3015 = vcmask 1043456
        %v3017 = vsel %vm3015, %v2999, 0
        %3019 = vmatpush.bf16.msra.mxu0 0
        %3020 = vmatpush.bf16.msra.mxu0 0
        %3021 = vmatpush.bf16.msra.mxu0 0
        %3022 = vmatpush.bf16.msra.mxu0 0
        %3023 = vmatpush.bf16.msra.mxu0 0
        %3024 = vmatpush.bf16.msra.mxu0 0
        %3025 = vmatpush.bf16.msra.mxu0 %v3017
        %3026 = vmatpush.bf16.msra.mxu0 %v2998
        %3027 = vmatmul.bf16.gmra.mxu0 %v3010
        %v3028 = vpop.f32.mrf.mxu0
        %v3029 = vadd.f32 0.0, %v3028
        %v3030 = vpop.f32.mrf.mxu0
        %v3031 = vadd.f32 0.0, %v3030
        %3032 = vmatmul.bf16.gmra.mxu0 %v3013
        %v3033 = vpop.f32.mrf.mxu0
        %v3034 = vadd.f32 0.0, %v3033
        %v3035 = vpop.f32.mrf.mxu0
        %3036 = vdwg.mxu0
        %v3037 = vld [vmem:[%s6] sm:$0xff]
        %v3038 = vld [vmem:[%s6 + $0x8] sm:$0xf]
        %v3039 = vld [vmem:[%s6 + $0xc] sm:$0xff]
        %v3040 = vld [vmem:[%s6 + $0x14] sm:$0xf]
        %v3041 = vld [vmem:[%s6 + $0x18] sm:$0xff]
        %v3042 = vld [vmem:[%s6 + $0x20] sm:$0xf]
        %v3043 = vld [vmem:[%s6 + $0x24] sm:$0xff]
        %v3044 = vld [vmem:[%s6 + $0x2c] sm:$0xf]
        %v3045 = vld [vmem:[%s6 + $0x30] sm:$0xff]
        %v3046 = vld [vmem:[%s6 + $0x38] sm:$0xf]
        %v3047 = vld [vmem:[%s6 + $0x3c] sm:$0xff]
        %v3048 = vld [vmem:[%s6 + $0x44] sm:$0xf]
        %v3049 = vld [vmem:[%s6 + $0x48] sm:$0xff]
        %v3050 = vld [vmem:[%s6 + $0x50] sm:$0xf]
        %v3051 = vld [vmem:[%s6 + $0x54] sm:$0xff]
        %v3052 = vld [vmem:[%s6 + $0x5c] sm:$0xf]
        %v3053 = vld [vmem:[%s6 + $0x60] sm:$0xff]
        %v3054 = vld [vmem:[%s6 + $0x68] sm:$0xf]
        %v3055 = vld [vmem:[%s6 + $0x6c] sm:$0xff]
        %v3056 = vld [vmem:[%s6 + $0x74] sm:$0xf]
        %v3057 = vld [vmem:[%s6 + $0x78] sm:$0xff]
        %v3058 = vld [vmem:[%s6 + $0x80] sm:$0xf]
        %v3059 = vld [vmem:[%s6 + $0x84] sm:$0xff]
        %v3060 = vld [vmem:[%s6 + $0x8c] sm:$0xf]
        %v3061 = vld [vmem:[%s6 + $0x90] sm:$0xff]
        %v3062 = vld [vmem:[%s6 + $0x98] sm:$0xf]
        %v3063 = vld [vmem:[%s6 + $0x9c] sm:$0xff]
        %v3064 = vld [vmem:[%s6 + $0xa4] sm:$0xf]
        %v3065 = vld [vmem:[%s6 + $0xa8] sm:$0xff]
        %v3066 = vld [vmem:[%s6 + $0xb0] sm:$0xf]
        %v3067 = vld [vmem:[%s6 + $0xb4] sm:$0xff]
        %v3068 = vld [vmem:[%s6 + $0xbc] sm:$0xf]
        %v3069 = vld [vmem:[%s7] sm:$0xf]
        %v3070 = vld [vmem:[%s7 + $0x4] sm:$0xf]
        %v3071 = vld [vmem:[%s7 + $0x8] sm:$0xf]
        %v3072 = vld [vmem:[%s7 + $0xc] sm:$0xf]
        %v3073 = vld [vmem:[%s7 + $0x10] sm:$0xf]
        %v3074 = vld [vmem:[%s7 + $0x14] sm:$0xf]
        %v3075 = vld [vmem:[%s7 + $0x18] sm:$0xf]
        %v3076 = vld [vmem:[#allocation9] sm:$0x1]
        %v3077 = vpack.c.bf16 %v3031, %v3029
        %v3078 = vpack.c.bf16 %v3034, %v3034
        %v3111 = vunpack.c.l.b16 %v3037
        %v3112 = vunpack.c.h.b16 %v3037
        %v3113 = vunpack.c.l.b16 %v3038
        %v3114 = vunpack.c.l.b16 %v3039
        %v3115 = vunpack.c.h.b16 %v3039
        %v3116 = vunpack.c.l.b16 %v3040
        %v3117 = vunpack.c.l.b16 %v3041
        %v3118 = vunpack.c.h.b16 %v3041
        %v3119 = vunpack.c.l.b16 %v3042
        %v3120 = vunpack.c.l.b16 %v3043
        %v3121 = vunpack.c.h.b16 %v3043
        %v3122 = vunpack.c.l.b16 %v3044
        %v3123 = vunpack.c.l.b16 %v3045
        %v3124 = vunpack.c.h.b16 %v3045
        %v3125 = vunpack.c.l.b16 %v3046
        %v3126 = vunpack.c.l.b16 %v3047
        %v3127 = vunpack.c.h.b16 %v3047
        %v3128 = vunpack.c.l.b16 %v3048
        %v3129 = vunpack.c.l.b16 %v3049
        %v3130 = vunpack.c.h.b16 %v3049
        %v3131 = vunpack.c.l.b16 %v3050
        %v3132 = vunpack.c.l.b16 %v3051
        %v3133 = vunpack.c.h.b16 %v3051
        %v3134 = vunpack.c.l.b16 %v3052
        %v3135 = vunpack.c.l.b16 %v3053
        %v3136 = vunpack.c.h.b16 %v3053
        %v3137 = vunpack.c.l.b16 %v3054
        %v3138 = vunpack.c.l.b16 %v3055
        %v3139 = vunpack.c.h.b16 %v3055
        %v3140 = vunpack.c.l.b16 %v3056
        %v3141 = vunpack.c.l.b16 %v3057
        %v3142 = vunpack.c.h.b16 %v3057
        %v3143 = vunpack.c.l.b16 %v3058
        %v3144 = vunpack.c.l.b16 %v3059
        %v3145 = vunpack.c.h.b16 %v3059
        %v3146 = vunpack.c.l.b16 %v3060
        %v3147 = vunpack.c.l.b16 %v3061
        %v3148 = vunpack.c.h.b16 %v3061
        %v3149 = vunpack.c.l.b16 %v3062
        %v3150 = vunpack.c.l.b16 %v3063
        %v3151 = vunpack.c.h.b16 %v3063
        %v3152 = vunpack.c.l.b16 %v3064
        %v3153 = vunpack.c.l.b16 %v3065
        %v3154 = vunpack.c.h.b16 %v3065
        %v3155 = vunpack.c.l.b16 %v3066
        %v3156 = vunpack.c.l.b16 %v3067
        %v3157 = vunpack.c.h.b16 %v3067
        %v3158 = vunpack.c.l.b16 %v3068
        %v3159 = vpack.c.b16 %v3114, %v3111
        %v3160 = vpack.c.b16 %v3115, %v3112
        %v3161 = vpack.c.b16 %v3116, %v3113
        %v3162 = vpack.c.b16 %v3120, %v3117
        %v3163 = vpack.c.b16 %v3121, %v3118
        %v3164 = vpack.c.b16 %v3122, %v3119
        %v3165 = vpack.c.b16 %v3126, %v3123
        %v3166 = vpack.c.b16 %v3127, %v3124
        %v3167 = vpack.c.b16 %v3128, %v3125
        %v3168 = vpack.c.b16 %v3132, %v3129
        %v3169 = vpack.c.b16 %v3133, %v3130
        %v3170 = vpack.c.b16 %v3134, %v3131
        %v3171 = vpack.c.b16 %v3138, %v3135
        %v3172 = vpack.c.b16 %v3139, %v3136
        %v3173 = vpack.c.b16 %v3140, %v3137
        %v3174 = vpack.c.b16 %v3144, %v3141
        %v3175 = vpack.c.b16 %v3145, %v3142
        %v3176 = vpack.c.b16 %v3146, %v3143
        %v3177 = vpack.c.b16 %v3150, %v3147
        %v3178 = vpack.c.b16 %v3151, %v3148
        %v3179 = vpack.c.b16 %v3152, %v3149
        %v3180 = vpack.c.b16 %v3156, %v3153
        %v3181 = vpack.c.b16 %v3157, %v3154
        %v3182 = vpack.c.b16 %v3158, %v3155
        %3207 = vmatpush.bf16.msra.mxu0 %v3180
        %3208 = vmatpush.bf16.msra.mxu0 %v3177
        %3209 = vmatpush.bf16.msra.mxu0 %v3174
        %3210 = vmatpush.bf16.msra.mxu0 %v3171
        %3211 = vmatpush.bf16.msra.mxu0 %v3168
        %3212 = vmatpush.bf16.msra.mxu0 %v3165
        %3213 = vmatpush.bf16.msra.mxu0 %v3162
        %3214 = vmatpush.bf16.msra.mxu0 %v3159
        %3215 = vmatmul.bf16.gmra.mxu0 %v3077
        %v3216 = vpop.f32.mrf.mxu0
        %v3217 = vadd.f32 0.0, %v3216
        %v3218 = vpop.f32.mrf.mxu0
        %v3219 = vadd.f32 0.0, %v3218
        %3220 = vmatmul.bf16.gmra.mxu0 %v3078
        %v3221 = vpop.f32.mrf.mxu0
        %v3222 = vadd.f32 0.0, %v3221
        %v3223 = vpop.f32.mrf.mxu0
        %3224 = vdwg.mxu0
        %3225 = vmatpush.bf16.msra.mxu0 %v3181
        %3226 = vmatpush.bf16.msra.mxu0 %v3178
        %3227 = vmatpush.bf16.msra.mxu0 %v3175
        %3228 = vmatpush.bf16.msra.mxu0 %v3172
        %3229 = vmatpush.bf16.msra.mxu0 %v3169
        %3230 = vmatpush.bf16.msra.mxu0 %v3166
        %3231 = vmatpush.bf16.msra.mxu0 %v3163
        %3232 = vmatpush.bf16.msra.mxu0 %v3160
        %3233 = vmatmul.bf16.gmra.mxu0 %v3077
        %v3234 = vpop.f32.mrf.mxu0
        %v3235 = vadd.f32 0.0, %v3234
        %v3236 = vpop.f32.mrf.mxu0
        %v3237 = vadd.f32 0.0, %v3236
        %3238 = vmatmul.bf16.gmra.mxu0 %v3078
        %v3239 = vpop.f32.mrf.mxu0
        %v3240 = vadd.f32 0.0, %v3239
        %v3241 = vpop.f32.mrf.mxu0
        %3242 = vdwg.mxu0
        %3243 = vmatpush.bf16.msra.mxu0 %v3182
        %3244 = vmatpush.bf16.msra.mxu0 %v3179
        %3245 = vmatpush.bf16.msra.mxu0 %v3176
        %3246 = vmatpush.bf16.msra.mxu0 %v3173
        %3247 = vmatpush.bf16.msra.mxu0 %v3170
        %3248 = vmatpush.bf16.msra.mxu0 %v3167
        %3249 = vmatpush.bf16.msra.mxu0 %v3164
        %3250 = vmatpush.bf16.msra.mxu0 %v3161
        %3251 = vmatmul.bf16.gmra.mxu0 %v3077
        %v3252 = vpop.f32.mrf.mxu0
        %v3253 = vadd.f32 0.0, %v3252
        %v3254 = vpop.f32.mrf.mxu0
        %v3255 = vadd.f32 0.0, %v3254
        %3256 = vmatmul.bf16.gmra.mxu0 %v3078
        %v3257 = vpop.f32.mrf.mxu0
        %v3258 = vadd.f32 0.0, %v3257
        %v3259 = vpop.f32.mrf.mxu0
        %3260 = vdwg.mxu0
        %v3261 = vpack.c.bf16 %v3219, %v3217
        %v3262 = vpack.c.bf16 %v3235, %v3222
        %v3263 = vpack.c.bf16 %v3240, %v3237
        %v3264 = vpack.c.bf16 %v3255, %v3253
        %v3265 = vpack.c.bf16 %v3258, %v3258
        %v3267 = vperm.slane %v3076, 0
        %v3276 = vunpack.c.l.b16 %v3069
        %v3277 = vunpack.c.l.b16 %v3070
        %v3278 = vunpack.c.l.b16 %v3071
        %v3279 = vunpack.c.l.b16 %v3072
        %v3280 = vunpack.c.l.b16 %v3073
        %v3281 = vunpack.c.l.b16 %v3074
        %v3282 = vunpack.c.l.b16 %v3075
        %v3283 = vpack.c.b16 %v3277, %v3276
        %v3284 = vpack.c.b16 %v3279, %v3278
        %v3285 = vpack.c.b16 %v3281, %v3280
        %v3286 = vpack.c.b16 %v3282, %v3282
        %vm3287 = vcmask 588800
        %v3289 = vsel %vm3287, %v3283, 0
        %v3292 = vsel %vm3287, %v3284, 0
        %v3295 = vsel %vm3287, %v3285, 0
        %v3298 = vsel %vm3287, %v3286, 0
        %v3301 = vsel %vm3015, %v3265, 0
        %3303 = vmatpush.bf16.msra.mxu0 0
        %3304 = vmatpush.bf16.msra.mxu0 0
        %3305 = vmatpush.bf16.msra.mxu0 0
        %3306 = vmatpush.bf16.msra.mxu0 %v3301
        %3307 = vmatpush.bf16.msra.mxu0 %v3264
        %3308 = vmatpush.bf16.msra.mxu0 %v3263
        %3309 = vmatpush.bf16.msra.mxu0 %v3262
        %3310 = vmatpush.bf16.msra.mxu0 %v3261
        %3311 = vmatmul.bf16.gmra.mxu0 %v3289
        %v3312 = vpop.f32.mrf.mxu0
        %v3313 = vadd.f32 %v3267, %v3312
        %v3314 = vpop.f32.mrf.mxu0
        %v3315 = vadd.f32 %v3267, %v3314
        %3316 = vmatmul.bf16.gmra.mxu0 %v3292
        %v3317 = vpop.f32.mrf.mxu0
        %v3318 = vadd.f32 %v3267, %v3317
        %v3319 = vpop.f32.mrf.mxu0
        %v3320 = vadd.f32 %v3267, %v3319
        %3321 = vmatmul.bf16.gmra.mxu0 %v3295
        %v3322 = vpop.f32.mrf.mxu0
        %v3323 = vadd.f32 %v3267, %v3322
        %v3324 = vpop.f32.mrf.mxu0
        %v3325 = vadd.f32 %v3267, %v3324
        %3326 = vmatmul.bf16.gmra.mxu0 %v3298
        %v3327 = vpop.f32.mrf.mxu0
        %v3328 = vadd.f32 %v3267, %v3327
        %v3329 = vpop.f32.mrf.mxu0
        %3330 = vdwg.mxu0
        %v3331 = vld [vmem:[#allocation2] sm:$0x3]
        %v3332 = vperm.slane %v3331, 0
        %v3333 = vmul.f32 %v3313, %v3332
        %v3334 = vmul.f32 %v3315, %v3332
        %v3335 = vmul.f32 %v3318, %v3332
        %v3336 = vmul.f32 %v3320, %v3332
        %v3337 = vmul.f32 %v3323, %v3332
        %v3338 = vmul.f32 %v3325, %v3332
        %v3339 = vmul.f32 %v3328, %v3332
        %v3340 = vperm.slane %v3331, 1
        %v3341 = vadd.f32 %v3333, %v3340
        %v3342 = vadd.f32 %v3334, %v3340
        %v3343 = vadd.f32 %v3335, %v3340
        %v3344 = vadd.f32 %v3336, %v3340
        %v3345 = vadd.f32 %v3337, %v3340
        %v3346 = vadd.f32 %v3338, %v3340
        %v3347 = vadd.f32 %v3339, %v3340
        %v3348 = vmax.f32 %v3341, 0.0
        %v3349 = vmax.f32 %v3342, 0.0
        %v3350 = vmax.f32 %v3343, 0.0
        %v3351 = vmax.f32 %v3344, 0.0
        %v3352 = vmax.f32 %v3345, 0.0
        %v3353 = vmax.f32 %v3346, 0.0
        %v3354 = vmax.f32 %v3347, 0.0
        %v3355 = vld [vmem:[#allocation12] sm:$0xff]
        %v3356 = vld [vmem:[#allocation12 + $0x8] sm:$0xf]
        %v3357 = vld [vmem:[#allocation12 + $0xc] sm:$0xff]
        %v3358 = vld [vmem:[#allocation12 + $0x14] sm:$0xf]
        %v3359 = vld [vmem:[#allocation12 + $0x18] sm:$0xff]
        %v3360 = vld [vmem:[#allocation12 + $0x20] sm:$0xf]
        %v3361 = vld [vmem:[#allocation12 + $0x24] sm:$0xff]
        %v3362 = vld [vmem:[#allocation12 + $0x2c] sm:$0xf]
        %v3363 = vld [vmem:[#allocation12 + $0x30] sm:$0xff]
        %v3364 = vld [vmem:[#allocation12 + $0x38] sm:$0xf]
        %v3365 = vld [vmem:[#allocation12 + $0x3c] sm:$0xff]
        %v3366 = vld [vmem:[#allocation12 + $0x44] sm:$0xf]
        %v3367 = vld [vmem:[#allocation12 + $0x48] sm:$0xff]
        %v3368 = vld [vmem:[#allocation12 + $0x50] sm:$0xf]
        %v3369 = vld [vmem:[#allocation12 + $0x54] sm:$0xff]
        %v3370 = vld [vmem:[#allocation12 + $0x5c] sm:$0xf]
        %v3371 = vld [vmem:[#allocation12 + $0x60] sm:$0xff]
        %v3372 = vld [vmem:[#allocation12 + $0x68] sm:$0xf]
        %v3373 = vld [vmem:[#allocation12 + $0x6c] sm:$0xff]
        %v3374 = vld [vmem:[#allocation12 + $0x74] sm:$0xf]
        %v3375 = vld [vmem:[#allocation12 + $0x78] sm:$0xff]
        %v3376 = vld [vmem:[#allocation12 + $0x80] sm:$0xf]
        %v3377 = vld [vmem:[#allocation12 + $0x84] sm:$0xff]
        %v3378 = vld [vmem:[#allocation12 + $0x8c] sm:$0xf]
        %v3379 = vld [vmem:[#allocation12 + $0x90] sm:$0xff]
        %v3380 = vld [vmem:[#allocation12 + $0x98] sm:$0xf]
        %v3381 = vld [vmem:[#allocation12 + $0x9c] sm:$0xff]
        %v3382 = vld [vmem:[#allocation12 + $0xa4] sm:$0xf]
        %v3383 = vld [vmem:[#allocation12 + $0xa8] sm:$0xff]
        %v3384 = vld [vmem:[#allocation12 + $0xb0] sm:$0xf]
        %v3385 = vld [vmem:[#allocation12 + $0xb4] sm:$0xff]
        %v3386 = vld [vmem:[#allocation12 + $0xbc] sm:$0xf]
        %v3387 = vld [vmem:[%s14] sm:$0xff]
        %v3388 = vld [vmem:[%s14 + $0x8] sm:$0xff]
        %v3389 = vld [vmem:[%s14 + $0x10] sm:$0xff]
        %v3390 = vld [vmem:[%s14 + $0x18] sm:$0xff]
        %v3391 = vld [vmem:[%s14 + $0x20] sm:$0xff]
        %v3392 = vld [vmem:[%s14 + $0x28] sm:$0xff]
        %v3393 = vld [vmem:[%s14 + $0x30] sm:$0xff]
        %v3394 = vld [vmem:[%s14 + $0x38] sm:$0xff]
        %v3395 = vld [vmem:[%s14 + $0x40] sm:$0xff]
        %v3396 = vld [vmem:[%s14 + $0x48] sm:$0xff]
        %v3397 = vld [vmem:[%s14 + $0x50] sm:$0xff]
        %v3398 = vld [vmem:[%s14 + $0x58] sm:$0xff]
        %v3399 = vld [vmem:[%s14 + $0x60] sm:$0xff]
        %v3400 = vld [vmem:[%s14 + $0x68] sm:$0xff]
        %v3401 = vld [vmem:[%s15] sm:$0x1]
        %v3402 = vpack.c.bf16 %v3349, %v3348
        %v3403 = vpack.c.bf16 %v3351, %v3350
        %v3404 = vpack.c.bf16 %v3353, %v3352
        %v3405 = vpack.c.bf16 %v3354, %v3354
        %v3438 = vunpack.c.l.b16 %v3355
        %v3439 = vunpack.c.h.b16 %v3355
        %v3440 = vunpack.c.l.b16 %v3356
        %v3441 = vunpack.c.l.b16 %v3357
        %v3442 = vunpack.c.h.b16 %v3357
        %v3443 = vunpack.c.l.b16 %v3358
        %v3444 = vunpack.c.l.b16 %v3359
        %v3445 = vunpack.c.h.b16 %v3359
        %v3446 = vunpack.c.l.b16 %v3360
        %v3447 = vunpack.c.l.b16 %v3361
        %v3448 = vunpack.c.h.b16 %v3361
        %v3449 = vunpack.c.l.b16 %v3362
        %v3450 = vunpack.c.l.b16 %v3363
        %v3451 = vunpack.c.h.b16 %v3363
        %v3452 = vunpack.c.l.b16 %v3364
        %v3453 = vunpack.c.l.b16 %v3365
        %v3454 = vunpack.c.h.b16 %v3365
        %v3455 = vunpack.c.l.b16 %v3366
        %v3456 = vunpack.c.l.b16 %v3367
        %v3457 = vunpack.c.h.b16 %v3367
        %v3458 = vunpack.c.l.b16 %v3368
        %v3459 = vunpack.c.l.b16 %v3369
        %v3460 = vunpack.c.h.b16 %v3369
        %v3461 = vunpack.c.l.b16 %v3370
        %v3462 = vunpack.c.l.b16 %v3371
        %v3463 = vunpack.c.h.b16 %v3371
        %v3464 = vunpack.c.l.b16 %v3372
        %v3465 = vunpack.c.l.b16 %v3373
        %v3466 = vunpack.c.h.b16 %v3373
        %v3467 = vunpack.c.l.b16 %v3374
        %v3468 = vunpack.c.l.b16 %v3375
        %v3469 = vunpack.c.h.b16 %v3375
        %v3470 = vunpack.c.l.b16 %v3376
        %v3471 = vunpack.c.l.b16 %v3377
        %v3472 = vunpack.c.h.b16 %v3377
        %v3473 = vunpack.c.l.b16 %v3378
        %v3474 = vunpack.c.l.b16 %v3379
        %v3475 = vunpack.c.h.b16 %v3379
        %v3476 = vunpack.c.l.b16 %v3380
        %v3477 = vunpack.c.l.b16 %v3381
        %v3478 = vunpack.c.h.b16 %v3381
        %v3479 = vunpack.c.l.b16 %v3382
        %v3480 = vunpack.c.l.b16 %v3383
        %v3481 = vunpack.c.h.b16 %v3383
        %v3482 = vunpack.c.l.b16 %v3384
        %v3483 = vunpack.c.l.b16 %v3385
        %v3484 = vunpack.c.h.b16 %v3385
        %v3485 = vunpack.c.l.b16 %v3386
        %v3486 = vpack.c.b16 %v3441, %v3438
        %v3487 = vpack.c.b16 %v3442, %v3439
        %v3488 = vpack.c.b16 %v3443, %v3440
        %v3489 = vpack.c.b16 %v3447, %v3444
        %v3490 = vpack.c.b16 %v3448, %v3445
        %v3491 = vpack.c.b16 %v3449, %v3446
        %v3492 = vpack.c.b16 %v3453, %v3450
        %v3493 = vpack.c.b16 %v3454, %v3451
        %v3494 = vpack.c.b16 %v3455, %v3452
        %v3495 = vpack.c.b16 %v3459, %v3456
        %v3496 = vpack.c.b16 %v3460, %v3457
        %v3497 = vpack.c.b16 %v3461, %v3458
        %v3498 = vpack.c.b16 %v3465, %v3462
        %v3499 = vpack.c.b16 %v3466, %v3463
        %v3500 = vpack.c.b16 %v3467, %v3464
        %v3501 = vpack.c.b16 %v3471, %v3468
        %v3502 = vpack.c.b16 %v3472, %v3469
        %v3503 = vpack.c.b16 %v3473, %v3470
        %v3504 = vpack.c.b16 %v3477, %v3474
        %v3505 = vpack.c.b16 %v3478, %v3475
        %v3506 = vpack.c.b16 %v3479, %v3476
        %v3507 = vpack.c.b16 %v3483, %v3480
        %v3508 = vpack.c.b16 %v3484, %v3481
        %v3509 = vpack.c.b16 %v3485, %v3482
        %3534 = vmatpush.bf16.msra.mxu0 %v3507
        %3535 = vmatpush.bf16.msra.mxu0 %v3504
        %3536 = vmatpush.bf16.msra.mxu0 %v3501
        %3537 = vmatpush.bf16.msra.mxu0 %v3498
        %3538 = vmatpush.bf16.msra.mxu0 %v3495
        %3539 = vmatpush.bf16.msra.mxu0 %v3492
        %3540 = vmatpush.bf16.msra.mxu0 %v3489
        %3541 = vmatpush.bf16.msra.mxu0 %v3486
        %3542 = vmatmul.bf16.gmra.mxu0 %v3402
        %v3543 = vpop.f32.mrf.mxu0
        %v3544 = vadd.f32 0.0, %v3543
        %v3545 = vpop.f32.mrf.mxu0
        %v3546 = vadd.f32 0.0, %v3545
        %3547 = vmatmul.bf16.gmra.mxu0 %v3403
        %v3548 = vpop.f32.mrf.mxu0
        %v3549 = vadd.f32 0.0, %v3548
        %v3550 = vpop.f32.mrf.mxu0
        %v3551 = vadd.f32 0.0, %v3550
        %3552 = vmatmul.bf16.gmra.mxu0 %v3404
        %v3553 = vpop.f32.mrf.mxu0
        %v3554 = vadd.f32 0.0, %v3553
        %v3555 = vpop.f32.mrf.mxu0
        %v3556 = vadd.f32 0.0, %v3555
        %3557 = vmatmul.bf16.gmra.mxu0 %v3405
        %v3558 = vpop.f32.mrf.mxu0
        %v3559 = vadd.f32 0.0, %v3558
        %v3560 = vpop.f32.mrf.mxu0
        %3561 = vdwg.mxu0
        %3562 = vmatpush.bf16.msra.mxu0 %v3508
        %3563 = vmatpush.bf16.msra.mxu0 %v3505
        %3564 = vmatpush.bf16.msra.mxu0 %v3502
        %3565 = vmatpush.bf16.msra.mxu0 %v3499
        %3566 = vmatpush.bf16.msra.mxu0 %v3496
        %3567 = vmatpush.bf16.msra.mxu0 %v3493
        %3568 = vmatpush.bf16.msra.mxu0 %v3490
        %3569 = vmatpush.bf16.msra.mxu0 %v3487
        %3570 = vmatmul.bf16.gmra.mxu0 %v3402
        %v3571 = vpop.f32.mrf.mxu0
        %v3572 = vadd.f32 0.0, %v3571
        %v3573 = vpop.f32.mrf.mxu0
        %v3574 = vadd.f32 0.0, %v3573
        %3575 = vmatmul.bf16.gmra.mxu0 %v3403
        %v3576 = vpop.f32.mrf.mxu0
        %v3577 = vadd.f32 0.0, %v3576
        %v3578 = vpop.f32.mrf.mxu0
        %v3579 = vadd.f32 0.0, %v3578
        %3580 = vmatmul.bf16.gmra.mxu0 %v3404
        %v3581 = vpop.f32.mrf.mxu0
        %v3582 = vadd.f32 0.0, %v3581
        %v3583 = vpop.f32.mrf.mxu0
        %v3584 = vadd.f32 0.0, %v3583
        %3585 = vmatmul.bf16.gmra.mxu0 %v3405
        %v3586 = vpop.f32.mrf.mxu0
        %v3587 = vadd.f32 0.0, %v3586
        %v3588 = vpop.f32.mrf.mxu0
        %3589 = vdwg.mxu0
        %3590 = vmatpush.bf16.msra.mxu0 %v3509
        %3591 = vmatpush.bf16.msra.mxu0 %v3506
        %3592 = vmatpush.bf16.msra.mxu0 %v3503
        %3593 = vmatpush.bf16.msra.mxu0 %v3500
        %3594 = vmatpush.bf16.msra.mxu0 %v3497
        %3595 = vmatpush.bf16.msra.mxu0 %v3494
        %3596 = vmatpush.bf16.msra.mxu0 %v3491
        %3597 = vmatpush.bf16.msra.mxu0 %v3488
        %3598 = vmatmul.bf16.gmra.mxu0 %v3402
        %v3599 = vpop.f32.mrf.mxu0
        %v3600 = vadd.f32 0.0, %v3599
        %v3601 = vpop.f32.mrf.mxu0
        %v3602 = vadd.f32 0.0, %v3601
        %3603 = vmatmul.bf16.gmra.mxu0 %v3403
        %v3604 = vpop.f32.mrf.mxu0
        %v3605 = vadd.f32 0.0, %v3604
        %v3606 = vpop.f32.mrf.mxu0
        %v3607 = vadd.f32 0.0, %v3606
        %3608 = vmatmul.bf16.gmra.mxu0 %v3404
        %v3609 = vpop.f32.mrf.mxu0
        %v3610 = vadd.f32 0.0, %v3609
        %v3611 = vpop.f32.mrf.mxu0
        %v3612 = vadd.f32 0.0, %v3611
        %3613 = vmatmul.bf16.gmra.mxu0 %v3405
        %v3614 = vpop.f32.mrf.mxu0
        %v3615 = vadd.f32 0.0, %v3614
        %v3616 = vpop.f32.mrf.mxu0
        %3617 = vdwg.mxu0
        %v3618 = vpack.c.bf16 %v3546, %v3544
        %v3619 = vpack.c.bf16 %v3551, %v3549
        %v3620 = vpack.c.bf16 %v3556, %v3554
        %v3621 = vpack.c.bf16 %v3572, %v3559
        %v3622 = vpack.c.bf16 %v3577, %v3574
        %v3623 = vpack.c.bf16 %v3582, %v3579
        %v3624 = vpack.c.bf16 %v3587, %v3584
        %v3625 = vpack.c.bf16 %v3602, %v3600
        %v3626 = vpack.c.bf16 %v3607, %v3605
        %v3627 = vpack.c.bf16 %v3612, %v3610
        %v3628 = vpack.c.bf16 %v3615, %v3615
        %v3630 = vperm.slane %v3401, 0
        %v3646 = vunpack.c.l.b16 %v3387
        %v3647 = vunpack.c.h.b16 %v3387
        %v3648 = vunpack.c.l.b16 %v3388
        %v3649 = vunpack.c.h.b16 %v3388
        %v3650 = vunpack.c.l.b16 %v3389
        %v3651 = vunpack.c.h.b16 %v3389
        %v3652 = vunpack.c.l.b16 %v3390
        %v3653 = vunpack.c.h.b16 %v3390
        %v3654 = vunpack.c.l.b16 %v3391
        %v3655 = vunpack.c.h.b16 %v3391
        %v3656 = vunpack.c.l.b16 %v3392
        %v3657 = vunpack.c.h.b16 %v3392
        %v3658 = vunpack.c.l.b16 %v3393
        %v3659 = vunpack.c.h.b16 %v3393
        %v3660 = vunpack.c.l.b16 %v3394
        %v3661 = vunpack.c.h.b16 %v3394
        %v3662 = vunpack.c.l.b16 %v3395
        %v3663 = vunpack.c.h.b16 %v3395
        %v3664 = vunpack.c.l.b16 %v3396
        %v3665 = vunpack.c.h.b16 %v3396
        %v3666 = vunpack.c.l.b16 %v3397
        %v3667 = vunpack.c.h.b16 %v3397
        %v3668 = vunpack.c.l.b16 %v3398
        %v3669 = vunpack.c.h.b16 %v3398
        %v3670 = vunpack.c.l.b16 %v3399
        %v3671 = vunpack.c.h.b16 %v3399
        %v3672 = vunpack.c.l.b16 %v3400
        %v3673 = vunpack.c.h.b16 %v3400
        %v3674 = vpack.c.b16 %v3648, %v3646
        %v3675 = vpack.c.b16 %v3649, %v3647
        %v3676 = vpack.c.b16 %v3652, %v3650
        %v3677 = vpack.c.b16 %v3653, %v3651
        %v3678 = vpack.c.b16 %v3656, %v3654
        %v3679 = vpack.c.b16 %v3657, %v3655
        %v3680 = vpack.c.b16 %v3660, %v3658
        %v3681 = vpack.c.b16 %v3661, %v3659
        %v3682 = vpack.c.b16 %v3664, %v3662
        %v3683 = vpack.c.b16 %v3665, %v3663
        %v3684 = vpack.c.b16 %v3668, %v3666
        %v3685 = vpack.c.b16 %v3669, %v3667
        %v3686 = vpack.c.b16 %v3672, %v3670
        %v3687 = vpack.c.b16 %v3673, %v3671
        %vm3695 = vcmask 326656
        %v3697 = vsel %vm3695, %v3675, 0
        %v3700 = vsel %vm3695, %v3677, 0
        %v3703 = vsel %vm3695, %v3679, 0
        %v3706 = vsel %vm3695, %v3681, 0
        %v3709 = vsel %vm3695, %v3683, 0
        %v3712 = vsel %vm3695, %v3685, 0
        %v3715 = vsel %vm3695, %v3687, 0
        %v3718 = vsel %vm3015, %v3628, 0
        %3720 = vmatpush.bf16.msra.mxu0 %v3625
        %3721 = vmatpush.bf16.msra.mxu0 %v3624
        %3722 = vmatpush.bf16.msra.mxu0 %v3623
        %3723 = vmatpush.bf16.msra.mxu0 %v3622
        %3724 = vmatpush.bf16.msra.mxu0 %v3621
        %3725 = vmatpush.bf16.msra.mxu0 %v3620
        %3726 = vmatpush.bf16.msra.mxu0 %v3619
        %3727 = vmatpush.bf16.msra.mxu0 %v3618
        %3728 = vmatmul.bf16.gmra.mxu0 %v3674
        %v3729 = vpop.f32.mrf.mxu0
        %v3730 = vadd.f32 %v3630, %v3729
        %v3731 = vpop.f32.mrf.mxu0
        %v3732 = vadd.f32 %v3630, %v3731
        %3733 = vmatmul.bf16.gmra.mxu0 %v3676
        %v3734 = vpop.f32.mrf.mxu0
        %v3735 = vadd.f32 %v3630, %v3734
        %v3736 = vpop.f32.mrf.mxu0
        %v3737 = vadd.f32 %v3630, %v3736
        %3738 = vmatmul.bf16.gmra.mxu0 %v3678
        %v3739 = vpop.f32.mrf.mxu0
        %v3740 = vadd.f32 %v3630, %v3739
        %v3741 = vpop.f32.mrf.mxu0
        %v3742 = vadd.f32 %v3630, %v3741
        %3743 = vmatmul.bf16.gmra.mxu0 %v3680
        %v3744 = vpop.f32.mrf.mxu0
        %v3745 = vadd.f32 %v3630, %v3744
        %v3746 = vpop.f32.mrf.mxu0
        %v3747 = vadd.f32 %v3630, %v3746
        %3748 = vmatmul.bf16.gmra.mxu0 %v3682
        %v3749 = vpop.f32.mrf.mxu0
        %v3750 = vadd.f32 %v3630, %v3749
        %v3751 = vpop.f32.mrf.mxu0
        %v3752 = vadd.f32 %v3630, %v3751
        %3753 = vmatmul.bf16.gmra.mxu0 %v3684
        %v3754 = vpop.f32.mrf.mxu0
        %v3755 = vadd.f32 %v3630, %v3754
        %v3756 = vpop.f32.mrf.mxu0
        %v3757 = vadd.f32 %v3630, %v3756
        %3758 = vmatmul.bf16.gmra.mxu0 %v3686
        %v3759 = vpop.f32.mrf.mxu0
        %v3760 = vadd.f32 %v3630, %v3759
        %v3761 = vpop.f32.mrf.mxu0
        %v3762 = vadd.f32 %v3630, %v3761
        %3763 = vdwg.mxu0
        %3764 = vmatpush.bf16.msra.mxu0 0
        %3765 = vmatpush.bf16.msra.mxu0 0
        %3766 = vmatpush.bf16.msra.mxu0 0
        %3767 = vmatpush.bf16.msra.mxu0 0
        %3768 = vmatpush.bf16.msra.mxu0 0
        %3769 = vmatpush.bf16.msra.mxu0 %v3718
        %3770 = vmatpush.bf16.msra.mxu0 %v3627
        %3771 = vmatpush.bf16.msra.mxu0 %v3626
        %3772 = vmatmul.bf16.gmra.mxu0 %v3697
        %v3773 = vpop.f32.mrf.mxu0
        %v3774 = vadd.f32 %v3730, %v3773
        %v3775 = vpop.f32.mrf.mxu0
        %v3776 = vadd.f32 %v3732, %v3775
        %3777 = vmatmul.bf16.gmra.mxu0 %v3700
        %v3778 = vpop.f32.mrf.mxu0
        %v3779 = vadd.f32 %v3735, %v3778
        %v3780 = vpop.f32.mrf.mxu0
        %v3781 = vadd.f32 %v3737, %v3780
        %3782 = vmatmul.bf16.gmra.mxu0 %v3703
        %v3783 = vpop.f32.mrf.mxu0
        %v3784 = vadd.f32 %v3740, %v3783
        %v3785 = vpop.f32.mrf.mxu0
        %v3786 = vadd.f32 %v3742, %v3785
        %3787 = vmatmul.bf16.gmra.mxu0 %v3706
        %v3788 = vpop.f32.mrf.mxu0
        %v3789 = vadd.f32 %v3745, %v3788
        %v3790 = vpop.f32.mrf.mxu0
        %v3791 = vadd.f32 %v3747, %v3790
        %3792 = vmatmul.bf16.gmra.mxu0 %v3709
        %v3793 = vpop.f32.mrf.mxu0
        %v3794 = vadd.f32 %v3750, %v3793
        %v3795 = vpop.f32.mrf.mxu0
        %v3796 = vadd.f32 %v3752, %v3795
        %3797 = vmatmul.bf16.gmra.mxu0 %v3712
        %v3798 = vpop.f32.mrf.mxu0
        %v3799 = vadd.f32 %v3755, %v3798
        %v3800 = vpop.f32.mrf.mxu0
        %v3801 = vadd.f32 %v3757, %v3800
        %3802 = vmatmul.bf16.gmra.mxu0 %v3715
        %v3803 = vpop.f32.mrf.mxu0
        %v3804 = vadd.f32 %v3760, %v3803
        %v3805 = vpop.f32.mrf.mxu0
        %v3806 = vadd.f32 %v3762, %v3805
        %3807 = vdwg.mxu0
        %v3808 = vld [vmem:[#allocation3] sm:$0x3]
        %v3809 = vperm.slane %v3808, 0
        %v3810 = vmul.f32 %v3774, %v3809
        %v3811 = vmul.f32 %v3776, %v3809
        %v3812 = vmul.f32 %v3779, %v3809
        %v3813 = vmul.f32 %v3781, %v3809
        %v3814 = vmul.f32 %v3784, %v3809
        %v3815 = vmul.f32 %v3786, %v3809
        %v3816 = vmul.f32 %v3789, %v3809
        %v3817 = vmul.f32 %v3791, %v3809
        %v3818 = vmul.f32 %v3794, %v3809
        %v3819 = vmul.f32 %v3796, %v3809
        %v3820 = vmul.f32 %v3799, %v3809
        %v3821 = vmul.f32 %v3801, %v3809
        %v3822 = vmul.f32 %v3804, %v3809
        %v3823 = vmul.f32 %v3806, %v3809
        %v3824 = vperm.slane %v3808, 1
        %v3825 = vadd.f32 %v3810, %v3824
        %v3826 = vadd.f32 %v3811, %v3824
        %v3827 = vadd.f32 %v3812, %v3824
        %v3828 = vadd.f32 %v3813, %v3824
        %v3829 = vadd.f32 %v3814, %v3824
        %v3830 = vadd.f32 %v3815, %v3824
        %v3831 = vadd.f32 %v3816, %v3824
        %v3832 = vadd.f32 %v3817, %v3824
        %v3833 = vadd.f32 %v3818, %v3824
        %v3834 = vadd.f32 %v3819, %v3824
        %v3835 = vadd.f32 %v3820, %v3824
        %v3836 = vadd.f32 %v3821, %v3824
        %v3837 = vadd.f32 %v3822, %v3824
        %v3838 = vadd.f32 %v3823, %v3824
        %v3839 = vmax.f32 %v3825, 0.0
        %v3840 = vmax.f32 %v3826, 0.0
        %v3841 = vmax.f32 %v3827, 0.0
        %v3842 = vmax.f32 %v3828, 0.0
        %v3843 = vmax.f32 %v3829, 0.0
        %v3844 = vmax.f32 %v3830, 0.0
        %v3845 = vmax.f32 %v3831, 0.0
        %v3846 = vmax.f32 %v3832, 0.0
        %v3847 = vmax.f32 %v3833, 0.0
        %v3848 = vmax.f32 %v3834, 0.0
        %v3849 = vmax.f32 %v3835, 0.0
        %v3850 = vmax.f32 %v3836, 0.0
        %v3851 = vmax.f32 %v3837, 0.0
        %v3852 = vmax.f32 %v3838, 0.0
        %v3853 = vld [vmem:[#allocation15] sm:$0xff]
        %v3854 = vld [vmem:[#allocation15 + $0x8] sm:$0xf]
        %v3855 = vld [vmem:[#allocation15 + $0xc] sm:$0xff]
        %v3856 = vld [vmem:[#allocation15 + $0x14] sm:$0xf]
        %v3857 = vld [vmem:[#allocation15 + $0x18] sm:$0xff]
        %v3858 = vld [vmem:[#allocation15 + $0x20] sm:$0xf]
        %v3859 = vld [vmem:[#allocation15 + $0x24] sm:$0xff]
        %v3860 = vld [vmem:[#allocation15 + $0x2c] sm:$0xf]
        %v3861 = vld [vmem:[#allocation15 + $0x30] sm:$0xff]
        %v3862 = vld [vmem:[#allocation15 + $0x38] sm:$0xf]
        %v3863 = vld [vmem:[#allocation15 + $0x3c] sm:$0xff]
        %v3864 = vld [vmem:[#allocation15 + $0x44] sm:$0xf]
        %v3865 = vld [vmem:[#allocation15 + $0x48] sm:$0xff]
        %v3866 = vld [vmem:[#allocation15 + $0x50] sm:$0xf]
        %v3867 = vld [vmem:[#allocation15 + $0x54] sm:$0xff]
        %v3868 = vld [vmem:[#allocation15 + $0x5c] sm:$0xf]
        %v3869 = vld [vmem:[#allocation15 + $0x60] sm:$0xff]
        %v3870 = vld [vmem:[#allocation15 + $0x68] sm:$0xf]
        %v3871 = vld [vmem:[#allocation15 + $0x6c] sm:$0xff]
        %v3872 = vld [vmem:[#allocation15 + $0x74] sm:$0xf]
        %v3873 = vld [vmem:[#allocation15 + $0x78] sm:$0xff]
        %v3874 = vld [vmem:[#allocation15 + $0x80] sm:$0xf]
        %v3875 = vld [vmem:[#allocation15 + $0x84] sm:$0xff]
        %v3876 = vld [vmem:[#allocation15 + $0x8c] sm:$0xf]
        %v3877 = vld [vmem:[#allocation15 + $0x90] sm:$0xff]
        %v3878 = vld [vmem:[#allocation15 + $0x98] sm:$0xf]
        %v3879 = vld [vmem:[#allocation15 + $0x9c] sm:$0xff]
        %v3880 = vld [vmem:[#allocation15 + $0xa4] sm:$0xf]
        %v3881 = vld [vmem:[#allocation15 + $0xa8] sm:$0xff]
        %v3882 = vld [vmem:[#allocation15 + $0xb0] sm:$0xf]
        %v3883 = vld [vmem:[#allocation15 + $0xb4] sm:$0xff]
        %v3884 = vld [vmem:[#allocation15 + $0xbc] sm:$0xf]
        %v3885 = vld [vmem:[#allocation16] sm:$0xff]
        %v3886 = vld [vmem:[#allocation16 + $0x8] sm:$0xf]
        %v3887 = vld [vmem:[#allocation16 + $0xc] sm:$0xff]
        %v3888 = vld [vmem:[#allocation16 + $0x14] sm:$0xf]
        %v3889 = vld [vmem:[#allocation16 + $0x18] sm:$0xff]
        %v3890 = vld [vmem:[#allocation16 + $0x20] sm:$0xf]
        %v3891 = vld [vmem:[#allocation16 + $0x24] sm:$0xff]
        %v3892 = vld [vmem:[#allocation16 + $0x2c] sm:$0xf]
        %v3893 = vld [vmem:[#allocation16 + $0x30] sm:$0xff]
        %v3894 = vld [vmem:[#allocation16 + $0x38] sm:$0xf]
        %v3895 = vld [vmem:[#allocation16 + $0x3c] sm:$0xff]
        %v3896 = vld [vmem:[#allocation16 + $0x44] sm:$0xf]
        %v3897 = vld [vmem:[#allocation16 + $0x48] sm:$0xff]
        %v3898 = vld [vmem:[#allocation16 + $0x50] sm:$0xf]
        %v3899 = vld [vmem:[#allocation16 + $0x54] sm:$0xff]
        %v3900 = vld [vmem:[#allocation16 + $0x5c] sm:$0xf]
        %v3901 = vld [vmem:[#allocation16 + $0x60] sm:$0xff]
        %v3902 = vld [vmem:[#allocation16 + $0x68] sm:$0xf]
        %v3903 = vld [vmem:[#allocation16 + $0x6c] sm:$0xff]
        %v3904 = vld [vmem:[#allocation16 + $0x74] sm:$0xf]
        %v3905 = vld [vmem:[#allocation16 + $0x78] sm:$0xff]
        %v3906 = vld [vmem:[#allocation16 + $0x80] sm:$0xf]
        %v3907 = vld [vmem:[#allocation16 + $0x84] sm:$0xff]
        %v3908 = vld [vmem:[#allocation16 + $0x8c] sm:$0xf]
        %v3909 = vld [vmem:[#allocation16 + $0x90] sm:$0xff]
        %v3910 = vld [vmem:[#allocation16 + $0x98] sm:$0xf]
        %v3911 = vld [vmem:[#allocation16 + $0x9c] sm:$0xff]
        %v3912 = vld [vmem:[#allocation16 + $0xa4] sm:$0xf]
        %v3913 = vld [vmem:[#allocation16 + $0xa8] sm:$0xff]
        %v3914 = vld [vmem:[#allocation16 + $0xb0] sm:$0xf]
        %v3915 = vld [vmem:[#allocation16 + $0xb4] sm:$0xff]
        %v3916 = vld [vmem:[#allocation16 + $0xbc] sm:$0xf]
        %v3917 = vld [vmem:[#allocation16 + $0xc0] sm:$0xff]
        %v3918 = vld [vmem:[#allocation16 + $0xc8] sm:$0xf]
        %v3919 = vld [vmem:[#allocation16 + $0xcc] sm:$0xff]
        %v3920 = vld [vmem:[#allocation16 + $0xd4] sm:$0xf]
        %v3921 = vld [vmem:[#allocation16 + $0xd8] sm:$0xff]
        %v3922 = vld [vmem:[#allocation16 + $0xe0] sm:$0xf]
        %v3923 = vld [vmem:[#allocation16 + $0xe4] sm:$0xff]
        %v3924 = vld [vmem:[#allocation16 + $0xec] sm:$0xf]
        %v3925 = vld [vmem:[#allocation16 + $0xf0] sm:$0xff]
        %v3926 = vld [vmem:[#allocation16 + $0xf8] sm:$0xf]
        %v3927 = vld [vmem:[#allocation16 + $0xfc] sm:$0xff]
        %v3928 = vld [vmem:[#allocation16 + $0x104] sm:$0xf]
        %v3929 = vld [vmem:[#allocation16 + $0x108] sm:$0xff]
        %v3930 = vld [vmem:[#allocation16 + $0x110] sm:$0xf]
        %v3931 = vld [vmem:[#allocation16 + $0x114] sm:$0xff]
        %v3932 = vld [vmem:[#allocation16 + $0x11c] sm:$0xf]
        %v3933 = vld [vmem:[#allocation16 + $0x120] sm:$0xff]
        %v3934 = vld [vmem:[#allocation16 + $0x128] sm:$0xf]
        %v3935 = vld [vmem:[#allocation16 + $0x12c] sm:$0xff]
        %v3936 = vld [vmem:[#allocation16 + $0x134] sm:$0xf]
        %v3937 = vld [vmem:[#allocation16 + $0x138] sm:$0xff]
        %v3938 = vld [vmem:[#allocation16 + $0x140] sm:$0xf]
        %v3939 = vld [vmem:[#allocation16 + $0x144] sm:$0xff]
        %v3940 = vld [vmem:[#allocation16 + $0x14c] sm:$0xf]
        %v3941 = vld [vmem:[%s22] sm:$0x1]
        %v3942 = vpack.c.bf16 %v3840, %v3839
        %v3943 = vpack.c.bf16 %v3842, %v3841
        %v3944 = vpack.c.bf16 %v3844, %v3843
        %v3945 = vpack.c.bf16 %v3846, %v3845
        %v3946 = vpack.c.bf16 %v3848, %v3847
        %v3947 = vpack.c.bf16 %v3850, %v3849
        %v3948 = vpack.c.bf16 %v3852, %v3851
        %v3981 = vunpack.c.l.b16 %v3853
        %v3982 = vunpack.c.h.b16 %v3853
        %v3983 = vunpack.c.l.b16 %v3854
        %v3984 = vunpack.c.l.b16 %v3855
        %v3985 = vunpack.c.h.b16 %v3855
        %v3986 = vunpack.c.l.b16 %v3856
        %v3987 = vunpack.c.l.b16 %v3857
        %v3988 = vunpack.c.h.b16 %v3857
        %v3989 = vunpack.c.l.b16 %v3858
        %v3990 = vunpack.c.l.b16 %v3859
        %v3991 = vunpack.c.h.b16 %v3859
        %v3992 = vunpack.c.l.b16 %v3860
        %v3993 = vunpack.c.l.b16 %v3861
        %v3994 = vunpack.c.h.b16 %v3861
        %v3995 = vunpack.c.l.b16 %v3862
        %v3996 = vunpack.c.l.b16 %v3863
        %v3997 = vunpack.c.h.b16 %v3863
        %v3998 = vunpack.c.l.b16 %v3864
        %v3999 = vunpack.c.l.b16 %v3865
        %v4000 = vunpack.c.h.b16 %v3865
        %v4001 = vunpack.c.l.b16 %v3866
        %v4002 = vunpack.c.l.b16 %v3867
        %v4003 = vunpack.c.h.b16 %v3867
        %v4004 = vunpack.c.l.b16 %v3868
        %v4005 = vunpack.c.l.b16 %v3869
        %v4006 = vunpack.c.h.b16 %v3869
        %v4007 = vunpack.c.l.b16 %v3870
        %v4008 = vunpack.c.l.b16 %v3871
        %v4009 = vunpack.c.h.b16 %v3871
        %v4010 = vunpack.c.l.b16 %v3872
        %v4011 = vunpack.c.l.b16 %v3873
        %v4012 = vunpack.c.h.b16 %v3873
        %v4013 = vunpack.c.l.b16 %v3874
        %v4014 = vunpack.c.l.b16 %v3875
        %v4015 = vunpack.c.h.b16 %v3875
        %v4016 = vunpack.c.l.b16 %v3876
        %v4017 = vunpack.c.l.b16 %v3877
        %v4018 = vunpack.c.h.b16 %v3877
        %v4019 = vunpack.c.l.b16 %v3878
        %v4020 = vunpack.c.l.b16 %v3879
        %v4021 = vunpack.c.h.b16 %v3879
        %v4022 = vunpack.c.l.b16 %v3880
        %v4023 = vunpack.c.l.b16 %v3881
        %v4024 = vunpack.c.h.b16 %v3881
        %v4025 = vunpack.c.l.b16 %v3882
        %v4026 = vunpack.c.l.b16 %v3883
        %v4027 = vunpack.c.h.b16 %v3883
        %v4028 = vunpack.c.l.b16 %v3884
        %v4029 = vpack.c.b16 %v3984, %v3981
        %v4030 = vpack.c.b16 %v3985, %v3982
        %v4031 = vpack.c.b16 %v3986, %v3983
        %v4032 = vpack.c.b16 %v3990, %v3987
        %v4033 = vpack.c.b16 %v3991, %v3988
        %v4034 = vpack.c.b16 %v3992, %v3989
        %v4035 = vpack.c.b16 %v3996, %v3993
        %v4036 = vpack.c.b16 %v3997, %v3994
        %v4037 = vpack.c.b16 %v3998, %v3995
        %v4038 = vpack.c.b16 %v4002, %v3999
        %v4039 = vpack.c.b16 %v4003, %v4000
        %v4040 = vpack.c.b16 %v4004, %v4001
        %v4041 = vpack.c.b16 %v4008, %v4005
        %v4042 = vpack.c.b16 %v4009, %v4006
        %v4043 = vpack.c.b16 %v4010, %v4007
        %v4044 = vpack.c.b16 %v4014, %v4011
        %v4045 = vpack.c.b16 %v4015, %v4012
        %v4046 = vpack.c.b16 %v4016, %v4013
        %v4047 = vpack.c.b16 %v4020, %v4017
        %v4048 = vpack.c.b16 %v4021, %v4018
        %v4049 = vpack.c.b16 %v4022, %v4019
        %v4050 = vpack.c.b16 %v4026, %v4023
        %v4051 = vpack.c.b16 %v4027, %v4024
        %v4052 = vpack.c.b16 %v4028, %v4025
        %4077 = vmatpush.bf16.msra.mxu0 %v4050
        %4078 = vmatpush.bf16.msra.mxu0 %v4047
        %4079 = vmatpush.bf16.msra.mxu0 %v4044
        %4080 = vmatpush.bf16.msra.mxu0 %v4041
        %4081 = vmatpush.bf16.msra.mxu0 %v4038
        %4082 = vmatpush.bf16.msra.mxu0 %v4035
        %4083 = vmatpush.bf16.msra.mxu0 %v4032
        %4084 = vmatpush.bf16.msra.mxu0 %v4029
        %4085 = vmatmul.bf16.gmra.mxu0 %v3942
        %v4086 = vpop.f32.mrf.mxu0
        %v4087 = vadd.f32 0.0, %v4086
        %v4088 = vpop.f32.mrf.mxu0
        %v4089 = vadd.f32 0.0, %v4088
        %4090 = vmatmul.bf16.gmra.mxu0 %v3943
        %v4091 = vpop.f32.mrf.mxu0
        %v4092 = vadd.f32 0.0, %v4091
        %v4093 = vpop.f32.mrf.mxu0
        %v4094 = vadd.f32 0.0, %v4093
        %4095 = vmatmul.bf16.gmra.mxu0 %v3944
        %v4096 = vpop.f32.mrf.mxu0
        %v4097 = vadd.f32 0.0, %v4096
        %v4098 = vpop.f32.mrf.mxu0
        %v4099 = vadd.f32 0.0, %v4098
        %4100 = vmatmul.bf16.gmra.mxu0 %v3945
        %v4101 = vpop.f32.mrf.mxu0
        %v4102 = vadd.f32 0.0, %v4101
        %v4103 = vpop.f32.mrf.mxu0
        %v4104 = vadd.f32 0.0, %v4103
        %4105 = vmatmul.bf16.gmra.mxu0 %v3946
        %v4106 = vpop.f32.mrf.mxu0
        %v4107 = vadd.f32 0.0, %v4106
        %v4108 = vpop.f32.mrf.mxu0
        %v4109 = vadd.f32 0.0, %v4108
        %4110 = vmatmul.bf16.gmra.mxu0 %v3947
        %v4111 = vpop.f32.mrf.mxu0
        %v4112 = vadd.f32 0.0, %v4111
        %v4113 = vpop.f32.mrf.mxu0
        %v4114 = vadd.f32 0.0, %v4113
        %4115 = vmatmul.bf16.gmra.mxu0 %v3948
        %v4116 = vpop.f32.mrf.mxu0
        %v4117 = vadd.f32 0.0, %v4116
        %v4118 = vpop.f32.mrf.mxu0
        %v4119 = vadd.f32 0.0, %v4118
        %4120 = vdwg.mxu0
        %4121 = vmatpush.bf16.msra.mxu0 %v4051
        %4122 = vmatpush.bf16.msra.mxu0 %v4048
        %4123 = vmatpush.bf16.msra.mxu0 %v4045
        %4124 = vmatpush.bf16.msra.mxu0 %v4042
        %4125 = vmatpush.bf16.msra.mxu0 %v4039
        %4126 = vmatpush.bf16.msra.mxu0 %v4036
        %4127 = vmatpush.bf16.msra.mxu0 %v4033
        %4128 = vmatpush.bf16.msra.mxu0 %v4030
        %4129 = vmatmul.bf16.gmra.mxu0 %v3942
        %v4130 = vpop.f32.mrf.mxu0
        %v4131 = vadd.f32 0.0, %v4130
        %v4132 = vpop.f32.mrf.mxu0
        %v4133 = vadd.f32 0.0, %v4132
        %4134 = vmatmul.bf16.gmra.mxu0 %v3943
        %v4135 = vpop.f32.mrf.mxu0
        %v4136 = vadd.f32 0.0, %v4135
        %v4137 = vpop.f32.mrf.mxu0
        %v4138 = vadd.f32 0.0, %v4137
        %4139 = vmatmul.bf16.gmra.mxu0 %v3944
        %v4140 = vpop.f32.mrf.mxu0
        %v4141 = vadd.f32 0.0, %v4140
        %v4142 = vpop.f32.mrf.mxu0
        %v4143 = vadd.f32 0.0, %v4142
        %4144 = vmatmul.bf16.gmra.mxu0 %v3945
        %v4145 = vpop.f32.mrf.mxu0
        %v4146 = vadd.f32 0.0, %v4145
        %v4147 = vpop.f32.mrf.mxu0
        %v4148 = vadd.f32 0.0, %v4147
        %4149 = vmatmul.bf16.gmra.mxu0 %v3946
        %v4150 = vpop.f32.mrf.mxu0
        %v4151 = vadd.f32 0.0, %v4150
        %v4152 = vpop.f32.mrf.mxu0
        %v4153 = vadd.f32 0.0, %v4152
        %4154 = vmatmul.bf16.gmra.mxu0 %v3947
        %v4155 = vpop.f32.mrf.mxu0
        %v4156 = vadd.f32 0.0, %v4155
        %v4157 = vpop.f32.mrf.mxu0
        %v4158 = vadd.f32 0.0, %v4157
        %4159 = vmatmul.bf16.gmra.mxu0 %v3948
        %v4160 = vpop.f32.mrf.mxu0
        %v4161 = vadd.f32 0.0, %v4160
        %v4162 = vpop.f32.mrf.mxu0
        %v4163 = vadd.f32 0.0, %v4162
        %4164 = vdwg.mxu0
        %4165 = vmatpush.bf16.msra.mxu0 %v4052
        %4166 = vmatpush.bf16.msra.mxu0 %v4049
        %4167 = vmatpush.bf16.msra.mxu0 %v4046
        %4168 = vmatpush.bf16.msra.mxu0 %v4043
        %4169 = vmatpush.bf16.msra.mxu0 %v4040
        %4170 = vmatpush.bf16.msra.mxu0 %v4037
        %4171 = vmatpush.bf16.msra.mxu0 %v4034
        %4172 = vmatpush.bf16.msra.mxu0 %v4031
        %4173 = vmatmul.bf16.gmra.mxu0 %v3942
        %v4174 = vpop.f32.mrf.mxu0
        %v4175 = vadd.f32 0.0, %v4174
        %v4176 = vpop.f32.mrf.mxu0
        %v4177 = vadd.f32 0.0, %v4176
        %4178 = vmatmul.bf16.gmra.mxu0 %v3943
        %v4179 = vpop.f32.mrf.mxu0
        %v4180 = vadd.f32 0.0, %v4179
        %v4181 = vpop.f32.mrf.mxu0
        %v4182 = vadd.f32 0.0, %v4181
        %4183 = vmatmul.bf16.gmra.mxu0 %v3944
        %v4184 = vpop.f32.mrf.mxu0
        %v4185 = vadd.f32 0.0, %v4184
        %v4186 = vpop.f32.mrf.mxu0
        %v4187 = vadd.f32 0.0, %v4186
        %4188 = vmatmul.bf16.gmra.mxu0 %v3945
        %v4189 = vpop.f32.mrf.mxu0
        %v4190 = vadd.f32 0.0, %v4189
        %v4191 = vpop.f32.mrf.mxu0
        %v4192 = vadd.f32 0.0, %v4191
        %4193 = vmatmul.bf16.gmra.mxu0 %v3946
        %v4194 = vpop.f32.mrf.mxu0
        %v4195 = vadd.f32 0.0, %v4194
        %v4196 = vpop.f32.mrf.mxu0
        %v4197 = vadd.f32 0.0, %v4196
        %4198 = vmatmul.bf16.gmra.mxu0 %v3947
        %v4199 = vpop.f32.mrf.mxu0
        %v4200 = vadd.f32 0.0, %v4199
        %v4201 = vpop.f32.mrf.mxu0
        %v4202 = vadd.f32 0.0, %v4201
        %4203 = vmatmul.bf16.gmra.mxu0 %v3948
        %v4204 = vpop.f32.mrf.mxu0
        %v4205 = vadd.f32 0.0, %v4204
        %v4206 = vpop.f32.mrf.mxu0
        %v4207 = vadd.f32 0.0, %v4206
        %4208 = vdwg.mxu0
        %v4209 = vpack.c.bf16 %v4089, %v4087
        %v4210 = vpack.c.bf16 %v4094, %v4092
        %v4211 = vpack.c.bf16 %v4099, %v4097
        %v4212 = vpack.c.bf16 %v4104, %v4102
        %v4213 = vpack.c.bf16 %v4109, %v4107
        %v4214 = vpack.c.bf16 %v4114, %v4112
        %v4215 = vpack.c.bf16 %v4119, %v4117
        %v4216 = vpack.c.bf16 %v4133, %v4131
        %v4217 = vpack.c.bf16 %v4138, %v4136
        %v4218 = vpack.c.bf16 %v4143, %v4141
        %v4219 = vpack.c.bf16 %v4148, %v4146
        %v4220 = vpack.c.bf16 %v4153, %v4151
        %v4221 = vpack.c.bf16 %v4158, %v4156
        %v4222 = vpack.c.bf16 %v4163, %v4161
        %v4223 = vpack.c.bf16 %v4177, %v4175
        %v4224 = vpack.c.bf16 %v4182, %v4180
        %v4225 = vpack.c.bf16 %v4187, %v4185
        %v4226 = vpack.c.bf16 %v4192, %v4190
        %v4227 = vpack.c.bf16 %v4197, %v4195
        %v4228 = vpack.c.bf16 %v4202, %v4200
        %v4229 = vpack.c.bf16 %v4207, %v4205
        %v4231 = vperm.slane %v3941, 0
        %v4289 = vunpack.c.l.b16 %v3885
        %v4290 = vunpack.c.h.b16 %v3885
        %v4291 = vunpack.c.l.b16 %v3886
        %v4292 = vunpack.c.l.b16 %v3887
        %v4293 = vunpack.c.h.b16 %v3887
        %v4294 = vunpack.c.l.b16 %v3888
        %v4295 = vunpack.c.l.b16 %v3889
        %v4296 = vunpack.c.h.b16 %v3889
        %v4297 = vunpack.c.l.b16 %v3890
        %v4298 = vunpack.c.l.b16 %v3891
        %v4299 = vunpack.c.h.b16 %v3891
        %v4300 = vunpack.c.l.b16 %v3892
        %v4301 = vunpack.c.l.b16 %v3893
        %v4302 = vunpack.c.h.b16 %v3893
        %v4303 = vunpack.c.l.b16 %v3894
        %v4304 = vunpack.c.l.b16 %v3895
        %v4305 = vunpack.c.h.b16 %v3895
        %v4306 = vunpack.c.l.b16 %v3896
        %v4307 = vunpack.c.l.b16 %v3897
        %v4308 = vunpack.c.h.b16 %v3897
        %v4309 = vunpack.c.l.b16 %v3898
        %v4310 = vunpack.c.l.b16 %v3899
        %v4311 = vunpack.c.h.b16 %v3899
        %v4312 = vunpack.c.l.b16 %v3900
        %v4313 = vunpack.c.l.b16 %v3901
        %v4314 = vunpack.c.h.b16 %v3901
        %v4315 = vunpack.c.l.b16 %v3902
        %v4316 = vunpack.c.l.b16 %v3903
        %v4317 = vunpack.c.h.b16 %v3903
        %v4318 = vunpack.c.l.b16 %v3904
        %v4319 = vunpack.c.l.b16 %v3905
        %v4320 = vunpack.c.h.b16 %v3905
        %v4321 = vunpack.c.l.b16 %v3906
        %v4322 = vunpack.c.l.b16 %v3907
        %v4323 = vunpack.c.h.b16 %v3907
        %v4324 = vunpack.c.l.b16 %v3908
        %v4325 = vunpack.c.l.b16 %v3909
        %v4326 = vunpack.c.h.b16 %v3909
        %v4327 = vunpack.c.l.b16 %v3910
        %v4328 = vunpack.c.l.b16 %v3911
        %v4329 = vunpack.c.h.b16 %v3911
        %v4330 = vunpack.c.l.b16 %v3912
        %v4331 = vunpack.c.l.b16 %v3913
        %v4332 = vunpack.c.h.b16 %v3913
        %v4333 = vunpack.c.l.b16 %v3914
        %v4334 = vunpack.c.l.b16 %v3915
        %v4335 = vunpack.c.h.b16 %v3915
        %v4336 = vunpack.c.l.b16 %v3916
        %v4337 = vunpack.c.l.b16 %v3917
        %v4338 = vunpack.c.h.b16 %v3917
        %v4339 = vunpack.c.l.b16 %v3918
        %v4340 = vunpack.c.l.b16 %v3919
        %v4341 = vunpack.c.h.b16 %v3919
        %v4342 = vunpack.c.l.b16 %v3920
        %v4343 = vunpack.c.l.b16 %v3921
        %v4344 = vunpack.c.h.b16 %v3921
        %v4345 = vunpack.c.l.b16 %v3922
        %v4346 = vunpack.c.l.b16 %v3923
        %v4347 = vunpack.c.h.b16 %v3923
        %v4348 = vunpack.c.l.b16 %v3924
        %v4349 = vunpack.c.l.b16 %v3925
        %v4350 = vunpack.c.h.b16 %v3925
        %v4351 = vunpack.c.l.b16 %v3926
        %v4352 = vunpack.c.l.b16 %v3927
        %v4353 = vunpack.c.h.b16 %v3927
        %v4354 = vunpack.c.l.b16 %v3928
        %v4355 = vunpack.c.l.b16 %v3929
        %v4356 = vunpack.c.h.b16 %v3929
        %v4357 = vunpack.c.l.b16 %v3930
        %v4358 = vunpack.c.l.b16 %v3931
        %v4359 = vunpack.c.h.b16 %v3931
        %v4360 = vunpack.c.l.b16 %v3932
        %v4361 = vunpack.c.l.b16 %v3933
        %v4362 = vunpack.c.h.b16 %v3933
        %v4363 = vunpack.c.l.b16 %v3934
        %v4364 = vunpack.c.l.b16 %v3935
        %v4365 = vunpack.c.h.b16 %v3935
        %v4366 = vunpack.c.l.b16 %v3936
        %v4367 = vunpack.c.l.b16 %v3937
        %v4368 = vunpack.c.h.b16 %v3937
        %v4369 = vunpack.c.l.b16 %v3938
        %v4370 = vunpack.c.l.b16 %v3939
        %v4371 = vunpack.c.h.b16 %v3939
        %v4372 = vunpack.c.l.b16 %v3940
        %v4373 = vpack.c.b16 %v4292, %v4289
        %v4374 = vpack.c.b16 %v4293, %v4290
        %v4375 = vpack.c.b16 %v4294, %v4291
        %v4376 = vpack.c.b16 %v4298, %v4295
        %v4377 = vpack.c.b16 %v4299, %v4296
        %v4378 = vpack.c.b16 %v4300, %v4297
        %v4379 = vpack.c.b16 %v4304, %v4301
        %v4380 = vpack.c.b16 %v4305, %v4302
        %v4381 = vpack.c.b16 %v4306, %v4303
        %v4382 = vpack.c.b16 %v4310, %v4307
        %v4383 = vpack.c.b16 %v4311, %v4308
        %v4384 = vpack.c.b16 %v4312, %v4309
        %v4385 = vpack.c.b16 %v4316, %v4313
        %v4386 = vpack.c.b16 %v4317, %v4314
        %v4387 = vpack.c.b16 %v4318, %v4315
        %v4388 = vpack.c.b16 %v4322, %v4319
        %v4389 = vpack.c.b16 %v4323, %v4320
        %v4390 = vpack.c.b16 %v4324, %v4321
        %v4391 = vpack.c.b16 %v4328, %v4325
        %v4392 = vpack.c.b16 %v4329, %v4326
        %v4393 = vpack.c.b16 %v4330, %v4327
        %v4394 = vpack.c.b16 %v4334, %v4331
        %v4395 = vpack.c.b16 %v4335, %v4332
        %v4396 = vpack.c.b16 %v4336, %v4333
        %v4397 = vpack.c.b16 %v4340, %v4337
        %v4398 = vpack.c.b16 %v4341, %v4338
        %v4399 = vpack.c.b16 %v4342, %v4339
        %v4400 = vpack.c.b16 %v4346, %v4343
        %v4401 = vpack.c.b16 %v4347, %v4344
        %v4402 = vpack.c.b16 %v4348, %v4345
        %v4403 = vpack.c.b16 %v4352, %v4349
        %v4404 = vpack.c.b16 %v4353, %v4350
        %v4405 = vpack.c.b16 %v4354, %v4351
        %v4406 = vpack.c.b16 %v4358, %v4355
        %v4407 = vpack.c.b16 %v4359, %v4356
        %v4408 = vpack.c.b16 %v4360, %v4357
        %v4409 = vpack.c.b16 %v4364, %v4361
        %v4410 = vpack.c.b16 %v4365, %v4362
        %v4411 = vpack.c.b16 %v4366, %v4363
        %v4412 = vpack.c.b16 %v4370, %v4367
        %v4413 = vpack.c.b16 %v4371, %v4368
        %v4414 = vpack.c.b16 %v4372, %v4369
        %vm4443 = vcmask 654336
        %v4445 = vsel %vm4443, %v4375, 0
        %v4448 = vsel %vm4443, %v4378, 0
        %v4451 = vsel %vm4443, %v4381, 0
        %v4454 = vsel %vm4443, %v4384, 0
        %v4457 = vsel %vm4443, %v4387, 0
        %v4460 = vsel %vm4443, %v4390, 0
        %v4463 = vsel %vm4443, %v4393, 0
        %v4466 = vsel %vm4443, %v4396, 0
        %v4469 = vsel %vm4443, %v4399, 0
        %v4472 = vsel %vm4443, %v4402, 0
        %v4475 = vsel %vm4443, %v4405, 0
        %v4478 = vsel %vm4443, %v4408, 0
        %v4481 = vsel %vm4443, %v4411, 0
        %v4484 = vsel %vm4443, %v4414, 0
        %4486 = vmatpush.bf16.msra.mxu0 %v4216
        %4487 = vmatpush.bf16.msra.mxu0 %v4215
        %4488 = vmatpush.bf16.msra.mxu0 %v4214
        %4489 = vmatpush.bf16.msra.mxu0 %v4213
        %4490 = vmatpush.bf16.msra.mxu0 %v4212
        %4491 = vmatpush.bf16.msra.mxu0 %v4211
        %4492 = vmatpush.bf16.msra.mxu0 %v4210
        %4493 = vmatpush.bf16.msra.mxu0 %v4209
        %4494 = vmatmul.bf16.gmra.mxu0 %v4373
        %v4495 = vpop.f32.mrf.mxu0
        %v4496 = vadd.f32 %v4231, %v4495
        %v4497 = vpop.f32.mrf.mxu0
        %v4498 = vadd.f32 %v4231, %v4497
        %4499 = vmatmul.bf16.gmra.mxu0 %v4376
        %v4500 = vpop.f32.mrf.mxu0
        %v4501 = vadd.f32 %v4231, %v4500
        %v4502 = vpop.f32.mrf.mxu0
        %v4503 = vadd.f32 %v4231, %v4502
        %4504 = vmatmul.bf16.gmra.mxu0 %v4379
        %v4505 = vpop.f32.mrf.mxu0
        %v4506 = vadd.f32 %v4231, %v4505
        %v4507 = vpop.f32.mrf.mxu0
        %v4508 = vadd.f32 %v4231, %v4507
        %4509 = vmatmul.bf16.gmra.mxu0 %v4382
        %v4510 = vpop.f32.mrf.mxu0
        %v4511 = vadd.f32 %v4231, %v4510
        %v4512 = vpop.f32.mrf.mxu0
        %v4513 = vadd.f32 %v4231, %v4512
        %4514 = vmatmul.bf16.gmra.mxu0 %v4385
        %v4515 = vpop.f32.mrf.mxu0
        %v4516 = vadd.f32 %v4231, %v4515
        %v4517 = vpop.f32.mrf.mxu0
        %v4518 = vadd.f32 %v4231, %v4517
        %4519 = vmatmul.bf16.gmra.mxu0 %v4388
        %v4520 = vpop.f32.mrf.mxu0
        %v4521 = vadd.f32 %v4231, %v4520
        %v4522 = vpop.f32.mrf.mxu0
        %v4523 = vadd.f32 %v4231, %v4522
        %4524 = vmatmul.bf16.gmra.mxu0 %v4391
        %v4525 = vpop.f32.mrf.mxu0
        %v4526 = vadd.f32 %v4231, %v4525
        %v4527 = vpop.f32.mrf.mxu0
        %v4528 = vadd.f32 %v4231, %v4527
        %4529 = vmatmul.bf16.gmra.mxu0 %v4394
        %v4530 = vpop.f32.mrf.mxu0
        %v4531 = vadd.f32 %v4231, %v4530
        %v4532 = vpop.f32.mrf.mxu0
        %v4533 = vadd.f32 %v4231, %v4532
        %4534 = vmatmul.bf16.gmra.mxu0 %v4397
        %v4535 = vpop.f32.mrf.mxu0
        %v4536 = vadd.f32 %v4231, %v4535
        %v4537 = vpop.f32.mrf.mxu0
        %v4538 = vadd.f32 %v4231, %v4537
        %4539 = vmatmul.bf16.gmra.mxu0 %v4400
        %v4540 = vpop.f32.mrf.mxu0
        %v4541 = vadd.f32 %v4231, %v4540
        %v4542 = vpop.f32.mrf.mxu0
        %v4543 = vadd.f32 %v4231, %v4542
        %4544 = vmatmul.bf16.gmra.mxu0 %v4403
        %v4545 = vpop.f32.mrf.mxu0
        %v4546 = vadd.f32 %v4231, %v4545
        %v4547 = vpop.f32.mrf.mxu0
        %v4548 = vadd.f32 %v4231, %v4547
        %4549 = vmatmul.bf16.gmra.mxu0 %v4406
        %v4550 = vpop.f32.mrf.mxu0
        %v4551 = vadd.f32 %v4231, %v4550
        %v4552 = vpop.f32.mrf.mxu0
        %v4553 = vadd.f32 %v4231, %v4552
        %4554 = vmatmul.bf16.gmra.mxu0 %v4409
        %v4555 = vpop.f32.mrf.mxu0
        %v4556 = vadd.f32 %v4231, %v4555
        %v4557 = vpop.f32.mrf.mxu0
        %v4558 = vadd.f32 %v4231, %v4557
        %4559 = vmatmul.bf16.gmra.mxu0 %v4412
        %v4560 = vpop.f32.mrf.mxu0
        %v4561 = vadd.f32 %v4231, %v4560
        %v4562 = vpop.f32.mrf.mxu0
        %v4563 = vadd.f32 %v4231, %v4562
        %4564 = vdwg.mxu0
        %4565 = vmatpush.bf16.msra.mxu0 %v4224
        %4566 = vmatpush.bf16.msra.mxu0 %v4223
        %4567 = vmatpush.bf16.msra.mxu0 %v4222
        %4568 = vmatpush.bf16.msra.mxu0 %v4221
        %4569 = vmatpush.bf16.msra.mxu0 %v4220
        %4570 = vmatpush.bf16.msra.mxu0 %v4219
        %4571 = vmatpush.bf16.msra.mxu0 %v4218
        %4572 = vmatpush.bf16.msra.mxu0 %v4217
        %4573 = vmatmul.bf16.gmra.mxu0 %v4374
        %v4574 = vpop.f32.mrf.mxu0
        %v4575 = vadd.f32 %v4496, %v4574
        %v4576 = vpop.f32.mrf.mxu0
        %v4577 = vadd.f32 %v4498, %v4576
        %4578 = vmatmul.bf16.gmra.mxu0 %v4377
        %v4579 = vpop.f32.mrf.mxu0
        %v4580 = vadd.f32 %v4501, %v4579
        %v4581 = vpop.f32.mrf.mxu0
        %v4582 = vadd.f32 %v4503, %v4581
        %4583 = vmatmul.bf16.gmra.mxu0 %v4380
        %v4584 = vpop.f32.mrf.mxu0
        %v4585 = vadd.f32 %v4506, %v4584
        %v4586 = vpop.f32.mrf.mxu0
        %v4587 = vadd.f32 %v4508, %v4586
        %4588 = vmatmul.bf16.gmra.mxu0 %v4383
        %v4589 = vpop.f32.mrf.mxu0
        %v4590 = vadd.f32 %v4511, %v4589
        %v4591 = vpop.f32.mrf.mxu0
        %v4592 = vadd.f32 %v4513, %v4591
        %4593 = vmatmul.bf16.gmra.mxu0 %v4386
        %v4594 = vpop.f32.mrf.mxu0
        %v4595 = vadd.f32 %v4516, %v4594
        %v4596 = vpop.f32.mrf.mxu0
        %v4597 = vadd.f32 %v4518, %v4596
        %4598 = vmatmul.bf16.gmra.mxu0 %v4389
        %v4599 = vpop.f32.mrf.mxu0
        %v4600 = vadd.f32 %v4521, %v4599
        %v4601 = vpop.f32.mrf.mxu0
        %v4602 = vadd.f32 %v4523, %v4601
        %4603 = vmatmul.bf16.gmra.mxu0 %v4392
        %v4604 = vpop.f32.mrf.mxu0
        %v4605 = vadd.f32 %v4526, %v4604
        %v4606 = vpop.f32.mrf.mxu0
        %v4607 = vadd.f32 %v4528, %v4606
        %4608 = vmatmul.bf16.gmra.mxu0 %v4395
        %v4609 = vpop.f32.mrf.mxu0
        %v4610 = vadd.f32 %v4531, %v4609
        %v4611 = vpop.f32.mrf.mxu0
        %v4612 = vadd.f32 %v4533, %v4611
        %4613 = vmatmul.bf16.gmra.mxu0 %v4398
        %v4614 = vpop.f32.mrf.mxu0
        %v4615 = vadd.f32 %v4536, %v4614
        %v4616 = vpop.f32.mrf.mxu0
        %v4617 = vadd.f32 %v4538, %v4616
        %4618 = vmatmul.bf16.gmra.mxu0 %v4401
        %v4619 = vpop.f32.mrf.mxu0
        %v4620 = vadd.f32 %v4541, %v4619
        %v4621 = vpop.f32.mrf.mxu0
        %v4622 = vadd.f32 %v4543, %v4621
        %4623 = vmatmul.bf16.gmra.mxu0 %v4404
        %v4624 = vpop.f32.mrf.mxu0
        %v4625 = vadd.f32 %v4546, %v4624
        %v4626 = vpop.f32.mrf.mxu0
        %v4627 = vadd.f32 %v4548, %v4626
        %4628 = vmatmul.bf16.gmra.mxu0 %v4407
        %v4629 = vpop.f32.mrf.mxu0
        %v4630 = vadd.f32 %v4551, %v4629
        %v4631 = vpop.f32.mrf.mxu0
        %v4632 = vadd.f32 %v4553, %v4631
        %4633 = vmatmul.bf16.gmra.mxu0 %v4410
        %v4634 = vpop.f32.mrf.mxu0
        %v4635 = vadd.f32 %v4556, %v4634
        %v4636 = vpop.f32.mrf.mxu0
        %v4637 = vadd.f32 %v4558, %v4636
        %4638 = vmatmul.bf16.gmra.mxu0 %v4413
        %v4639 = vpop.f32.mrf.mxu0
        %v4640 = vadd.f32 %v4561, %v4639
        %v4641 = vpop.f32.mrf.mxu0
        %v4642 = vadd.f32 %v4563, %v4641
        %4643 = vdwg.mxu0
        %4644 = vmatpush.bf16.msra.mxu0 0
        %4645 = vmatpush.bf16.msra.mxu0 0
        %4646 = vmatpush.bf16.msra.mxu0 0
        %4647 = vmatpush.bf16.msra.mxu0 %v4229
        %4648 = vmatpush.bf16.msra.mxu0 %v4228
        %4649 = vmatpush.bf16.msra.mxu0 %v4227
        %4650 = vmatpush.bf16.msra.mxu0 %v4226
        %4651 = vmatpush.bf16.msra.mxu0 %v4225
        %4652 = vmatmul.bf16.gmra.mxu0 %v4445
        %v4653 = vpop.f32.mrf.mxu0
        %v4654 = vadd.f32 %v4575, %v4653
        %v4655 = vpop.f32.mrf.mxu0
        %v4656 = vadd.f32 %v4577, %v4655
        %4657 = vmatmul.bf16.gmra.mxu0 %v4448
        %v4658 = vpop.f32.mrf.mxu0
        %v4659 = vadd.f32 %v4580, %v4658
        %v4660 = vpop.f32.mrf.mxu0
        %v4661 = vadd.f32 %v4582, %v4660
        %4662 = vmatmul.bf16.gmra.mxu0 %v4451
        %v4663 = vpop.f32.mrf.mxu0
        %v4664 = vadd.f32 %v4585, %v4663
        %v4665 = vpop.f32.mrf.mxu0
        %v4666 = vadd.f32 %v4587, %v4665
        %4667 = vmatmul.bf16.gmra.mxu0 %v4454
        %v4668 = vpop.f32.mrf.mxu0
        %v4669 = vadd.f32 %v4590, %v4668
        %v4670 = vpop.f32.mrf.mxu0
        %v4671 = vadd.f32 %v4592, %v4670
        %4672 = vmatmul.bf16.gmra.mxu0 %v4457
        %v4673 = vpop.f32.mrf.mxu0
        %v4674 = vadd.f32 %v4595, %v4673
        %v4675 = vpop.f32.mrf.mxu0
        %v4676 = vadd.f32 %v4597, %v4675
        %4677 = vmatmul.bf16.gmra.mxu0 %v4460
        %v4678 = vpop.f32.mrf.mxu0
        %v4679 = vadd.f32 %v4600, %v4678
        %v4680 = vpop.f32.mrf.mxu0
        %v4681 = vadd.f32 %v4602, %v4680
        %4682 = vmatmul.bf16.gmra.mxu0 %v4463
        %v4683 = vpop.f32.mrf.mxu0
        %v4684 = vadd.f32 %v4605, %v4683
        %v4685 = vpop.f32.mrf.mxu0
        %v4686 = vadd.f32 %v4607, %v4685
        %4687 = vmatmul.bf16.gmra.mxu0 %v4466
        %v4688 = vpop.f32.mrf.mxu0
        %v4689 = vadd.f32 %v4610, %v4688
        %v4690 = vpop.f32.mrf.mxu0
        %v4691 = vadd.f32 %v4612, %v4690
        %4692 = vmatmul.bf16.gmra.mxu0 %v4469
        %v4693 = vpop.f32.mrf.mxu0
        %v4694 = vadd.f32 %v4615, %v4693
        %v4695 = vpop.f32.mrf.mxu0
        %v4696 = vadd.f32 %v4617, %v4695
        %4697 = vmatmul.bf16.gmra.mxu0 %v4472
        %v4698 = vpop.f32.mrf.mxu0
        %v4699 = vadd.f32 %v4620, %v4698
        %v4700 = vpop.f32.mrf.mxu0
        %v4701 = vadd.f32 %v4622, %v4700
        %4702 = vmatmul.bf16.gmra.mxu0 %v4475
        %v4703 = vpop.f32.mrf.mxu0
        %v4704 = vadd.f32 %v4625, %v4703
        %v4705 = vpop.f32.mrf.mxu0
        %v4706 = vadd.f32 %v4627, %v4705
        %4707 = vmatmul.bf16.gmra.mxu0 %v4478
        %v4708 = vpop.f32.mrf.mxu0
        %v4709 = vadd.f32 %v4630, %v4708
        %v4710 = vpop.f32.mrf.mxu0
        %v4711 = vadd.f32 %v4632, %v4710
        %4712 = vmatmul.bf16.gmra.mxu0 %v4481
        %v4713 = vpop.f32.mrf.mxu0
        %v4714 = vadd.f32 %v4635, %v4713
        %v4715 = vpop.f32.mrf.mxu0
        %v4716 = vadd.f32 %v4637, %v4715
        %4717 = vmatmul.bf16.gmra.mxu0 %v4484
        %v4718 = vpop.f32.mrf.mxu0
        %v4719 = vadd.f32 %v4640, %v4718
        %v4720 = vpop.f32.mrf.mxu0
        %v4721 = vadd.f32 %v4642, %v4720
        %4722 = vdwg.mxu0
        %v4723 = vsub.f32 0.0, %v4654
        %v4724 = vsub.f32 0.0, %v4656
        %v4725 = vsub.f32 0.0, %v4659
        %v4726 = vsub.f32 0.0, %v4661
        %v4727 = vsub.f32 0.0, %v4664
        %v4728 = vsub.f32 0.0, %v4666
        %v4729 = vsub.f32 0.0, %v4669
        %v4730 = vsub.f32 0.0, %v4671
        %v4731 = vsub.f32 0.0, %v4674
        %v4732 = vsub.f32 0.0, %v4676
        %v4733 = vsub.f32 0.0, %v4679
        %v4734 = vsub.f32 0.0, %v4681
        %v4735 = vsub.f32 0.0, %v4684
        %v4736 = vsub.f32 0.0, %v4686
        %v4737 = vsub.f32 0.0, %v4689
        %v4738 = vsub.f32 0.0, %v4691
        %v4739 = vsub.f32 0.0, %v4694
        %v4740 = vsub.f32 0.0, %v4696
        %v4741 = vsub.f32 0.0, %v4699
        %v4742 = vsub.f32 0.0, %v4701
        %v4743 = vsub.f32 0.0, %v4704
        %v4744 = vsub.f32 0.0, %v4706
        %v4745 = vsub.f32 0.0, %v4709
        %v4746 = vsub.f32 0.0, %v4711
        %v4747 = vsub.f32 0.0, %v4714
        %v4748 = vsub.f32 0.0, %v4716
        %v4749 = vsub.f32 0.0, %v4719
        %v4750 = vsub.f32 0.0, %v4721
        %v4751 = vmul.f32 %v4723, 1.442695
        %v4752 = vpow.pop %v4751
        %v4753 = vmul.f32 %v4724, 1.442695
        %v4754 = vpow.pop %v4753
        %v4755 = vmul.f32 %v4725, 1.442695
        %v4756 = vpow.pop %v4755
        %v4757 = vmul.f32 %v4726, 1.442695
        %v4758 = vpow.pop %v4757
        %v4759 = vmul.f32 %v4727, 1.442695
        %v4760 = vpow.pop %v4759
        %v4761 = vmul.f32 %v4728, 1.442695
        %v4762 = vpow.pop %v4761
        %v4763 = vmul.f32 %v4729, 1.442695
        %v4764 = vpow.pop %v4763
        %v4765 = vmul.f32 %v4730, 1.442695
        %v4766 = vpow.pop %v4765
        %v4767 = vmul.f32 %v4731, 1.442695
        %v4768 = vpow.pop %v4767
        %v4769 = vmul.f32 %v4732, 1.442695
        %v4770 = vpow.pop %v4769
        %v4771 = vmul.f32 %v4733, 1.442695
        %v4772 = vpow.pop %v4771
        %v4773 = vmul.f32 %v4734, 1.442695
        %v4774 = vpow.pop %v4773
        %v4775 = vmul.f32 %v4735, 1.442695
        %v4776 = vpow.pop %v4775
        %v4777 = vmul.f32 %v4736, 1.442695
        %v4778 = vpow.pop %v4777
        %v4779 = vmul.f32 %v4737, 1.442695
        %v4780 = vpow.pop %v4779
        %v4781 = vmul.f32 %v4738, 1.442695
        %v4782 = vpow.pop %v4781
        %v4783 = vmul.f32 %v4739, 1.442695
        %v4784 = vpow.pop %v4783
        %v4785 = vmul.f32 %v4740, 1.442695
        %v4786 = vpow.pop %v4785
        %v4787 = vmul.f32 %v4741, 1.442695
        %v4788 = vpow.pop %v4787
        %v4789 = vmul.f32 %v4742, 1.442695
        %v4790 = vpow.pop %v4789
        %v4791 = vmul.f32 %v4743, 1.442695
        %v4792 = vpow.pop %v4791
        %v4793 = vmul.f32 %v4744, 1.442695
        %v4794 = vpow.pop %v4793
        %v4795 = vmul.f32 %v4745, 1.442695
        %v4796 = vpow.pop %v4795
        %v4797 = vmul.f32 %v4746, 1.442695
        %v4798 = vpow.pop %v4797
        %v4799 = vmul.f32 %v4747, 1.442695
        %v4800 = vpow.pop %v4799
        %v4801 = vmul.f32 %v4748, 1.442695
        %v4802 = vpow.pop %v4801
        %v4803 = vmul.f32 %v4749, 1.442695
        %v4804 = vpow.pop %v4803
        %v4805 = vmul.f32 %v4750, 1.442695
        %v4806 = vpow.pop %v4805
        %v4807 = vadd.f32 %v4752, 1.0
        %v4808 = vadd.f32 %v4754, 1.0
        %v4809 = vadd.f32 %v4756, 1.0
        %v4810 = vadd.f32 %v4758, 1.0
        %v4811 = vadd.f32 %v4760, 1.0
        %v4812 = vadd.f32 %v4762, 1.0
        %v4813 = vadd.f32 %v4764, 1.0
        %v4814 = vadd.f32 %v4766, 1.0
        %v4815 = vadd.f32 %v4768, 1.0
        %v4816 = vadd.f32 %v4770, 1.0
        %v4817 = vadd.f32 %v4772, 1.0
        %v4818 = vadd.f32 %v4774, 1.0
        %v4819 = vadd.f32 %v4776, 1.0
        %v4820 = vadd.f32 %v4778, 1.0
        %v4821 = vadd.f32 %v4780, 1.0
        %v4822 = vadd.f32 %v4782, 1.0
        %v4823 = vadd.f32 %v4784, 1.0
        %v4824 = vadd.f32 %v4786, 1.0
        %v4825 = vadd.f32 %v4788, 1.0
        %v4826 = vadd.f32 %v4790, 1.0
        %v4827 = vadd.f32 %v4792, 1.0
        %v4828 = vadd.f32 %v4794, 1.0
        %v4829 = vadd.f32 %v4796, 1.0
        %v4830 = vadd.f32 %v4798, 1.0
        %v4831 = vadd.f32 %v4800, 1.0
        %v4832 = vadd.f32 %v4802, 1.0
        %v4833 = vadd.f32 %v4804, 1.0
        %v4834 = vadd.f32 %v4806, 1.0
        %v4835 = vrcp.pop %v4807
        %v4836 = vrcp.pop %v4808
        %v4837 = vrcp.pop %v4809
        %v4838 = vrcp.pop %v4810
        %v4839 = vrcp.pop %v4811
        %v4840 = vrcp.pop %v4812
        %v4841 = vrcp.pop %v4813
        %v4842 = vrcp.pop %v4814
        %v4843 = vrcp.pop %v4815
        %v4844 = vrcp.pop %v4816
        %v4845 = vrcp.pop %v4817
        %v4846 = vrcp.pop %v4818
        %v4847 = vrcp.pop %v4819
        %v4848 = vrcp.pop %v4820
        %v4849 = vrcp.pop %v4821
        %v4850 = vrcp.pop %v4822
        %v4851 = vrcp.pop %v4823
        %v4852 = vrcp.pop %v4824
        %v4853 = vrcp.pop %v4825
        %v4854 = vrcp.pop %v4826
        %v4855 = vrcp.pop %v4827
        %v4856 = vrcp.pop %v4828
        %v4857 = vrcp.pop %v4829
        %v4858 = vrcp.pop %v4830
        %v4859 = vrcp.pop %v4831
        %v4860 = vrcp.pop %v4832
        %v4861 = vrcp.pop %v4833
        %v4862 = vrcp.pop %v4834
        %v4863 = vmin.f32 %v4835, 1.0
        %v4864 = vmin.f32 %v4836, 1.0
        %v4865 = vmin.f32 %v4837, 1.0
        %v4866 = vmin.f32 %v4838, 1.0
        %v4867 = vmin.f32 %v4839, 1.0
        %v4868 = vmin.f32 %v4840, 1.0
        %v4869 = vmin.f32 %v4841, 1.0
        %v4870 = vmin.f32 %v4842, 1.0
        %v4871 = vmin.f32 %v4843, 1.0
        %v4872 = vmin.f32 %v4844, 1.0
        %v4873 = vmin.f32 %v4845, 1.0
        %v4874 = vmin.f32 %v4846, 1.0
        %v4875 = vmin.f32 %v4847, 1.0
        %v4876 = vmin.f32 %v4848, 1.0
        %v4877 = vmin.f32 %v4849, 1.0
        %v4878 = vmin.f32 %v4850, 1.0
        %v4879 = vmin.f32 %v4851, 1.0
        %v4880 = vmin.f32 %v4852, 1.0
        %v4881 = vmin.f32 %v4853, 1.0
        %v4882 = vmin.f32 %v4854, 1.0
        %v4883 = vmin.f32 %v4855, 1.0
        %v4884 = vmin.f32 %v4856, 1.0
        %v4885 = vmin.f32 %v4857, 1.0
        %v4886 = vmin.f32 %v4858, 1.0
        %v4887 = vmin.f32 %v4859, 1.0
        %v4888 = vmin.f32 %v4860, 1.0
        %v4889 = vmin.f32 %v4861, 1.0
        %v4890 = vmin.f32 %v4862, 1.0
        %vm4891 = vcmask 228352
        %4892 = vst.msk [vmem:[%s813] sm:$0xff] %vm4891, %v4863
        %4893 = vst.msk [vmem:[%s813 + $0x8] sm:$0xff] %vm4891, %v4864
        %4894 = vst.msk [vmem:[%s813 + $0x10] sm:$0xff] %vm4891, %v4865
        %4895 = vst.msk [vmem:[%s813 + $0x18] sm:$0xff] %vm4891, %v4866
        %4896 = vst.msk [vmem:[%s813 + $0x20] sm:$0xff] %vm4891, %v4867
        %4897 = vst.msk [vmem:[%s813 + $0x28] sm:$0xff] %vm4891, %v4868
        %4898 = vst.msk [vmem:[%s813 + $0x30] sm:$0xff] %vm4891, %v4869
        %4899 = vst.msk [vmem:[%s813 + $0x38] sm:$0xff] %vm4891, %v4870
        %4900 = vst.msk [vmem:[%s813 + $0x40] sm:$0xff] %vm4891, %v4871
        %4901 = vst.msk [vmem:[%s813 + $0x48] sm:$0xff] %vm4891, %v4872
        %4902 = vst.msk [vmem:[%s813 + $0x50] sm:$0xff] %vm4891, %v4873
        %4903 = vst.msk [vmem:[%s813 + $0x58] sm:$0xff] %vm4891, %v4874
        %4904 = vst.msk [vmem:[%s813 + $0x60] sm:$0xff] %vm4891, %v4875
        %4905 = vst.msk [vmem:[%s813 + $0x68] sm:$0xff] %vm4891, %v4876
        %4906 = vst.msk [vmem:[%s813 + $0x70] sm:$0xff] %vm4891, %v4877
        %4907 = vst.msk [vmem:[%s813 + $0x78] sm:$0xff] %vm4891, %v4878
        %4908 = vst.msk [vmem:[%s813 + $0x80] sm:$0xff] %vm4891, %v4879
        %4909 = vst.msk [vmem:[%s813 + $0x88] sm:$0xff] %vm4891, %v4880
        %4910 = vst.msk [vmem:[%s813 + $0x90] sm:$0xff] %vm4891, %v4881
        %4911 = vst.msk [vmem:[%s813 + $0x98] sm:$0xff] %vm4891, %v4882
        %4912 = vst.msk [vmem:[%s813 + $0xa0] sm:$0xff] %vm4891, %v4883
        %4913 = vst.msk [vmem:[%s813 + $0xa8] sm:$0xff] %vm4891, %v4884
        %4914 = vst.msk [vmem:[%s813 + $0xb0] sm:$0xff] %vm4891, %v4885
        %4915 = vst.msk [vmem:[%s813 + $0xb8] sm:$0xff] %vm4891, %v4886
        %4916 = vst.msk [vmem:[%s813 + $0xc0] sm:$0xff] %vm4891, %v4887
        %4917 = vst.msk [vmem:[%s813 + $0xc8] sm:$0xff] %vm4891, %v4888
        %4918 = vst.msk [vmem:[%s813 + $0xd0] sm:$0xff] %vm4891, %v4889
        %4919 = vst.msk [vmem:[%s813 + $0xd8] sm:$0xff] %vm4891, %v4890
        %s4920 = sand.u32 %s533, 1
        %s4921 = scalar_lea.sflag [#allocation6], %s4920
        %s4922 = sand.u32 %s533, 1
        %s4923 = smul.addr %s4922, 224
        %s4924 = scalar_lea.vmem [#allocation18], %s4923
        // Predicated region
        $region163: #{mnist_decoder_forward.1} parent=111 // pred_check
          %p4925 = pneg %p543
        $region164: #{mnist_decoder_forward.1} parent=111 // pred_check_branch
          %4927 = sbr.rel (%p4925) target = $region166
        $region165: #{mnist_decoder_forward.1} parent=111 // pred_region
          %s4928 = smul.u32 28, %s42
          %4930 = vsyncadd %s4921, 0
          %s4931 = smul.addr %s4928, 8
          %s4932 = scalar_lea.hbm %s23, %s4931
          %s4933 = sshll.u32 %s4924, 4
          %s4934 = int_to_ptr.vmem [resolvable:$true] %s4933
          %s4935 = sshll.u32 %s4932, 4
          %s4936 = int_to_ptr.hbm [resolvable:$true] %s4935
          %4941 = dma.vmem_to_hbm [thread:$0]  %s4934, 3584, %s4936, %s4921, 128, 128, 8
        $region166: #{mnist_decoder_forward.1} parent=111 // pred_fallthru
          _
      $region112: #{mnist_decoder_forward.1} parent=5 // pred_fallthru
        _
      %p4942 = scmp.le.s32.totalorder 2, %s37
      // Predicated region
      $region167: #{mnist_decoder_forward.1} parent=5 // pred_check
        %p4943 = pneg %p4942
      $region168: #{mnist_decoder_forward.1} parent=5 // pred_check_branch
        %4945 = sbr.rel (%p4943) target = $region170
      $region169: #{mnist_decoder_forward.1} parent=5 // pred_region
        %s4946 = ssub.s32 %s37, 2
        // Predicated region
        $region171: #{mnist_decoder_forward.1} parent=169 // pred_check
          %p4947 = pneg %p549
        $region172: #{mnist_decoder_forward.1} parent=169 // pred_check_branch
          %4949 = sbr.rel (%p4947) target = $region174
        $region173: #{mnist_decoder_forward.1} parent=169 // pred_region
          %s4950 = sand.u32 %s534, 1
          %s4951 = scalar_lea.sflag [#allocation6], %s4950
          %s4952 = sand.u32 %s534, 1
          %s4953 = smul.addr %s4952, 224
          %s4954 = scalar_lea.vmem [#allocation18], %s4953
          %4956 = dma.done %s4951, 3584
        $region174: #{mnist_decoder_forward.1} parent=169 // pred_fallthru
          _
      $region170: #{mnist_decoder_forward.1} parent=5 // pred_fallthru
        _
    $region6: #{mnist_decoder_forward.1} parent=1 // loop_footer
      %s41 = sadd.s32 1, %s37
    $region7: #{mnist_decoder_forward.1} parent=1 // loop_footer_branch
      %36 = sbr.rel target = $region3
    $region8: #{mnist_decoder_forward.1} parent=1 // loop_exit
      _
    %4957 = vsyncpa [#allocation5], 1
    %s4958 = scalar_lea.sflag [#allocation5], 1
    %4959 = vsyncpa %s4958, 1
    %4960 = vsyncpa [#allocation8], 1
    %4961 = vsyncpa [#allocation11], 1
    %4962 = vsyncpa [#allocation14], 1
    %4963 = vsyncpa [#allocation17], 1
    %4964 = vsyncpa [#allocation6], 1
    %s4965 = scalar_lea.sflag [#allocation6], 1
    %4966 = vsyncpa %s4965, 1

</llo_original>
